<compile_context>
chip_gen: v7x
topology: tpu7x:2x2x1
jax: 0.10.0
libtpu: 0.0.40
codegen_flags: <defaults>
</compile_context>

<pallas_src>
import functools

import jax
import jax.numpy as jnp
from jax import lax
from jax.experimental import pallas as pl
from jax.experimental.pallas import tpu as pltpu

LEAKY_SLOPE = 0.01
BN_EPS = 1e-5


def _leaky(x):
    return jnp.where(x >= 0, x, LEAKY_SLOPE * x)


def bn_affine(gamma, beta, mean, var):
    scale = gamma / jnp.sqrt(var + BN_EPS)
    shift = beta - mean * scale
    return scale, shift


# ---------------------------------------------------------------------------
# In-kernel helper: K0xK1 stride-1 'SAME' conv evaluated on the (s0, s1)
# interleaved (full-res) grid, computed directly in the phase-separated
# low-res layout.
#   pad_ref : (T+2*HT, F+2*HF, s0*s1*cg) zero-halo scratch, lane order (a,d,c)
#   w       : (K0*K1*cg, Co) bf16, row order (kh, kw, c)
#   returns : (T*F, s0*s1*Co) f32, lane order (a, d, o)
# ---------------------------------------------------------------------------
def _phase_conv(pad_ref, w, cg, T, F, s0, s1, K0, K1, HT, HF):
    ph, pw = K0 // 2, K1 // 2
    P = T * F
    # Hoist the (2*HF+1) column-shifted slabs: these are the only reads that
    # touch the sublane axis at a non-zero offset.  Cast once to bf16.
    slabs = [pad_ref[:, j:j + F, :].astype(jnp.bfloat16)
             for j in range(2 * HF + 1)]
    outs = []
    for a in range(s0):
        for d in range(s1):
            pieces = []
            for kh in range(K0):
                q = a + kh - ph
                a_i, dt = q % s0, q // s0          # input phase / low-res shift
                for kw in range(K1):
                    qf = d + kw - pw
                    d_i, df = qf % s1, qf // s1
                    g_i = a_i * s1 + d_i
                    sl = slabs[HF + df]
                    pieces.append(sl[HT + dt:HT + dt + T, :,
                                     g_i * cg:(g_i + 1) * cg])
            patch = jnp.concatenate(pieces, axis=-1)          # (T, F, K0*K1*cg)
            outs.append(jnp.dot(patch.reshape(P, K0 * K1 * cg), w,
                                preferred_element_type=jnp.float32))
    return jnp.concatenate(outs, axis=-1)                     # (P, s0*s1*Co)


# ---------------------------------------------------------------------------
# Fused kernel (one grid step == one batch element)
# ---------------------------------------------------------------------------
def _decoder_kernel(aff_in_ref, aff1_ref, aff2_ref, x_ref, skip_ref,
                    wt_ref, w1_ref, w2_ref, ws_ref, out_ref,
                    a1pad_ref, a2pad_ref,
                    *, T, F, Cin, Co, s0, s1, K0, K1, HT, HF):
    G = s0 * s1
    S = G * Co
    C2 = 2 * Co
    P = T * F

    # --- zero only the halo ring of the padded scratches (interior is fully
    #     overwritten below; re-done each step so megacore 'parallel' is safe).
    for ref in (a1pad_ref, a2pad_ref):
        W = ref.shape[-1]
        ref[0:HT, :, :] = jnp.zeros((HT, F + 2 * HF, W), jnp.float32)
        ref[T + HT:T + 2 * HT, :, :] = jnp.zeros((HT, F + 2 * HF, W),
                                                 jnp.float32)
        ref[:, 0:HF, :] = jnp.zeros((T + 2 * HT, HF, W), jnp.float32)
        ref[:, F + HF:F + 2 * HF, :] = jnp.zeros((T + 2 * HT, HF, W),
                                                 jnp.float32)

    # --- stage 1: bn1 + FiLM beta1 + leaky_relu, then ConvTranspose2d
    #     (kernel == stride) as a single MXU matmul.  Result stays in the
    #     phase-separated low-res layout, lane order (a, d, co).
    aff_in = aff_in_ref[0]                                    # (2, Cin)
    x = x_ref[0].reshape(P, Cin)
    pre = _leaky(x * aff_in[0:1] + aff_in[1:2])
    u_raw = jnp.dot(pre.astype(jnp.bfloat16), wt_ref[...],
                    preferred_element_type=jnp.float32)       # (P, S)

    # --- channel concat (u, skip) per phase -> lane order (g, [u co | skip co])
    skip_raw = skip_ref[0].reshape(P, S)
    parts = []
    for g in range(G):
        parts.append(u_raw[:, g * Co:(g + 1) * Co])
        parts.append(skip_raw[:, g * Co:(g + 1) * Co])
    xcat = jnp.concatenate(parts, axis=-1)                    # (P, G*C2)

    # --- shortcut: 1x1 conv on the raw concat (per phase), bias added later
    ws = ws_ref[...]
    xcat_bf = xcat.astype(jnp.bfloat16)
    sc_parts = [jnp.dot(xcat_bf[:, g * C2:(g + 1) * C2], ws,
                        preferred_element_type=jnp.float32) for g in range(G)]
    shortcut = jnp.concatenate(sc_parts, axis=-1)             # (P, S)

    # --- ConvBlockRes bn1 + FiLM + leaky_relu, write into padded scratch
    aff1 = aff1_ref[0]                                        # (2, G*C2)
    a1 = _leaky(xcat * aff1[0:1] + aff1[1:2])
    a1pad_ref[HT:HT + T, HF:HF + F, :] = a1.reshape(T, F, G * C2)

    # --- conv1 (K0xK1, C2 -> Co)
    x1 = _phase_conv(a1pad_ref, w1_ref[...], C2,
                     T, F, s0, s1, K0, K1, HT, HF)            # (P, S)

    # --- bn2 + FiLM + leaky_relu, write into second padded scratch
    aff2 = aff2_ref[0]                                        # (3, S)
    a2 = _leaky(x1 * aff2[0:1] + aff2[1:2])
    a2pad_ref[HT:HT + T, HF:HF + F, :] = a2.reshape(T, F, S)

    # --- conv2 (K0xK1, Co -> Co)
    x2 = _phase_conv(a2pad_ref, w2_ref[...], Co,
                     T, F, s0, s1, K0, K1, HT, HF)            # (P, S)

    # --- residual add + shortcut bias, store in phase layout
    out = x2 + shortcut + aff2[2:3]
    out_ref[0] = out.reshape(T, F, S)


def _fused_call(aff_in, aff1, aff2, x, skip, wt, w1, w2, ws,
                T, F, Cin, Co, s0, s1, K0, K1):
    B = x.shape[0]
    G = s0 * s1
    S = G * Co
    C2 = 2 * Co
    ph, pw = K0 // 2, K1 // 2
    HT = -(-ph // s0)            # low-res halo (rows)
    HF = -(-pw // s1)            # low-res halo (cols)

    kern = functools.partial(_decoder_kernel, T=T, F=F, Cin=Cin, Co=Co,
                             s0=s0, s1=s1, K0=K0, K1=K1, HT=HT, HF=HF)
    return pl.pallas_call(
        kern,
        out_shape=jax.ShapeDtypeStruct((B, T, F, S), jnp.float32),
        grid=(B,),
        in_specs=[
            pl.BlockSpec((1, 2, Cin), lambda b: (b, 0, 0)),
            pl.BlockSpec((1, 2, G * C2), lambda b: (b, 0, 0)),
            pl.BlockSpec((1, 3, S), lambda b: (b, 0, 0)),
            pl.BlockSpec((1, T, F, Cin), lambda b: (b, 0, 0, 0)),
            pl.BlockSpec((1, T, F, S), lambda b: (b, 0, 0, 0)),
            pl.BlockSpec((Cin, S), lambda b: (0, 0)),
            pl.BlockSpec((K0 * K1 * C2, Co), lambda b: (0, 0)),
            pl.BlockSpec((K0 * K1 * Co, Co), lambda b: (0, 0)),
            pl.BlockSpec((C2, Co), lambda b: (0, 0)),
        ],
        out_specs=pl.BlockSpec((1, T, F, S), lambda b: (b, 0, 0, 0)),
        scratch_shapes=[
            pltpu.VMEM((T + 2 * HT, F + 2 * HF, G * C2), jnp.float32),
            pltpu.VMEM((T + 2 * HT, F + 2 * HF, S), jnp.float32),
        ],
        compiler_params=pltpu.CompilerParams(
            dimension_semantics=("parallel",),
            vmem_limit_bytes=48 * 1024 * 1024),
    )(aff_in, aff1, aff2, x, skip, wt, w1, w2, ws)


# ---------------------------------------------------------------------------
# DecoderBlockRes1B forward (wrapper / glue)
# ---------------------------------------------------------------------------
def decoder_block_res1b(input_nchw, concat_nchw, params, film):
    B, Cin, T, F = input_nchw.shape
    _, Co, s0, s1 = params["convT_w"].shape
    K0, K1 = params["cb_w1"].shape[2], params["cb_w1"].shape[3]
    C2 = 2 * Co
    G = s0 * s1
    S = G * Co

    # Boundary layout changes only (these replace the NCHW<->NHWC transposes
    # that are needed anyway; no extra HBM round trips are introduced).
    x = jnp.transpose(input_nchw, (0, 2, 3, 1))                  # (B,T,F,Cin)
    skip = concat_nchw.reshape(B, Co, T, s0, F, s1)
    skip = jnp.transpose(skip, (0, 2, 4, 3, 5, 1)).reshape(B, T, F, S)

    # Folded affine params (BN eval-mode scale/shift + FiLM beta), tiled to the
    # phase-separated lane order.
    sc_in, sh_in = bn_affine(*params["bn1"])
    aff_in = jnp.stack([jnp.broadcast_to(sc_in, (B, Cin)),
                        sh_in[None, :] + film["beta1"]], axis=1)     # (B,2,Cin)

    sc1, sh1 = bn_affine(*params["cb_bn1"])                          # (C2,)
    sc1_t = jnp.tile(sc1, G)
    sh1_t = jnp.tile(sh1[None, :] + film["cb_beta1"], (1, G))        # (B,G*C2)
    aff1 = jnp.stack([jnp.broadcast_to(sc1_t, (B, G * C2)), sh1_t], axis=1)

    sc2, sh2 = bn_affine(*params["cb_bn2"])                          # (Co,)
    sc2_t = jnp.tile(sc2, G)
    sh2_t = jnp.tile(sh2[None, :] + film["cb_beta2"], (1, G))        # (B,S)
    bias_t = jnp.tile(params["sc_b"], G)                             # (S,)
    aff2 = jnp.stack([jnp.broadcast_to(sc2_t, (B, S)), sh2_t,
                      jnp.broadcast_to(bias_t, (B, S))], axis=1)     # (B,3,S)

    # Weights, reshaped for the in-kernel matmuls (bf16 for the MXU).
    wt = jnp.transpose(params["convT_w"], (0, 2, 3, 1)).reshape(Cin, S)
    w1 = jnp.transpose(params["cb_w1"], (2, 3, 1, 0)).reshape(K0 * K1 * C2, Co)
    w2 = jnp.transpose(params["cb_w2"], (2, 3, 1, 0)).reshape(K0 * K1 * Co, Co)
    ws = jnp.transpose(params["sc_w"][:, :, 0, 0], (1, 0))           # (C2, Co)
    wt, w1, w2, ws = (a.astype(jnp.bfloat16) for a in (wt, w1, w2, ws))

    out = _fused_call(aff_in, aff1, aff2, x, skip, wt, w1, w2, ws,
                      T, F, Cin, Co, s0, s1, K0, K1)                 # (B,T,F,S)

    # Phase layout -> NCHW (single XLA transpose, required by the API anyway).
    out = out.reshape(B, T, F, s0, s1, Co)
    out = jnp.transpose(out, (0, 5, 1, 3, 2, 4)).reshape(B, Co, T * s0, F * s1)
    return out


# ---------------------------------------------------------------------------
# Pure-JAX reference (lax conv) for a numerical sanity check
# ---------------------------------------------------------------------------
def reference(input_nchw, concat_nchw, params, film):
    x = jnp.transpose(input_nchw, (0, 2, 3, 1))
    skip = jnp.transpose(concat_nchw, (0, 2, 3, 1))
    B, T, F, Cin = x.shape
    _, Co, s0, s1 = params["convT_w"].shape

    sc1, sh1 = bn_affine(*params["bn1"])
    pre = _leaky(x * sc1 + sh1 + film["beta1"][:, None, None, :])
    u6 = jnp.einsum("btfi,iocd->btcfdo", pre, params["convT_w"])
    u = u6.reshape(B, T * s0, F * s1, Co)
    xcat = jnp.concatenate([u, skip], axis=-1)

    cs1, ch1 = bn_affine(*params["cb_bn1"])
    cs2, ch2 = bn_affine(*params["cb_bn2"])
    a1 = _leaky(xcat * cs1 + ch1 + film["cb_beta1"][:, None, None, :])
    w1_hwio = jnp.transpose(params["cb_w1"], (2, 3, 1, 0))
    x1 = lax.conv_general_dilated(a1, w1_hwio, (1, 1), "SAME",
                                  dimension_numbers=("NHWC", "HWIO", "NHWC"))
    a2 = _leaky(x1 * cs2 + ch2 + film["cb_beta2"][:, None, None, :])
    w2_hwio = jnp.transpose(params["cb_w2"], (2, 3, 1, 0))
    x2 = lax.conv_general_dilated(a2, w2_hwio, (1, 1), "SAME",
                                  dimension_numbers=("NHWC", "HWIO", "NHWC"))
    ws = jnp.transpose(params["sc_w"][:, :, 0, 0], (1, 0))
    scut = jnp.einsum("bhwc,co->bhwo", xcat, ws) + params["sc_b"]
    out = scut + x2
    return jnp.transpose(out, (0, 3, 1, 2))


if __name__ == "__main__":
    B, Cin, Co = 2, 8, 4
    T, F = 8, 8
    s0, s1 = 2, 2
    K0, K1 = 3, 3
    C2 = 2 * Co

    ks = jax.random.split(jax.random.PRNGKey(0), 24)

    def nrm(k, shape, scale=0.1):
        return scale * jax.random.normal(k, shape, dtype=jnp.float32)

    params = {
        "bn1": (1.0 + nrm(ks[0], (Cin,)), nrm(ks[1], (Cin,)),
                nrm(ks[2], (Cin,)), 1.0 + 0.1 * jax.random.uniform(ks[3], (Cin,))),
        "convT_w": nrm(ks[4], (Cin, Co, s0, s1), 0.3),          # ConvTranspose2d (Cin, Cout, kH, kW)
        "cb_bn1": (1.0 + nrm(ks[5], (C2,)), nrm(ks[6], (C2,)),
                   nrm(ks[7], (C2,)), 1.0 + 0.1 * jax.random.uniform(ks[8], (C2,))),
        "cb_bn2": (1.0 + nrm(ks[9], (Co,)), nrm(ks[10], (Co,)),
                   nrm(ks[11], (Co,)), 1.0 + 0.1 * jax.random.uniform(ks[12], (Co,))),
        "cb_w1": nrm(ks[13], (Co, C2, K0, K1), 0.2),            # Conv2d weight OIHW
        "cb_w2": nrm(ks[14], (Co, Co, K0, K1), 0.2),
        "sc_w": nrm(ks[15], (Co, C2, 1, 1), 0.3),
        "sc_b": nrm(ks[16], (Co,)),
    }

    x_nchw = jax.random.normal(ks[17], (B, Cin, T, F), jnp.float32)
    concat_nchw = jax.random.normal(ks[18], (B, Co, T * s0, F * s1), jnp.float32)
    film = {
        "beta1": nrm(ks[19], (B, Cin), 0.5),
        "cb_beta1": nrm(ks[20], (B, C2), 0.5),
        "cb_beta2": nrm(ks[21], (B, Co), 0.5),
    }

    out = decoder_block_res1b(x_nchw, concat_nchw, params, film)
    out = jax.block_until_ready(out)
    assert out.shape == (B, Co, T * s0, F * s1)

    ref = reference(x_nchw, concat_nchw, params, film)
    max_err = float(jnp.max(jnp.abs(out - ref)))
    # bf16 MXU operands with f32 accumulation -> tolerance loosened vs pure-f32.
    assert max_err < 1.5e-1, f"max abs error {max_err}"

    print("KERNEL_OK")
</pallas_src>

<mosaic_0001>
module attributes {stable_mosaic.version = 11 : i64} {
  func.func @_decoder_kernel(%arg0: i32, %arg1: memref<1x2x8xf32, #tpu.memory_space<vmem>>, %arg2: memref<1x2x32xf32, #tpu.memory_space<vmem>>, %arg3: memref<1x3x16xf32, #tpu.memory_space<vmem>>, %arg4: memref<1x8x8x8xf32, #tpu.memory_space<vmem>>, %arg5: memref<1x8x8x16xf32, #tpu.memory_space<vmem>>, %arg6: memref<8x16xbf16, #tpu.memory_space<vmem>>, %arg7: memref<72x4xbf16, #tpu.memory_space<vmem>>, %arg8: memref<36x4xbf16, #tpu.memory_space<vmem>>, %arg9: memref<8x4xbf16, #tpu.memory_space<vmem>>, %arg10: memref<1x8x8x16xf32, #tpu.memory_space<vmem>>, %arg11: memref<10x10x32xf32, #tpu.memory_space<vmem>>, %arg12: memref<10x10x16xf32, #tpu.memory_space<vmem>>) attributes {dimension_semantics = [#tpu.dimension_semantics<parallel>], iteration_bounds = array<i64: 2>, scalar_prefetch = 0 : i64, scratch_operands = 2 : i64, tpu.core_type = #tpu.core_type<tc>, window_params = [{transform_indices = @transform_0, window_bounds = array<i64: 1, 2, 8>}, {transform_indices = @transform_1, window_bounds = array<i64: 1, 2, 32>}, {transform_indices = @transform_2, window_bounds = array<i64: 1, 3, 16>}, {transform_indices = @transform_3, window_bounds = array<i64: 1, 8, 8, 8>}, {transform_indices = @transform_4, window_bounds = array<i64: 1, 8, 8, 16>}, {pipeline_mode = #tpu.pipeline_mode<synchronous>, transform_indices = @transform_5, window_bounds = array<i64: 8, 16>}, {pipeline_mode = #tpu.pipeline_mode<synchronous>, transform_indices = @transform_6, window_bounds = array<i64: 72, 4>}, {pipeline_mode = #tpu.pipeline_mode<synchronous>, transform_indices = @transform_7, window_bounds = array<i64: 36, 4>}, {pipeline_mode = #tpu.pipeline_mode<synchronous>, transform_indices = @transform_8, window_bounds = array<i64: 8, 4>}, {transform_indices = @transform_9, window_bounds = array<i64: 1, 8, 8, 16>}]} {
    %cst = arith.constant 0.000000e+00 : f32
    %0 = vector.broadcast %cst : f32 to vector<1x10x32xf32>
    %c0 = arith.constant 0 : index
    %c0_0 = arith.constant 0 : index
    %c0_1 = arith.constant 0 : index
    %1 = vector.load %arg11[%c0, %c0_0, %c0_1] : memref<10x10x32xf32, #tpu.memory_space<vmem>>, vector<1x10x32xf32>
    tpu.vector_store %arg11[%c0, %c0_0, %c0_1], %0 {strides = array<i32>} : memref<10x10x32xf32, #tpu.memory_space<vmem>>, vector<1x10x32xf32>,
    %cst_2 = arith.constant 0.000000e+00 : f32
    %2 = vector.broadcast %cst_2 : f32 to vector<1x10x32xf32>
    %c9 = arith.constant 9 : index
    %c0_3 = arith.constant 0 : index
    %c0_4 = arith.constant 0 : index
    %3 = vector.load %arg11[%c9, %c0_3, %c0_4] : memref<10x10x32xf32, #tpu.memory_space<vmem>>, vector<1x10x32xf32>
    tpu.vector_store %arg11[%c9, %c0_3, %c0_4], %2 {strides = array<i32>} : memref<10x10x32xf32, #tpu.memory_space<vmem>>, vector<1x10x32xf32>,
    %cst_5 = arith.constant 0.000000e+00 : f32
    %4 = vector.broadcast %cst_5 : f32 to vector<10x1x32xf32>
    %c0_6 = arith.constant 0 : index
    %c0_7 = arith.constant 0 : index
    %c0_8 = arith.constant 0 : index
    %5 = vector.load %arg11[%c0_6, %c0_7, %c0_8] : memref<10x10x32xf32, #tpu.memory_space<vmem>>, vector<10x1x32xf32>
    tpu.vector_store %arg11[%c0_6, %c0_7, %c0_8], %4 {strides = array<i32>} : memref<10x10x32xf32, #tpu.memory_space<vmem>>, vector<10x1x32xf32>,
    %cst_9 = arith.constant 0.000000e+00 : f32
    %6 = vector.broadcast %cst_9 : f32 to vector<10x1x32xf32>
    %c0_10 = arith.constant 0 : index
    %c9_11 = arith.constant 9 : index
    %c0_12 = arith.constant 0 : index
    %7 = vector.load %arg11[%c0_10, %c9_11, %c0_12] : memref<10x10x32xf32, #tpu.memory_space<vmem>>, vector<10x1x32xf32>
    tpu.vector_store %arg11[%c0_10, %c9_11, %c0_12], %6 {strides = array<i32>} : memref<10x10x32xf32, #tpu.memory_space<vmem>>, vector<10x1x32xf32>,
    %cst_13 = arith.constant 0.000000e+00 : f32
    %8 = vector.broadcast %cst_13 : f32 to vector<1x10x16xf32>
    %c0_14 = arith.constant 0 : index
    %c0_15 = arith.constant 0 : index
    %c0_16 = arith.constant 0 : index
    %9 = vector.load %arg12[%c0_14, %c0_15, %c0_16] : memref<10x10x16xf32, #tpu.memory_space<vmem>>, vector<1x10x16xf32>
    tpu.vector_store %arg12[%c0_14, %c0_15, %c0_16], %8 {strides = array<i32>} : memref<10x10x16xf32, #tpu.memory_space<vmem>>, vector<1x10x16xf32>,
    %cst_17 = arith.constant 0.000000e+00 : f32
    %10 = vector.broadcast %cst_17 : f32 to vector<1x10x16xf32>
    %c9_18 = arith.constant 9 : index
    %c0_19 = arith.constant 0 : index
    %c0_20 = arith.constant 0 : index
    %11 = vector.load %arg12[%c9_18, %c0_19, %c0_20] : memref<10x10x16xf32, #tpu.memory_space<vmem>>, vector<1x10x16xf32>
    tpu.vector_store %arg12[%c9_18, %c0_19, %c0_20], %10 {strides = array<i32>} : memref<10x10x16xf32, #tpu.memory_space<vmem>>, vector<1x10x16xf32>,
    %cst_21 = arith.constant 0.000000e+00 : f32
    %12 = vector.broadcast %cst_21 : f32 to vector<10x1x16xf32>
    %c0_22 = arith.constant 0 : index
    %c0_23 = arith.constant 0 : index
    %c0_24 = arith.constant 0 : index
    %13 = vector.load %arg12[%c0_22, %c0_23, %c0_24] : memref<10x10x16xf32, #tpu.memory_space<vmem>>, vector<10x1x16xf32>
    tpu.vector_store %arg12[%c0_22, %c0_23, %c0_24], %12 {strides = array<i32>} : memref<10x10x16xf32, #tpu.memory_space<vmem>>, vector<10x1x16xf32>,
    %cst_25 = arith.constant 0.000000e+00 : f32
    %14 = vector.broadcast %cst_25 : f32 to vector<10x1x16xf32>
    %c0_26 = arith.constant 0 : index
    %c9_27 = arith.constant 9 : index
    %c0_28 = arith.constant 0 : index
    %15 = vector.load %arg12[%c0_26, %c9_27, %c0_28] : memref<10x10x16xf32, #tpu.memory_space<vmem>>, vector<10x1x16xf32>
    tpu.vector_store %arg12[%c0_26, %c9_27, %c0_28], %14 {strides = array<i32>} : memref<10x10x16xf32, #tpu.memory_space<vmem>>, vector<10x1x16xf32>,
    %c0_29 = arith.constant 0 : index
    %c0_30 = arith.constant 0 : index
    %c0_31 = arith.constant 0 : index
    %16 = vector.load %arg1[%c0_29, %c0_30, %c0_31] : memref<1x2x8xf32, #tpu.memory_space<vmem>>, vector<1x2x8xf32>
    %17 = vector.shape_cast %16 : vector<1x2x8xf32> to vector<2x8xf32>
    %c0_32 = arith.constant 0 : index
    %c0_33 = arith.constant 0 : index
    %c0_34 = arith.constant 0 : index
    %c0_35 = arith.constant 0 : index
    %18 = vector.load %arg4[%c0_32, %c0_33, %c0_34, %c0_35] : memref<1x8x8x8xf32, #tpu.memory_space<vmem>>, vector<1x8x8x8xf32>
    %19 = vector.shape_cast %18 : vector<1x8x8x8xf32> to vector<8x8x8xf32>
    %20 = vector.shape_cast %19 : vector<8x8x8xf32> to vector<64x8xf32>
    %21 = vector.extract_strided_slice %17 {offsets = [0, 0], sizes = [1, 8], strides = [1, 1]} : vector<2x8xf32> to vector<1x8xf32>
    %22 = vector.broadcast %21 : vector<1x8xf32> to vector<64x8xf32>
    %23 = arith.mulf %20, %22 : vector<64x8xf32>
    %24 = vector.extract_strided_slice %17 {offsets = [1, 0], sizes = [1, 8], strides = [1, 1]} : vector<2x8xf32> to vector<1x8xf32>
    %25 = vector.broadcast %24 : vector<1x8xf32> to vector<64x8xf32>
    %26 = arith.addf %23, %25 : vector<64x8xf32>
    %cst_36 = arith.constant 0.000000e+00 : f32
    %27 = vector.broadcast %cst_36 : f32 to vector<64x8xf32>
    %28 = arith.cmpf oge, %26, %27 : vector<64x8xf32>
    %cst_37 = arith.constant 0.00999999977 : f32
    %29 = vector.broadcast %cst_37 : f32 to vector<64x8xf32>
    %30 = arith.mulf %29, %26 : vector<64x8xf32>
    %31 = arith.select %28, %26, %30 : vector<64x8xi1>, vector<64x8xf32>
    %32 = arith.truncf %31 : vector<64x8xf32> to vector<64x8xbf16>
    %c0_38 = arith.constant 0 : index
    %c0_39 = arith.constant 0 : index
    %33 = vector.load %arg6[%c0_38, %c0_39] : memref<8x16xbf16, #tpu.memory_space<vmem>>, vector<8x16xbf16>
    %cst_40 = arith.constant dense<0.000000e+00> : vector<64x16xf32>
    %34 = tpu.matmul %32, %33, %cst_40 {dimension_numbers = #tpu.dot_dimension_numbers<[1], [0], [0], [1], [0, 0, 1, 1], [], []>} : vector<64x8xbf16>, vector<8x16xbf16>, vector<64x16xf32> -> vector<64x16xf32>
    %c0_41 = arith.constant 0 : index
    %c0_42 = arith.constant 0 : index
    %c0_43 = arith.constant 0 : index
    %c0_44 = arith.constant 0 : index
    %35 = vector.load %arg5[%c0_41, %c0_42, %c0_43, %c0_44] : memref<1x8x8x16xf32, #tpu.memory_space<vmem>>, vector<1x8x8x16xf32>
    %36 = vector.shape_cast %35 : vector<1x8x8x16xf32> to vector<8x8x16xf32>
    %37 = vector.shape_cast %36 : vector<8x8x16xf32> to vector<64x16xf32>
    %38 = vector.extract_strided_slice %34 {offsets = [0, 0], sizes = [64, 4], strides = [1, 1]} : vector<64x16xf32> to vector<64x4xf32>
    %39 = vector.extract_strided_slice %37 {offsets = [0, 0], sizes = [64, 4], strides = [1, 1]} : vector<64x16xf32> to vector<64x4xf32>
    %40 = vector.extract_strided_slice %34 {offsets = [0, 4], sizes = [64, 4], strides = [1, 1]} : vector<64x16xf32> to vector<64x4xf32>
    %41 = vector.extract_strided_slice %37 {offsets = [0, 4], sizes = [64, 4], strides = [1, 1]} : vector<64x16xf32> to vector<64x4xf32>
    %42 = vector.extract_strided_slice %34 {offsets = [0, 8], sizes = [64, 4], strides = [1, 1]} : vector<64x16xf32> to vector<64x4xf32>
    %43 = vector.extract_strided_slice %37 {offsets = [0, 8], sizes = [64, 4], strides = [1, 1]} : vector<64x16xf32> to vector<64x4xf32>
    %44 = vector.extract_strided_slice %34 {offsets = [0, 12], sizes = [64, 4], strides = [1, 1]} : vector<64x16xf32> to vector<64x4xf32>
    %45 = vector.extract_strided_slice %37 {offsets = [0, 12], sizes = [64, 4], strides = [1, 1]} : vector<64x16xf32> to vector<64x4xf32>
    %46 = tpu.concatenate %38, %39, %40, %41, %42, %43, %44, %45 in 1 : vector<64x4xf32>, vector<64x4xf32>, vector<64x4xf32>, vector<64x4xf32>, vector<64x4xf32>, vector<64x4xf32>, vector<64x4xf32>, vector<64x4xf32> -> vector<64x32xf32>
    %c0_45 = arith.constant 0 : index
    %c0_46 = arith.constant 0 : index
    %47 = vector.load %arg9[%c0_45, %c0_46] : memref<8x4xbf16, #tpu.memory_space<vmem>>, vector<8x4xbf16>
    %48 = arith.truncf %46 : vector<64x32xf32> to vector<64x32xbf16>
    %49 = vector.extract_strided_slice %48 {offsets = [0, 0], sizes = [64, 8], strides = [1, 1]} : vector<64x32xbf16> to vector<64x8xbf16>
    %cst_47 = arith.constant dense<0.000000e+00> : vector<64x4xf32>
    %50 = tpu.matmul %49, %47, %cst_47 {dimension_numbers = #tpu.dot_dimension_numbers<[1], [0], [0], [1], [0, 0, 1, 1], [], []>} : vector<64x8xbf16>, vector<8x4xbf16>, vector<64x4xf32> -> vector<64x4xf32>
    %51 = vector.extract_strided_slice %48 {offsets = [0, 8], sizes = [64, 8], strides = [1, 1]} : vector<64x32xbf16> to vector<64x8xbf16>
    %cst_48 = arith.constant dense<0.000000e+00> : vector<64x4xf32>
    %52 = tpu.matmul %51, %47, %cst_48 {dimension_numbers = #tpu.dot_dimension_numbers<[1], [0], [0], [1], [0, 0, 1, 1], [], []>} : vector<64x8xbf16>, vector<8x4xbf16>, vector<64x4xf32> -> vector<64x4xf32>
    %53 = vector.extract_strided_slice %48 {offsets = [0, 16], sizes = [64, 8], strides = [1, 1]} : vector<64x32xbf16> to vector<64x8xbf16>
    %cst_49 = arith.constant dense<0.000000e+00> : vector<64x4xf32>
    %54 = tpu.matmul %53, %47, %cst_49 {dimension_numbers = #tpu.dot_dimension_numbers<[1], [0], [0], [1], [0, 0, 1, 1], [], []>} : vector<64x8xbf16>, vector<8x4xbf16>, vector<64x4xf32> -> vector<64x4xf32>
    %55 = vector.extract_strided_slice %48 {offsets = [0, 24], sizes = [64, 8], strides = [1, 1]} : vector<64x32xbf16> to vector<64x8xbf16>
    %cst_50 = arith.constant dense<0.000000e+00> : vector<64x4xf32>
    %56 = tpu.matmul %55, %47, %cst_50 {dimension_numbers = #tpu.dot_dimension_numbers<[1], [0], [0], [1], [0, 0, 1, 1], [], []>} : vector<64x8xbf16>, vector<8x4xbf16>, vector<64x4xf32> -> vector<64x4xf32>
    %57 = tpu.concatenate %50, %52, %54, %56 in 1 : vector<64x4xf32>, vector<64x4xf32>, vector<64x4xf32>, vector<64x4xf32> -> vector<64x16xf32>
    %c0_51 = arith.constant 0 : index
    %c0_52 = arith.constant 0 : index
    %c0_53 = arith.constant 0 : index
    %58 = vector.load %arg2[%c0_51, %c0_52, %c0_53] : memref<1x2x32xf32, #tpu.memory_space<vmem>>, vector<1x2x32xf32>
    %59 = vector.shape_cast %58 : vector<1x2x32xf32> to vector<2x32xf32>
    %60 = vector.extract_strided_slice %59 {offsets = [0, 0], sizes = [1, 32], strides = [1, 1]} : vector<2x32xf32> to vector<1x32xf32>
    %61 = vector.broadcast %60 : vector<1x32xf32> to vector<64x32xf32>
    %62 = arith.mulf %46, %61 : vector<64x32xf32>
    %63 = vector.extract_strided_slice %59 {offsets = [1, 0], sizes = [1, 32], strides = [1, 1]} : vector<2x32xf32> to vector<1x32xf32>
    %64 = vector.broadcast %63 : vector<1x32xf32> to vector<64x32xf32>
    %65 = arith.addf %62, %64 : vector<64x32xf32>
    %cst_54 = arith.constant 0.000000e+00 : f32
    %66 = vector.broadcast %cst_54 : f32 to vector<64x32xf32>
    %67 = arith.cmpf oge, %65, %66 : vector<64x32xf32>
    %cst_55 = arith.constant 0.00999999977 : f32
    %68 = vector.broadcast %cst_55 : f32 to vector<64x32xf32>
    %69 = arith.mulf %68, %65 : vector<64x32xf32>
    %70 = arith.select %67, %65, %69 : vector<64x32xi1>, vector<64x32xf32>
    %71 = vector.shape_cast %70 : vector<64x32xf32> to vector<8x8x32xf32>
    %c1 = arith.constant 1 : index
    %c1_56 = arith.constant 1 : index
    %c0_57 = arith.constant 0 : index
    %72 = vector.load %arg11[%c1, %c1_56, %c0_57] : memref<10x10x32xf32, #tpu.memory_space<vmem>>, vector<8x8x32xf32>
    tpu.vector_store %arg11[%c1, %c1_56, %c0_57], %71 {strides = array<i32>} : memref<10x10x32xf32, #tpu.memory_space<vmem>>, vector<8x8x32xf32>,
    %c0_58 = arith.constant 0 : index
    %c0_59 = arith.constant 0 : index
    %73 = vector.load %arg7[%c0_58, %c0_59] : memref<72x4xbf16, #tpu.memory_space<vmem>>, vector<72x4xbf16>
    %c0_60 = arith.constant 0 : index
    %c0_61 = arith.constant 0 : index
    %c0_62 = arith.constant 0 : index
    %74 = vector.load %arg11[%c0_60, %c0_61, %c0_62] : memref<10x10x32xf32, #tpu.memory_space<vmem>>, vector<10x8x32xf32>
    %75 = arith.truncf %74 : vector<10x8x32xf32> to vector<10x8x32xbf16>
    %c0_63 = arith.constant 0 : index
    %c1_64 = arith.constant 1 : index
    %c0_65 = arith.constant 0 : index
    %76 = vector.load %arg11[%c0_63, %c1_64, %c0_65] : memref<10x10x32xf32, #tpu.memory_space<vmem>>, vector<10x8x32xf32>
    %77 = arith.truncf %76 : vector<10x8x32xf32> to vector<10x8x32xbf16>
    %c0_66 = arith.constant 0 : index
    %c2 = arith.constant 2 : index
    %c0_67 = arith.constant 0 : index
    %78 = vector.load %arg11[%c0_66, %c2, %c0_67] : memref<10x10x32xf32, #tpu.memory_space<vmem>>, vector<10x8x32xf32>
    %79 = arith.truncf %78 : vector<10x8x32xf32> to vector<10x8x32xbf16>
    %80 = vector.extract_strided_slice %75 {offsets = [0, 0, 24], sizes = [8, 8, 8], strides = [1, 1, 1]} : vector<10x8x32xbf16> to vector<8x8x8xbf16>
    %81 = vector.extract_strided_slice %77 {offsets = [0, 0, 16], sizes = [8, 8, 8], strides = [1, 1, 1]} : vector<10x8x32xbf16> to vector<8x8x8xbf16>
    %82 = vector.extract_strided_slice %77 {offsets = [0, 0, 24], sizes = [8, 8, 8], strides = [1, 1, 1]} : vector<10x8x32xbf16> to vector<8x8x8xbf16>
    %83 = vector.extract_strided_slice %75 {offsets = [1, 0, 8], sizes = [8, 8, 8], strides = [1, 1, 1]} : vector<10x8x32xbf16> to vector<8x8x8xbf16>
    %84 = vector.extract_strided_slice %77 {offsets = [1, 0, 0], sizes = [8, 8, 8], strides = [1, 1, 1]} : vector<10x8x32xbf16> to vector<8x8x8xbf16>
    %85 = vector.extract_strided_slice %77 {offsets = [1, 0, 8], sizes = [8, 8, 8], strides = [1, 1, 1]} : vector<10x8x32xbf16> to vector<8x8x8xbf16>
    %86 = vector.extract_strided_slice %75 {offsets = [1, 0, 24], sizes = [8, 8, 8], strides = [1, 1, 1]} : vector<10x8x32xbf16> to vector<8x8x8xbf16>
    %87 = vector.extract_strided_slice %77 {offsets = [1, 0, 16], sizes = [8, 8, 8], strides = [1, 1, 1]} : vector<10x8x32xbf16> to vector<8x8x8xbf16>
    %88 = vector.extract_strided_slice %77 {offsets = [1, 0, 24], sizes = [8, 8, 8], strides = [1, 1, 1]} : vector<10x8x32xbf16> to vector<8x8x8xbf16>
    %89 = tpu.concatenate %80, %81, %82, %83, %84, %85, %86, %87, %88 in 2 : vector<8x8x8xbf16>, vector<8x8x8xbf16>, vector<8x8x8xbf16>, vector<8x8x8xbf16>, vector<8x8x8xbf16>, vector<8x8x8xbf16>, vector<8x8x8xbf16>, vector<8x8x8xbf16>, vector<8x8x8xbf16> -> vector<8x8x72xbf16>
    %90 = vector.shape_cast %89 : vector<8x8x72xbf16> to vector<64x72xbf16>
    %cst_68 = arith.constant dense<0.000000e+00> : vector<64x4xf32>
    %91 = tpu.matmul %90, %73, %cst_68 {dimension_numbers = #tpu.dot_dimension_numbers<[1], [0], [0], [1], [0, 0, 1, 1], [], []>} : vector<64x72xbf16>, vector<72x4xbf16>, vector<64x4xf32> -> vector<64x4xf32>
    %92 = vector.extract_strided_slice %77 {offsets = [0, 0, 16], sizes = [8, 8, 8], strides = [1, 1, 1]} : vector<10x8x32xbf16> to vector<8x8x8xbf16>
    %93 = vector.extract_strided_slice %77 {offsets = [0, 0, 24], sizes = [8, 8, 8], strides = [1, 1, 1]} : vector<10x8x32xbf16> to vector<8x8x8xbf16>
    %94 = vector.extract_strided_slice %79 {offsets = [0, 0, 16], sizes = [8, 8, 8], strides = [1, 1, 1]} : vector<10x8x32xbf16> to vector<8x8x8xbf16>
    %95 = vector.extract_strided_slice %77 {offsets = [1, 0, 0], sizes = [8, 8, 8], strides = [1, 1, 1]} : vector<10x8x32xbf16> to vector<8x8x8xbf16>
    %96 = vector.extract_strided_slice %77 {offsets = [1, 0, 8], sizes = [8, 8, 8], strides = [1, 1, 1]} : vector<10x8x32xbf16> to vector<8x8x8xbf16>
    %97 = vector.extract_strided_slice %79 {offsets = [1, 0, 0], sizes = [8, 8, 8], strides = [1, 1, 1]} : vector<10x8x32xbf16> to vector<8x8x8xbf16>
    %98 = vector.extract_strided_slice %77 {offsets = [1, 0, 16], sizes = [8, 8, 8], strides = [1, 1, 1]} : vector<10x8x32xbf16> to vector<8x8x8xbf16>
    %99 = vector.extract_strided_slice %77 {offsets = [1, 0, 24], sizes = [8, 8, 8], strides = [1, 1, 1]} : vector<10x8x32xbf16> to vector<8x8x8xbf16>
    %100 = vector.extract_strided_slice %79 {offsets = [1, 0, 16], sizes = [8, 8, 8], strides = [1, 1, 1]} : vector<10x8x32xbf16> to vector<8x8x8xbf16>
    %101 = tpu.concatenate %92, %93, %94, %95, %96, %97, %98, %99, %100 in 2 : vector<8x8x8xbf16>, vector<8x8x8xbf16>, vector<8x8x8xbf16>, vector<8x8x8xbf16>, vector<8x8x8xbf16>, vector<8x8x8xbf16>, vector<8x8x8xbf16>, vector<8x8x8xbf16>, vector<8x8x8xbf16> -> vector<8x8x72xbf16>
    %102 = vector.shape_cast %101 : vector<8x8x72xbf16> to vector<64x72xbf16>
    %cst_69 = arith.constant dense<0.000000e+00> : vector<64x4xf32>
    %103 = tpu.matmul %102, %73, %cst_69 {dimension_numbers = #tpu.dot_dimension_numbers<[1], [0], [0], [1], [0, 0, 1, 1], [], []>} : vector<64x72xbf16>, vector<72x4xbf16>, vector<64x4xf32> -> vector<64x4xf32>
    %104 = vector.extract_strided_slice %75 {offsets = [1, 0, 8], sizes = [8, 8, 8], strides = [1, 1, 1]} : vector<10x8x32xbf16> to vector<8x8x8xbf16>
    %105 = vector.extract_strided_slice %77 {offsets = [1, 0, 0], sizes = [8, 8, 8], strides = [1, 1, 1]} : vector<10x8x32xbf16> to vector<8x8x8xbf16>
    %106 = vector.extract_strided_slice %77 {offsets = [1, 0, 8], sizes = [8, 8, 8], strides = [1, 1, 1]} : vector<10x8x32xbf16> to vector<8x8x8xbf16>
    %107 = vector.extract_strided_slice %75 {offsets = [1, 0, 24], sizes = [8, 8, 8], strides = [1, 1, 1]} : vector<10x8x32xbf16> to vector<8x8x8xbf16>
    %108 = vector.extract_strided_slice %77 {offsets = [1, 0, 16], sizes = [8, 8, 8], strides = [1, 1, 1]} : vector<10x8x32xbf16> to vector<8x8x8xbf16>
    %109 = vector.extract_strided_slice %77 {offsets = [1, 0, 24], sizes = [8, 8, 8], strides = [1, 1, 1]} : vector<10x8x32xbf16> to vector<8x8x8xbf16>
    %110 = vector.extract_strided_slice %75 {offsets = [2, 0, 8], sizes = [8, 8, 8], strides = [1, 1, 1]} : vector<10x8x32xbf16> to vector<8x8x8xbf16>
    %111 = vector.extract_strided_slice %77 {offsets = [2, 0, 0], sizes = [8, 8, 8], strides = [1, 1, 1]} : vector<10x8x32xbf16> to vector<8x8x8xbf16>
    %112 = vector.extract_strided_slice %77 {offsets = [2, 0, 8], sizes = [8, 8, 8], strides = [1, 1, 1]} : vector<10x8x32xbf16> to vector<8x8x8xbf16>
    %113 = tpu.concatenate %104, %105, %106, %107, %108, %109, %110, %111, %112 in 2 : vector<8x8x8xbf16>, vector<8x8x8xbf16>, vector<8x8x8xbf16>, vector<8x8x8xbf16>, vector<8x8x8xbf16>, vector<8x8x8xbf16>, vector<8x8x8xbf16>, vector<8x8x8xbf16>, vector<8x8x8xbf16> -> vector<8x8x72xbf16>
    %114 = vector.shape_cast %113 : vector<8x8x72xbf16> to vector<64x72xbf16>
    %cst_70 = arith.constant dense<0.000000e+00> : vector<64x4xf32>
    %115 = tpu.matmul %114, %73, %cst_70 {dimension_numbers = #tpu.dot_dimension_numbers<[1], [0], [0], [1], [0, 0, 1, 1], [], []>} : vector<64x72xbf16>, vector<72x4xbf16>, vector<64x4xf32> -> vector<64x4xf32>
    %116 = vector.extract_strided_slice %77 {offsets = [1, 0, 0], sizes = [8, 8, 8], strides = [1, 1, 1]} : vector<10x8x32xbf16> to vector<8x8x8xbf16>
    %117 = vector.extract_strided_slice %77 {offsets = [1, 0, 8], sizes = [8, 8, 8], strides = [1, 1, 1]} : vector<10x8x32xbf16> to vector<8x8x8xbf16>
    %118 = vector.extract_strided_slice %79 {offsets = [1, 0, 0], sizes = [8, 8, 8], strides = [1, 1, 1]} : vector<10x8x32xbf16> to vector<8x8x8xbf16>
    %119 = vector.extract_strided_slice %77 {offsets = [1, 0, 16], sizes = [8, 8, 8], strides = [1, 1, 1]} : vector<10x8x32xbf16> to vector<8x8x8xbf16>
    %120 = vector.extract_strided_slice %77 {offsets = [1, 0, 24], sizes = [8, 8, 8], strides = [1, 1, 1]} : vector<10x8x32xbf16> to vector<8x8x8xbf16>
    %121 = vector.extract_strided_slice %79 {offsets = [1, 0, 16], sizes = [8, 8, 8], strides = [1, 1, 1]} : vector<10x8x32xbf16> to vector<8x8x8xbf16>
    %122 = vector.extract_strided_slice %77 {offsets = [2, 0, 0], sizes = [8, 8, 8], strides = [1, 1, 1]} : vector<10x8x32xbf16> to vector<8x8x8xbf16>
    %123 = vector.extract_strided_slice %77 {offsets = [2, 0, 8], sizes = [8, 8, 8], strides = [1, 1, 1]} : vector<10x8x32xbf16> to vector<8x8x8xbf16>
    %124 = vector.extract_strided_slice %79 {offsets = [2, 0, 0], sizes = [8, 8, 8], strides = [1, 1, 1]} : vector<10x8x32xbf16> to vector<8x8x8xbf16>
    %125 = tpu.concatenate %116, %117, %118, %119, %120, %121, %122, %123, %124 in 2 : vector<8x8x8xbf16>, vector<8x8x8xbf16>, vector<8x8x8xbf16>, vector<8x8x8xbf16>, vector<8x8x8xbf16>, vector<8x8x8xbf16>, vector<8x8x8xbf16>, vector<8x8x8xbf16>, vector<8x8x8xbf16> -> vector<8x8x72xbf16>
    %126 = vector.shape_cast %125 : vector<8x8x72xbf16> to vector<64x72xbf16>
    %cst_71 = arith.constant dense<0.000000e+00> : vector<64x4xf32>
    %127 = tpu.matmul %126, %73, %cst_71 {dimension_numbers = #tpu.dot_dimension_numbers<[1], [0], [0], [1], [0, 0, 1, 1], [], []>} : vector<64x72xbf16>, vector<72x4xbf16>, vector<64x4xf32> -> vector<64x4xf32>
    %128 = tpu.concatenate %91, %103, %115, %127 in 1 : vector<64x4xf32>, vector<64x4xf32>, vector<64x4xf32>, vector<64x4xf32> -> vector<64x16xf32>
    %c0_72 = arith.constant 0 : index
    %c0_73 = arith.constant 0 : index
    %c0_74 = arith.constant 0 : index
    %129 = vector.load %arg3[%c0_72, %c0_73, %c0_74] : memref<1x3x16xf32, #tpu.memory_space<vmem>>, vector<1x3x16xf32>
    %130 = vector.shape_cast %129 : vector<1x3x16xf32> to vector<3x16xf32>
    %131 = vector.extract_strided_slice %130 {offsets = [0, 0], sizes = [1, 16], strides = [1, 1]} : vector<3x16xf32> to vector<1x16xf32>
    %132 = vector.broadcast %131 : vector<1x16xf32> to vector<64x16xf32>
    %133 = arith.mulf %128, %132 : vector<64x16xf32>
    %134 = vector.extract_strided_slice %130 {offsets = [1, 0], sizes = [1, 16], strides = [1, 1]} : vector<3x16xf32> to vector<1x16xf32>
    %135 = vector.broadcast %134 : vector<1x16xf32> to vector<64x16xf32>
    %136 = arith.addf %133, %135 : vector<64x16xf32>
    %cst_75 = arith.constant 0.000000e+00 : f32
    %137 = vector.broadcast %cst_75 : f32 to vector<64x16xf32>
    %138 = arith.cmpf oge, %136, %137 : vector<64x16xf32>
    %cst_76 = arith.constant 0.00999999977 : f32
    %139 = vector.broadcast %cst_76 : f32 to vector<64x16xf32>
    %140 = arith.mulf %139, %136 : vector<64x16xf32>
    %141 = arith.select %138, %136, %140 : vector<64x16xi1>, vector<64x16xf32>
    %142 = vector.shape_cast %141 : vector<64x16xf32> to vector<8x8x16xf32>
    %c1_77 = arith.constant 1 : index
    %c1_78 = arith.constant 1 : index
    %c0_79 = arith.constant 0 : index
    %143 = vector.load %arg12[%c1_77, %c1_78, %c0_79] : memref<10x10x16xf32, #tpu.memory_space<vmem>>, vector<8x8x16xf32>
    tpu.vector_store %arg12[%c1_77, %c1_78, %c0_79], %142 {strides = array<i32>} : memref<10x10x16xf32, #tpu.memory_space<vmem>>, vector<8x8x16xf32>,
    %c0_80 = arith.constant 0 : index
    %c0_81 = arith.constant 0 : index
    %144 = vector.load %arg8[%c0_80, %c0_81] : memref<36x4xbf16, #tpu.memory_space<vmem>>, vector<36x4xbf16>
    %c0_82 = arith.constant 0 : index
    %c0_83 = arith.constant 0 : index
    %c0_84 = arith.constant 0 : index
    %145 = vector.load %arg12[%c0_82, %c0_83, %c0_84] : memref<10x10x16xf32, #tpu.memory_space<vmem>>, vector<10x8x16xf32>
    %146 = arith.truncf %145 : vector<10x8x16xf32> to vector<10x8x16xbf16>
    %c0_85 = arith.constant 0 : index
    %c1_86 = arith.constant 1 : index
    %c0_87 = arith.constant 0 : index
    %147 = vector.load %arg12[%c0_85, %c1_86, %c0_87] : memref<10x10x16xf32, #tpu.memory_space<vmem>>, vector<10x8x16xf32>
    %148 = arith.truncf %147 : vector<10x8x16xf32> to vector<10x8x16xbf16>
    %c0_88 = arith.constant 0 : index
    %c2_89 = arith.constant 2 : index
    %c0_90 = arith.constant 0 : index
    %149 = vector.load %arg12[%c0_88, %c2_89, %c0_90] : memref<10x10x16xf32, #tpu.memory_space<vmem>>, vector<10x8x16xf32>
    %150 = arith.truncf %149 : vector<10x8x16xf32> to vector<10x8x16xbf16>
    %151 = vector.extract_strided_slice %146 {offsets = [0, 0, 12], sizes = [8, 8, 4], strides = [1, 1, 1]} : vector<10x8x16xbf16> to vector<8x8x4xbf16>
    %152 = vector.extract_strided_slice %148 {offsets = [0, 0, 8], sizes = [8, 8, 4], strides = [1, 1, 1]} : vector<10x8x16xbf16> to vector<8x8x4xbf16>
    %153 = vector.extract_strided_slice %148 {offsets = [0, 0, 12], sizes = [8, 8, 4], strides = [1, 1, 1]} : vector<10x8x16xbf16> to vector<8x8x4xbf16>
    %154 = vector.extract_strided_slice %146 {offsets = [1, 0, 4], sizes = [8, 8, 4], strides = [1, 1, 1]} : vector<10x8x16xbf16> to vector<8x8x4xbf16>
    %155 = vector.extract_strided_slice %148 {offsets = [1, 0, 0], sizes = [8, 8, 4], strides = [1, 1, 1]} : vector<10x8x16xbf16> to vector<8x8x4xbf16>
    %156 = vector.extract_strided_slice %148 {offsets = [1, 0, 4], sizes = [8, 8, 4], strides = [1, 1, 1]} : vector<10x8x16xbf16> to vector<8x8x4xbf16>
    %157 = vector.extract_strided_slice %146 {offsets = [1, 0, 12], sizes = [8, 8, 4], strides = [1, 1, 1]} : vector<10x8x16xbf16> to vector<8x8x4xbf16>
    %158 = vector.extract_strided_slice %148 {offsets = [1, 0, 8], sizes = [8, 8, 4], strides = [1, 1, 1]} : vector<10x8x16xbf16> to vector<8x8x4xbf16>
    %159 = vector.extract_strided_slice %148 {offsets = [1, 0, 12], sizes = [8, 8, 4], strides = [1, 1, 1]} : vector<10x8x16xbf16> to vector<8x8x4xbf16>
    %160 = tpu.concatenate %151, %152, %153, %154, %155, %156, %157, %158, %159 in 2 : vector<8x8x4xbf16>, vector<8x8x4xbf16>, vector<8x8x4xbf16>, vector<8x8x4xbf16>, vector<8x8x4xbf16>, vector<8x8x4xbf16>, vector<8x8x4xbf16>, vector<8x8x4xbf16>, vector<8x8x4xbf16> -> vector<8x8x36xbf16>
    %161 = vector.shape_cast %160 : vector<8x8x36xbf16> to vector<64x36xbf16>
    %cst_91 = arith.constant dense<0.000000e+00> : vector<64x4xf32>
    %162 = tpu.matmul %161, %144, %cst_91 {dimension_numbers = #tpu.dot_dimension_numbers<[1], [0], [0], [1], [0, 0, 1, 1], [], []>} : vector<64x36xbf16>, vector<36x4xbf16>, vector<64x4xf32> -> vector<64x4xf32>
    %163 = vector.extract_strided_slice %148 {offsets = [0, 0, 8], sizes = [8, 8, 4], strides = [1, 1, 1]} : vector<10x8x16xbf16> to vector<8x8x4xbf16>
    %164 = vector.extract_strided_slice %148 {offsets = [0, 0, 12], sizes = [8, 8, 4], strides = [1, 1, 1]} : vector<10x8x16xbf16> to vector<8x8x4xbf16>
    %165 = vector.extract_strided_slice %150 {offsets = [0, 0, 8], sizes = [8, 8, 4], strides = [1, 1, 1]} : vector<10x8x16xbf16> to vector<8x8x4xbf16>
    %166 = vector.extract_strided_slice %148 {offsets = [1, 0, 0], sizes = [8, 8, 4], strides = [1, 1, 1]} : vector<10x8x16xbf16> to vector<8x8x4xbf16>
    %167 = vector.extract_strided_slice %148 {offsets = [1, 0, 4], sizes = [8, 8, 4], strides = [1, 1, 1]} : vector<10x8x16xbf16> to vector<8x8x4xbf16>
    %168 = vector.extract_strided_slice %150 {offsets = [1, 0, 0], sizes = [8, 8, 4], strides = [1, 1, 1]} : vector<10x8x16xbf16> to vector<8x8x4xbf16>
    %169 = vector.extract_strided_slice %148 {offsets = [1, 0, 8], sizes = [8, 8, 4], strides = [1, 1, 1]} : vector<10x8x16xbf16> to vector<8x8x4xbf16>
    %170 = vector.extract_strided_slice %148 {offsets = [1, 0, 12], sizes = [8, 8, 4], strides = [1, 1, 1]} : vector<10x8x16xbf16> to vector<8x8x4xbf16>
    %171 = vector.extract_strided_slice %150 {offsets = [1, 0, 8], sizes = [8, 8, 4], strides = [1, 1, 1]} : vector<10x8x16xbf16> to vector<8x8x4xbf16>
    %172 = tpu.concatenate %163, %164, %165, %166, %167, %168, %169, %170, %171 in 2 : vector<8x8x4xbf16>, vector<8x8x4xbf16>, vector<8x8x4xbf16>, vector<8x8x4xbf16>, vector<8x8x4xbf16>, vector<8x8x4xbf16>, vector<8x8x4xbf16>, vector<8x8x4xbf16>, vector<8x8x4xbf16> -> vector<8x8x36xbf16>
    %173 = vector.shape_cast %172 : vector<8x8x36xbf16> to vector<64x36xbf16>
    %cst_92 = arith.constant dense<0.000000e+00> : vector<64x4xf32>
    %174 = tpu.matmul %173, %144, %cst_92 {dimension_numbers = #tpu.dot_dimension_numbers<[1], [0], [0], [1], [0, 0, 1, 1], [], []>} : vector<64x36xbf16>, vector<36x4xbf16>, vector<64x4xf32> -> vector<64x4xf32>
    %175 = vector.extract_strided_slice %146 {offsets = [1, 0, 4], sizes = [8, 8, 4], strides = [1, 1, 1]} : vector<10x8x16xbf16> to vector<8x8x4xbf16>
    %176 = vector.extract_strided_slice %148 {offsets = [1, 0, 0], sizes = [8, 8, 4], strides = [1, 1, 1]} : vector<10x8x16xbf16> to vector<8x8x4xbf16>
    %177 = vector.extract_strided_slice %148 {offsets = [1, 0, 4], sizes = [8, 8, 4], strides = [1, 1, 1]} : vector<10x8x16xbf16> to vector<8x8x4xbf16>
    %178 = vector.extract_strided_slice %146 {offsets = [1, 0, 12], sizes = [8, 8, 4], strides = [1, 1, 1]} : vector<10x8x16xbf16> to vector<8x8x4xbf16>
    %179 = vector.extract_strided_slice %148 {offsets = [1, 0, 8], sizes = [8, 8, 4], strides = [1, 1, 1]} : vector<10x8x16xbf16> to vector<8x8x4xbf16>
    %180 = vector.extract_strided_slice %148 {offsets = [1, 0, 12], sizes = [8, 8, 4], strides = [1, 1, 1]} : vector<10x8x16xbf16> to vector<8x8x4xbf16>
    %181 = vector.extract_strided_slice %146 {offsets = [2, 0, 4], sizes = [8, 8, 4], strides = [1, 1, 1]} : vector<10x8x16xbf16> to vector<8x8x4xbf16>
    %182 = vector.extract_strided_slice %148 {offsets = [2, 0, 0], sizes = [8, 8, 4], strides = [1, 1, 1]} : vector<10x8x16xbf16> to vector<8x8x4xbf16>
    %183 = vector.extract_strided_slice %148 {offsets = [2, 0, 4], sizes = [8, 8, 4], strides = [1, 1, 1]} : vector<10x8x16xbf16> to vector<8x8x4xbf16>
    %184 = tpu.concatenate %175, %176, %177, %178, %179, %180, %181, %182, %183 in 2 : vector<8x8x4xbf16>, vector<8x8x4xbf16>, vector<8x8x4xbf16>, vector<8x8x4xbf16>, vector<8x8x4xbf16>, vector<8x8x4xbf16>, vector<8x8x4xbf16>, vector<8x8x4xbf16>, vector<8x8x4xbf16> -> vector<8x8x36xbf16>
    %185 = vector.shape_cast %184 : vector<8x8x36xbf16> to vector<64x36xbf16>
    %cst_93 = arith.constant dense<0.000000e+00> : vector<64x4xf32>
    %186 = tpu.matmul %185, %144, %cst_93 {dimension_numbers = #tpu.dot_dimension_numbers<[1], [0], [0], [1], [0, 0, 1, 1], [], []>} : vector<64x36xbf16>, vector<36x4xbf16>, vector<64x4xf32> -> vector<64x4xf32>
    %187 = vector.extract_strided_slice %148 {offsets = [1, 0, 0], sizes = [8, 8, 4], strides = [1, 1, 1]} : vector<10x8x16xbf16> to vector<8x8x4xbf16>
    %188 = vector.extract_strided_slice %148 {offsets = [1, 0, 4], sizes = [8, 8, 4], strides = [1, 1, 1]} : vector<10x8x16xbf16> to vector<8x8x4xbf16>
    %189 = vector.extract_strided_slice %150 {offsets = [1, 0, 0], sizes = [8, 8, 4], strides = [1, 1, 1]} : vector<10x8x16xbf16> to vector<8x8x4xbf16>
    %190 = vector.extract_strided_slice %148 {offsets = [1, 0, 8], sizes = [8, 8, 4], strides = [1, 1, 1]} : vector<10x8x16xbf16> to vector<8x8x4xbf16>
    %191 = vector.extract_strided_slice %148 {offsets = [1, 0, 12], sizes = [8, 8, 4], strides = [1, 1, 1]} : vector<10x8x16xbf16> to vector<8x8x4xbf16>
    %192 = vector.extract_strided_slice %150 {offsets = [1, 0, 8], sizes = [8, 8, 4], strides = [1, 1, 1]} : vector<10x8x16xbf16> to vector<8x8x4xbf16>
    %193 = vector.extract_strided_slice %148 {offsets = [2, 0, 0], sizes = [8, 8, 4], strides = [1, 1, 1]} : vector<10x8x16xbf16> to vector<8x8x4xbf16>
    %194 = vector.extract_strided_slice %148 {offsets = [2, 0, 4], sizes = [8, 8, 4], strides = [1, 1, 1]} : vector<10x8x16xbf16> to vector<8x8x4xbf16>
    %195 = vector.extract_strided_slice %150 {offsets = [2, 0, 0], sizes = [8, 8, 4], strides = [1, 1, 1]} : vector<10x8x16xbf16> to vector<8x8x4xbf16>
    %196 = tpu.concatenate %187, %188, %189, %190, %191, %192, %193, %194, %195 in 2 : vector<8x8x4xbf16>, vector<8x8x4xbf16>, vector<8x8x4xbf16>, vector<8x8x4xbf16>, vector<8x8x4xbf16>, vector<8x8x4xbf16>, vector<8x8x4xbf16>, vector<8x8x4xbf16>, vector<8x8x4xbf16> -> vector<8x8x36xbf16>
    %197 = vector.shape_cast %196 : vector<8x8x36xbf16> to vector<64x36xbf16>
    %cst_94 = arith.constant dense<0.000000e+00> : vector<64x4xf32>
    %198 = tpu.matmul %197, %144, %cst_94 {dimension_numbers = #tpu.dot_dimension_numbers<[1], [0], [0], [1], [0, 0, 1, 1], [], []>} : vector<64x36xbf16>, vector<36x4xbf16>, vector<64x4xf32> -> vector<64x4xf32>
    %199 = tpu.concatenate %162, %174, %186, %198 in 1 : vector<64x4xf32>, vector<64x4xf32>, vector<64x4xf32>, vector<64x4xf32> -> vector<64x16xf32>
    %200 = arith.addf %199, %57 : vector<64x16xf32>
    %201 = vector.extract_strided_slice %130 {offsets = [2, 0], sizes = [1, 16], strides = [1, 1]} : vector<3x16xf32> to vector<1x16xf32>
    %202 = vector.broadcast %201 : vector<1x16xf32> to vector<64x16xf32>
    %203 = arith.addf %200, %202 : vector<64x16xf32>
    %204 = vector.shape_cast %203 : vector<64x16xf32> to vector<8x8x16xf32>
    %c0_95 = arith.constant 0 : index
    %c0_96 = arith.constant 0 : index
    %c0_97 = arith.constant 0 : index
    %c0_98 = arith.constant 0 : index
    %205 = vector.load %arg10[%c0_95, %c0_96, %c0_97, %c0_98] : memref<1x8x8x16xf32, #tpu.memory_space<vmem>>, vector<1x8x8x16xf32>
    %206 = vector.shape_cast %205 : vector<1x8x8x16xf32> to vector<8x8x16xf32>
    %207 = vector.shape_cast %204 : vector<8x8x16xf32> to vector<1x8x8x16xf32>
    tpu.vector_store %arg10[%c0_95, %c0_96, %c0_97, %c0_98], %207 {strides = array<i32>} : memref<1x8x8x16xf32, #tpu.memory_space<vmem>>, vector<1x8x8x16xf32>,
    return
  }
  func.func @transform_0(%arg0: i32) -> (i32, i32, i32) {
    %c0_i32 = arith.constant 0 : i32
    %c0_i32_0 = arith.constant 0 : i32
    %c0_i32_1 = arith.constant 0 : i32
    return %arg0, %c0_i32, %c0_i32_0 : i32, i32, i32
  }
  func.func @transform_1(%arg0: i32) -> (i32, i32, i32) {
    %c0_i32 = arith.constant 0 : i32
    %c0_i32_0 = arith.constant 0 : i32
    %c0_i32_1 = arith.constant 0 : i32
    return %arg0, %c0_i32, %c0_i32_0 : i32, i32, i32
  }
  func.func @transform_2(%arg0: i32) -> (i32, i32, i32) {
    %c0_i32 = arith.constant 0 : i32
    %c0_i32_0 = arith.constant 0 : i32
    %c0_i32_1 = arith.constant 0 : i32
    return %arg0, %c0_i32, %c0_i32_0 : i32, i32, i32
  }
  func.func @transform_3(%arg0: i32) -> (i32, i32, i32, i32) {
    %c0_i32 = arith.constant 0 : i32
    %c0_i32_0 = arith.constant 0 : i32
    %c0_i32_1 = arith.constant 0 : i32
    %c0_i32_2 = arith.constant 0 : i32
    return %arg0, %c0_i32, %c0_i32_0, %c0_i32_1 : i32, i32, i32, i32
  }
  func.func @transform_4(%arg0: i32) -> (i32, i32, i32, i32) {
    %c0_i32 = arith.constant 0 : i32
    %c0_i32_0 = arith.constant 0 : i32
    %c0_i32_1 = arith.constant 0 : i32
    %c0_i32_2 = arith.constant 0 : i32
    return %arg0, %c0_i32, %c0_i32_0, %c0_i32_1 : i32, i32, i32, i32
  }
  func.func @transform_5(%arg0: i32) -> (i32, i32) {
    %c0_i32 = arith.constant 0 : i32
    %c0_i32_0 = arith.constant 0 : i32
    %c0_i32_1 = arith.constant 0 : i32
    return %c0_i32, %c0_i32_0 : i32, i32
  }
  func.func @transform_6(%arg0: i32) -> (i32, i32) {
    %c0_i32 = arith.constant 0 : i32
    %c0_i32_0 = arith.constant 0 : i32
    %c0_i32_1 = arith.constant 0 : i32
    return %c0_i32, %c0_i32_0 : i32, i32
  }
  func.func @transform_7(%arg0: i32) -> (i32, i32) {
    %c0_i32 = arith.constant 0 : i32
    %c0_i32_0 = arith.constant 0 : i32
    %c0_i32_1 = arith.constant 0 : i32
    return %c0_i32, %c0_i32_0 : i32, i32
  }
  func.func @transform_8(%arg0: i32) -> (i32, i32) {
    %c0_i32 = arith.constant 0 : i32
    %c0_i32_0 = arith.constant 0 : i32
    %c0_i32_1 = arith.constant 0 : i32
    return %c0_i32, %c0_i32_0 : i32, i32
  }
  func.func @transform_9(%arg0: i32) -> (i32, i32, i32, i32) {
    %c0_i32 = arith.constant 0 : i32
    %c0_i32_0 = arith.constant 0 : i32
    %c0_i32_1 = arith.constant 0 : i32
    %c0_i32_2 = arith.constant 0 : i32
    return %arg0, %c0_i32, %c0_i32_0, %c0_i32_1 : i32, i32, i32, i32
  }
}

</mosaic_0001>

<llo_original>
// kernel: tpu_custom_call.1
$region0: #{tpu_custom_call.1}
  #allocation0 [shape = 'u32[]', space=smem, size = 0x4, offset = 0x4, fixed_abs, tag = 'smem constant byte address 0x4 - core index']
  #allocation1 [shape = 'u32[144,128]{1,0:T(1,128)}', space=vmem, size = 0x12000, scoped, tag = 'internal scratch']
  #allocation2 [shape = 'f32[10,10,32]{2,1,0:T(8,128)}', space=vmem, size = 0x14000, scoped, tag = 'scratch operand']
  #allocation3 [shape = 'f32[10,10,16]{2,1,0:T(8,128)}', space=vmem, size = 0x14000, scoped, tag = 'scratch operand']
  %s0 = inlined_call_operand.vmem [shape: f32[2,2,8], index: 0, kind: input, shape index: {}]
  %s1 = inlined_call_operand.vmem [shape: f32[2,2,32], index: 1, kind: input, shape index: {}]
  %s2 = inlined_call_operand.vmem [shape: f32[2,3,16], index: 2, kind: input, shape index: {}]
  %s3 = inlined_call_operand.hbm [shape: f32[2,8,8,8], index: 3, kind: input, shape index: {}]
  %s4 = inlined_call_operand.hbm [shape: f32[2,8,8,16], index: 4, kind: input, shape index: {}]
  %s5 = inlined_call_operand.vmem [shape: bf16[8,16], index: 5, kind: input, shape index: {}]
  %s6 = inlined_call_operand.vmem [shape: bf16[72,4], index: 6, kind: input, shape index: {}]
  %s7 = inlined_call_operand.vmem [shape: bf16[36,4], index: 7, kind: input, shape index: {}]
  %s8 = inlined_call_operand.vmem [shape: bf16[8,4], index: 8, kind: input, shape index: {}]
  %s9 = inlined_call_operand.hbm [shape: f32[2,8,8,16], index: 9, kind: output, shape index: {}]
  %s10 = sld [smem:[#allocation0]]
  $region77: #{tpu_custom_call.1} parent=0
    _
  %s12 = ssub.s32 1, %s10
  %s13 = scalar_select 0, %s12, %s10
  $region1: #{tpu_custom_call.1} parent=0
    #allocation4 [shape = 'u8[65536]{0}', space=vmem, size = 0x10000, scoped, tag = 'input window, operand 3']
    #allocation5 [shape = 's32[2]{0}', space=sflag, size = 0x8, scoped, tag = 'scoped memory for tpu_custom_call.1']
    #allocation6 [shape = 's32[2]{0}', space=sflag, size = 0x8, scoped, tag = 'scoped memory for tpu_custom_call.1']
    #allocation7 [shape = 'u8[65536]{0}', space=vmem, size = 0x10000, scoped, tag = 'input window, operand 4']
    #allocation8 [shape = 's32[2]{0}', space=sflag, size = 0x8, scoped, tag = 'scoped memory for tpu_custom_call.1']
    #allocation9 [shape = 'u8[65536]{0}', space=vmem, size = 0x10000, scoped, tag = 'output window, operand 0']
    %14 = vsyncpa [#allocation5], 0
    %s15 = scalar_lea.sflag [#allocation5], 1
    %16 = vsyncpa %s15, 0
    %17 = vsyncpa [#allocation8], 0
    %s18 = scalar_lea.sflag [#allocation8], 1
    %19 = vsyncpa %s18, 0
    %20 = vsyncpa [#allocation6], 0
    %s21 = scalar_lea.sflag [#allocation6], 1
    %22 = vsyncpa %s21, 0
    loop: start=0, step=1, limit=4
    $region2: #{tpu_custom_call.1} parent=1 // loop_pre_header
      _
    $region3: #{tpu_custom_call.1} parent=1 // loop_header
      %s24 = sphi 0, %s28
      %p25 = scmp.ge.s32.totalorder %s24, 4
      %s34 = sphi 0, %s36
      %s37 = sphi 0, %s34
      %s38 = sphi 0, %s37
      %s54 = sphi 0, %s38
      %s60 = sphi 0, %s62
      %s63 = sphi 0, %s60
      %s64 = sphi 0, %s63
      %s80 = sphi 0, %s64
      %s86 = sphi 0, %s88
      %s89 = sphi 0, %s86
      %s90 = sphi 0, %s89
      %s106 = sphi 0, %s90
      %s112 = sphi 0, %s114
      %s115 = sphi 0, %s112
      %s116 = sphi 0, %s115
      %s132 = sphi 0, %s116
      %s138 = sphi 0, %s140
      %s141 = sphi 0, %s138
      %s142 = sphi 0, %s141
      %s158 = sphi 0, %s142
      %s162 = sphi 0, %s162
      %s164 = sphi 0, %s162
      %s165 = sphi 0, %s164
      %s179 = sphi 0, %s165
      %s183 = sphi 0, %s183
      %s185 = sphi 0, %s183
      %s186 = sphi 0, %s185
      %s200 = sphi 0, %s186
      %s204 = sphi 0, %s204
      %s206 = sphi 0, %s204
      %s207 = sphi 0, %s206
      %s221 = sphi 0, %s207
      %s225 = sphi 0, %s225
      %s227 = sphi 0, %s225
      %s228 = sphi 0, %s227
      %s242 = sphi 0, %s228
      %s248 = sphi 0, %s250
      %s251 = sphi 0, %s248
      %s252 = sphi 0, %s251
      %s268 = sphi 0, %s252
    $region4: #{tpu_custom_call.1} parent=1 // loop_header_branch
      %27 = sbr.rel (%p25) target = $region8
    $region5: #{tpu_custom_call.1} parent=1 // loop_body
      %s29 = ssub.s32 %s24, 1
      %s30 = ssub.s32 %s24, 2
      %s31 = sadd.s32 %s24, 1
      %s32 = ssub.s32 %s24, %s31
      %p33 = scmp.eq.s32.totalorder %s32, 0
      %s35 = sadd.s32 %s34, 1
      %s36 = scalar_select %p33, %s34, %s35
      %p39 = pneg %p33
      %p40 = scmp.eq.s32.totalorder %s24, 1
      %p41 = por %p39, %p40
      %p42 = scmp.ne.s32.totalorder %s34, %s37
      %p43 = scmp.eq.s32.totalorder %s24, 0
      %p44 = por %p42, %p43
      %p45 = scmp.ne.s32.totalorder %s34, %s37
      %p46 = scmp.eq.s32.totalorder %s29, 1
      %p47 = por %p45, %p46
      %p48 = scmp.ne.s32.totalorder %s37, %s38
      %p49 = scmp.eq.s32.totalorder %s29, 0
      %p50 = por %p48, %p49
      %p51 = scmp.ne.s32.totalorder %s37, %s38
      %p52 = scmp.eq.s32.totalorder %s30, 1
      %p53 = por %p51, %p52
      %p55 = scmp.ne.s32.totalorder %s38, %s54
      %p56 = scmp.eq.s32.totalorder %s30, 0
      %p57 = por %p55, %p56
      %s58 = ssub.s32 %s24, %s31
      %p59 = scmp.eq.s32.totalorder %s58, 0
      %s61 = sadd.s32 %s60, 1
      %s62 = scalar_select %p59, %s60, %s61
      %p65 = pneg %p59
      %p66 = scmp.eq.s32.totalorder %s24, 1
      %p67 = por %p65, %p66
      %p68 = scmp.ne.s32.totalorder %s60, %s63
      %p69 = scmp.eq.s32.totalorder %s24, 0
      %p70 = por %p68, %p69
      %p71 = scmp.ne.s32.totalorder %s60, %s63
      %p72 = scmp.eq.s32.totalorder %s29, 1
      %p73 = por %p71, %p72
      %p74 = scmp.ne.s32.totalorder %s63, %s64
      %p75 = scmp.eq.s32.totalorder %s29, 0
      %p76 = por %p74, %p75
      %p77 = scmp.ne.s32.totalorder %s63, %s64
      %p78 = scmp.eq.s32.totalorder %s30, 1
      %p79 = por %p77, %p78
      %p81 = scmp.ne.s32.totalorder %s64, %s80
      %p82 = scmp.eq.s32.totalorder %s30, 0
      %p83 = por %p81, %p82
      %s84 = ssub.s32 %s24, %s31
      %p85 = scmp.eq.s32.totalorder %s84, 0
      %s87 = sadd.s32 %s86, 1
      %s88 = scalar_select %p85, %s86, %s87
      %p91 = pneg %p85
      %p92 = scmp.eq.s32.totalorder %s24, 1
      %p93 = por %p91, %p92
      %p94 = scmp.ne.s32.totalorder %s86, %s89
      %p95 = scmp.eq.s32.totalorder %s24, 0
      %p96 = por %p94, %p95
      %p97 = scmp.ne.s32.totalorder %s86, %s89
      %p98 = scmp.eq.s32.totalorder %s29, 1
      %p99 = por %p97, %p98
      %p100 = scmp.ne.s32.totalorder %s89, %s90
      %p101 = scmp.eq.s32.totalorder %s29, 0
      %p102 = por %p100, %p101
      %p103 = scmp.ne.s32.totalorder %s89, %s90
      %p104 = scmp.eq.s32.totalorder %s30, 1
      %p105 = por %p103, %p104
      %p107 = scmp.ne.s32.totalorder %s90, %s106
      %p108 = scmp.eq.s32.totalorder %s30, 0
      %p109 = por %p107, %p108
      %s110 = ssub.s32 %s24, %s31
      %p111 = scmp.eq.s32.totalorder %s110, 0
      %s113 = sadd.s32 %s112, 1
      %s114 = scalar_select %p111, %s112, %s113
      %p117 = pneg %p111
      %p118 = scmp.eq.s32.totalorder %s24, 1
      %p119 = por %p117, %p118
      %p120 = scmp.ne.s32.totalorder %s112, %s115
      %p121 = scmp.eq.s32.totalorder %s24, 0
      %p122 = por %p120, %p121
      %p123 = scmp.ne.s32.totalorder %s112, %s115
      %p124 = scmp.eq.s32.totalorder %s29, 1
      %p125 = por %p123, %p124
      %p126 = scmp.ne.s32.totalorder %s115, %s116
      %p127 = scmp.eq.s32.totalorder %s29, 0
      %p128 = por %p126, %p127
      %p129 = scmp.ne.s32.totalorder %s115, %s116
      %p130 = scmp.eq.s32.totalorder %s30, 1
      %p131 = por %p129, %p130
      %p133 = scmp.ne.s32.totalorder %s116, %s132
      %p134 = scmp.eq.s32.totalorder %s30, 0
      %p135 = por %p133, %p134
      %s136 = ssub.s32 %s24, %s31
      %p137 = scmp.eq.s32.totalorder %s136, 0
      %s139 = sadd.s32 %s138, 1
      %s140 = scalar_select %p137, %s138, %s139
      %p143 = pneg %p137
      %p144 = scmp.eq.s32.totalorder %s24, 1
      %p145 = por %p143, %p144
      %p146 = scmp.ne.s32.totalorder %s138, %s141
      %p147 = scmp.eq.s32.totalorder %s24, 0
      %p148 = por %p146, %p147
      %p149 = scmp.ne.s32.totalorder %s138, %s141
      %p150 = scmp.eq.s32.totalorder %s29, 1
      %p151 = por %p149, %p150
      %p152 = scmp.ne.s32.totalorder %s141, %s142
      %p153 = scmp.eq.s32.totalorder %s29, 0
      %p154 = por %p152, %p153
      %p155 = scmp.ne.s32.totalorder %s141, %s142
      %p156 = scmp.eq.s32.totalorder %s30, 1
      %p157 = por %p155, %p156
      %p159 = scmp.ne.s32.totalorder %s142, %s158
      %p160 = scmp.eq.s32.totalorder %s30, 0
      %p161 = por %p159, %p160
      %s163 = sadd.s32 %s162, 1
      %p166 = scmp.eq.s32.totalorder %s24, 1
      %p167 = scmp.ne.s32.totalorder %s162, %s164
      %p168 = scmp.eq.s32.totalorder %s24, 0
      %p169 = por %p167, %p168
      %p170 = scmp.ne.s32.totalorder %s162, %s164
      %p171 = scmp.eq.s32.totalorder %s29, 1
      %p172 = por %p170, %p171
      %p173 = scmp.ne.s32.totalorder %s164, %s165
      %p174 = scmp.eq.s32.totalorder %s29, 0
      %p175 = por %p173, %p174
      %p176 = scmp.ne.s32.totalorder %s164, %s165
      %p177 = scmp.eq.s32.totalorder %s30, 1
      %p178 = por %p176, %p177
      %p180 = scmp.ne.s32.totalorder %s165, %s179
      %p181 = scmp.eq.s32.totalorder %s30, 0
      %p182 = por %p180, %p181
      %s184 = sadd.s32 %s183, 1
      %p187 = scmp.eq.s32.totalorder %s24, 1
      %p188 = scmp.ne.s32.totalorder %s183, %s185
      %p189 = scmp.eq.s32.totalorder %s24, 0
      %p190 = por %p188, %p189
      %p191 = scmp.ne.s32.totalorder %s183, %s185
      %p192 = scmp.eq.s32.totalorder %s29, 1
      %p193 = por %p191, %p192
      %p194 = scmp.ne.s32.totalorder %s185, %s186
      %p195 = scmp.eq.s32.totalorder %s29, 0
      %p196 = por %p194, %p195
      %p197 = scmp.ne.s32.totalorder %s185, %s186
      %p198 = scmp.eq.s32.totalorder %s30, 1
      %p199 = por %p197, %p198
      %p201 = scmp.ne.s32.totalorder %s186, %s200
      %p202 = scmp.eq.s32.totalorder %s30, 0
      %p203 = por %p201, %p202
      %s205 = sadd.s32 %s204, 1
      %p208 = scmp.eq.s32.totalorder %s24, 1
      %p209 = scmp.ne.s32.totalorder %s204, %s206
      %p210 = scmp.eq.s32.totalorder %s24, 0
      %p211 = por %p209, %p210
      %p212 = scmp.ne.s32.totalorder %s204, %s206
      %p213 = scmp.eq.s32.totalorder %s29, 1
      %p214 = por %p212, %p213
      %p215 = scmp.ne.s32.totalorder %s206, %s207
      %p216 = scmp.eq.s32.totalorder %s29, 0
      %p217 = por %p215, %p216
      %p218 = scmp.ne.s32.totalorder %s206, %s207
      %p219 = scmp.eq.s32.totalorder %s30, 1
      %p220 = por %p218, %p219
      %p222 = scmp.ne.s32.totalorder %s207, %s221
      %p223 = scmp.eq.s32.totalorder %s30, 0
      %p224 = por %p222, %p223
      %s226 = sadd.s32 %s225, 1
      %p229 = scmp.eq.s32.totalorder %s24, 1
      %p230 = scmp.ne.s32.totalorder %s225, %s227
      %p231 = scmp.eq.s32.totalorder %s24, 0
      %p232 = por %p230, %p231
      %p233 = scmp.ne.s32.totalorder %s225, %s227
      %p234 = scmp.eq.s32.totalorder %s29, 1
      %p235 = por %p233, %p234
      %p236 = scmp.ne.s32.totalorder %s227, %s228
      %p237 = scmp.eq.s32.totalorder %s29, 0
      %p238 = por %p236, %p237
      %p239 = scmp.ne.s32.totalorder %s227, %s228
      %p240 = scmp.eq.s32.totalorder %s30, 1
      %p241 = por %p239, %p240
      %p243 = scmp.ne.s32.totalorder %s228, %s242
      %p244 = scmp.eq.s32.totalorder %s30, 0
      %p245 = por %p243, %p244
      %s246 = ssub.s32 %s24, %s31
      %p247 = scmp.eq.s32.totalorder %s246, 0
      %s249 = sadd.s32 %s248, 1
      %s250 = scalar_select %p247, %s248, %s249
      %p253 = pneg %p247
      %p254 = scmp.eq.s32.totalorder %s24, 1
      %p255 = por %p253, %p254
      %p256 = scmp.ne.s32.totalorder %s248, %s251
      %p257 = scmp.eq.s32.totalorder %s24, 0
      %p258 = por %p256, %p257
      %p259 = scmp.ne.s32.totalorder %s248, %s251
      %p260 = scmp.eq.s32.totalorder %s29, 1
      %p261 = por %p259, %p260
      %p262 = scmp.ne.s32.totalorder %s251, %s252
      %p263 = scmp.eq.s32.totalorder %s29, 0
      %p264 = por %p262, %p263
      %p265 = scmp.ne.s32.totalorder %s251, %s252
      %p266 = scmp.eq.s32.totalorder %s30, 1
      %p267 = por %p265, %p266
      %p269 = scmp.ne.s32.totalorder %s252, %s268
      %p270 = scmp.eq.s32.totalorder %s30, 0
      %p271 = por %p269, %p270
      %p272 = scmp.le.s32.totalorder 1, %s24
      %p273 = scmp.lt.s32.totalorder %s24, 3
      %p274 = pnand %p272, %p273
      %p275 = pneg %p274
      // Predicated region
      $region9: #{tpu_custom_call.1} parent=5 // pred_check
        _
      $region10: #{tpu_custom_call.1} parent=5 // pred_check_branch
        %277 = sbr.rel (%p274) target = $region12
      $region11: #{tpu_custom_call.1} parent=5 // pred_region
        %s278 = ssub.s32 %s24, 1
        // Predicated region
        $region13: #{tpu_custom_call.1} parent=11 // pred_check
          %p279 = pneg %p175
        $region14: #{tpu_custom_call.1} parent=11 // pred_check_branch
          %281 = sbr.rel (%p279) target = $region16
        $region15: #{tpu_custom_call.1} parent=11 // pred_region
          _
        $region16: #{tpu_custom_call.1} parent=11 // pred_fallthru
          _
        // Predicated region
        $region17: #{tpu_custom_call.1} parent=11 // pred_check
          %p282 = pneg %p196
        $region18: #{tpu_custom_call.1} parent=11 // pred_check_branch
          %284 = sbr.rel (%p282) target = $region20
        $region19: #{tpu_custom_call.1} parent=11 // pred_region
          _
        $region20: #{tpu_custom_call.1} parent=11 // pred_fallthru
          _
        // Predicated region
        $region21: #{tpu_custom_call.1} parent=11 // pred_check
          %p285 = pneg %p217
        $region22: #{tpu_custom_call.1} parent=11 // pred_check_branch
          %287 = sbr.rel (%p285) target = $region24
        $region23: #{tpu_custom_call.1} parent=11 // pred_region
          _
        $region24: #{tpu_custom_call.1} parent=11 // pred_fallthru
          _
        // Predicated region
        $region25: #{tpu_custom_call.1} parent=11 // pred_check
          %p288 = pneg %p238
        $region26: #{tpu_custom_call.1} parent=11 // pred_check_branch
          %290 = sbr.rel (%p288) target = $region28
        $region27: #{tpu_custom_call.1} parent=11 // pred_region
          _
        $region28: #{tpu_custom_call.1} parent=11 // pred_fallthru
          _
      $region12: #{tpu_custom_call.1} parent=5 // pred_fallthru
        _
      %p291 = scmp.lt.s32.totalorder %s24, 2
      // Predicated region
      $region29: #{tpu_custom_call.1} parent=5 // pred_check
        %p292 = pneg %p291
      $region30: #{tpu_custom_call.1} parent=5 // pred_check_branch
        %294 = sbr.rel (%p292) target = $region32
      $region31: #{tpu_custom_call.1} parent=5 // pred_region
        // Predicated region
        $region33: #{tpu_custom_call.1} parent=31 // pred_check
          %p295 = pneg %p44
        $region34: #{tpu_custom_call.1} parent=31 // pred_check_branch
          %297 = sbr.rel (%p295) target = $region36
        $region35: #{tpu_custom_call.1} parent=31 // pred_region
          %p298 = scmp.lt.s32.totalorder %s24, 1
          %s299 = scalar_select %p298, %s24, 1
          %s300 = smul.addr %s299, 2
          %s301 = scalar_lea.vmem %s0, %s300
        $region36: #{tpu_custom_call.1} parent=31 // pred_fallthru
          _
        // Predicated region
        $region37: #{tpu_custom_call.1} parent=31 // pred_check
          %p302 = pneg %p70
        $region38: #{tpu_custom_call.1} parent=31 // pred_check_branch
          %304 = sbr.rel (%p302) target = $region40
        $region39: #{tpu_custom_call.1} parent=31 // pred_region
          %p305 = scmp.lt.s32.totalorder %s24, 1
          %s306 = scalar_select %p305, %s24, 1
          %s307 = smul.addr %s306, 2
          %s308 = scalar_lea.vmem %s1, %s307
        $region40: #{tpu_custom_call.1} parent=31 // pred_fallthru
          _
        // Predicated region
        $region41: #{tpu_custom_call.1} parent=31 // pred_check
          %p309 = pneg %p96
        $region42: #{tpu_custom_call.1} parent=31 // pred_check_branch
          %311 = sbr.rel (%p309) target = $region44
        $region43: #{tpu_custom_call.1} parent=31 // pred_region
          %p312 = scmp.lt.s32.totalorder %s24, 1
          %s313 = scalar_select %p312, %s24, 1
          %s314 = smul.addr %s313, 4
          %s315 = scalar_lea.vmem %s2, %s314
        $region44: #{tpu_custom_call.1} parent=31 // pred_fallthru
          _
        // Predicated region
        $region45: #{tpu_custom_call.1} parent=31 // pred_check
          %p316 = pneg %p122
        $region46: #{tpu_custom_call.1} parent=31 // pred_check_branch
          %318 = sbr.rel (%p316) target = $region48
        $region47: #{tpu_custom_call.1} parent=31 // pred_region
          %s319 = sand.u32 %s112, 1
          %s320 = scalar_lea.sflag [#allocation5], %s319
          %s321 = sand.u32 %s112, 1
          %s322 = smul.addr %s321, 64
          %s323 = scalar_lea.vmem [#allocation4], %s322
          %s325 = ssub.s32 1024, 1024
          %326 = vsyncadd %s320, %s325
          %s327 = smul.addr %s24, 8
          %s328 = smul.addr %s327, 128
          %s329 = scalar_lea.hbm %s3, %s328
          %s330 = sshll.u32 %s323, 4
          %s331 = int_to_ptr.vmem [resolvable:$true] %s330
          %336 = dma.hbm_to_vmem [thread:$0]  %s329, 1024, %s331, %s320, 128, 128, 8
        $region48: #{tpu_custom_call.1} parent=31 // pred_fallthru
          _
        // Predicated region
        $region49: #{tpu_custom_call.1} parent=31 // pred_check
          %p337 = pneg %p148
        $region50: #{tpu_custom_call.1} parent=31 // pred_check_branch
          %339 = sbr.rel (%p337) target = $region52
        $region51: #{tpu_custom_call.1} parent=31 // pred_region
          %s340 = sand.u32 %s138, 1
          %s341 = scalar_lea.sflag [#allocation8], %s340
          %s342 = sand.u32 %s138, 1
          %s343 = smul.addr %s342, 64
          %s344 = scalar_lea.vmem [#allocation7], %s343
          %s346 = ssub.s32 1024, 1024
          %347 = vsyncadd %s341, %s346
          %s348 = smul.addr %s24, 8
          %s349 = smul.addr %s348, 128
          %s350 = scalar_lea.hbm %s4, %s349
          %s351 = sshll.u32 %s344, 4
          %s352 = int_to_ptr.vmem [resolvable:$true] %s351
          %357 = dma.hbm_to_vmem [thread:$0]  %s350, 1024, %s352, %s341, 128, 128, 8
        $region52: #{tpu_custom_call.1} parent=31 // pred_fallthru
          _
      $region32: #{tpu_custom_call.1} parent=5 // pred_fallthru
        _
      %p358 = scmp.le.s32.totalorder 1, %s24
      %p359 = scmp.lt.s32.totalorder %s24, 3
      %p360 = pnand %p358, %p359
      %p361 = pneg %p360
      // Predicated region
      $region53: #{tpu_custom_call.1} parent=5 // pred_check
        _
      $region54: #{tpu_custom_call.1} parent=5 // pred_check_branch
        %363 = sbr.rel (%p360) target = $region56
      $region55: #{tpu_custom_call.1} parent=5 // pred_region
        %s364 = ssub.s32 %s24, 1
        %s365 = sand.u32 %s115, 1
        %s366 = scalar_lea.sflag [#allocation5], %s365
        %s367 = sand.u32 %s115, 1
        %s368 = smul.addr %s367, 64
        %s369 = scalar_lea.vmem [#allocation4], %s368
        // Predicated region
        $region57: #{tpu_custom_call.1} parent=55 // pred_check
          %p370 = pneg %p128
        $region58: #{tpu_custom_call.1} parent=55 // pred_check_branch
          %372 = sbr.rel (%p370) target = $region60
        $region59: #{tpu_custom_call.1} parent=55 // pred_region
          %373 = dma.done %s366, 1024
        $region60: #{tpu_custom_call.1} parent=55 // pred_fallthru
          _
        %s374 = sand.u32 %s141, 1
        %s375 = scalar_lea.sflag [#allocation8], %s374
        %s376 = sand.u32 %s141, 1
        %s377 = smul.addr %s376, 64
        %s378 = scalar_lea.vmem [#allocation7], %s377
        // Predicated region
        $region61: #{tpu_custom_call.1} parent=55 // pred_check
          %p379 = pneg %p154
        $region62: #{tpu_custom_call.1} parent=55 // pred_check_branch
          %381 = sbr.rel (%p379) target = $region64
        $region63: #{tpu_custom_call.1} parent=55 // pred_region
          %382 = dma.done %s375, 1024
        $region64: #{tpu_custom_call.1} parent=55 // pred_fallthru
          _
        %p383 = scmp.lt.s32.totalorder %s29, 1
        %s384 = scalar_select %p383, %s29, 1
        %s385 = smul.addr %s384, 2
        %s386 = scalar_lea.vmem %s0, %s385
        %p387 = pneg %p50
        %p388 = pneg %p47
        %p389 = scmp.lt.s32.totalorder %s29, 1
        %s390 = scalar_select %p389, %s29, 1
        %s391 = smul.addr %s390, 2
        %s392 = scalar_lea.vmem %s1, %s391
        %p393 = pneg %p76
        %p394 = pneg %p73
        %p395 = scmp.lt.s32.totalorder %s29, 1
        %s396 = scalar_select %p395, %s29, 1
        %s397 = smul.addr %s396, 4
        %s398 = scalar_lea.vmem %s2, %s397
        %p399 = pneg %p102
        %p400 = pneg %p99
        %s401 = sand.u32 %s115, 1
        %s402 = scalar_lea.sflag [#allocation5], %s401
        %s403 = sand.u32 %s115, 1
        %s404 = smul.addr %s403, 64
        %s405 = scalar_lea.vmem [#allocation4], %s404
        %p406 = pneg %p128
        %p407 = pneg %p125
        %s408 = sand.u32 %s141, 1
        %s409 = scalar_lea.sflag [#allocation8], %s408
        %s410 = sand.u32 %s141, 1
        %s411 = smul.addr %s410, 64
        %s412 = scalar_lea.vmem [#allocation7], %s411
        %p413 = pneg %p154
        %p414 = pneg %p151
        %p415 = pneg %p175
        %p416 = pneg %p172
        %p417 = pneg %p196
        %p418 = pneg %p193
        %p419 = pneg %p217
        %p420 = pneg %p214
        %p421 = pneg %p238
        %p422 = pneg %p235
        %p423 = pneg %p264
        %p424 = pneg %p261
        %s425 = sand.u32 %s251, 1
        %s426 = scalar_lea.sflag [#allocation6], %s425
        %s427 = sand.u32 %s251, 1
        %s428 = smul.addr %s427, 64
        %s429 = scalar_lea.vmem [#allocation9], %s428
        %p430 = scmp.lt.s32.totalorder %s29, 1
        %s431 = scalar_select %p430, %s29, 1
        %s432 = smul.addr %s431, 2
        %s433 = scalar_lea.vmem %s0, %s432
        %p434 = scmp.lt.s32.totalorder %s29, 1
        %s435 = scalar_select %p434, %s29, 1
        %s436 = smul.addr %s435, 2
        %s437 = scalar_lea.vmem %s1, %s436
        %p438 = scmp.lt.s32.totalorder %s29, 1
        %s439 = scalar_select %p438, %s29, 1
        %s440 = smul.addr %s439, 4
        %s441 = scalar_lea.vmem %s2, %s440
        %vm443 = vcmask 261120
        %444 = vst.msk [vmem:[#allocation2] sm:$0xff] %vm443, 0.0
        %vm445 = vcmask 254976
        %446 = vst.msk [vmem:[#allocation2 + $0x8] sm:$0x3] %vm445, 0.0
        %s447 = scalar_lea.vmem [#allocation2], 144
        %448 = vst.msk [vmem:[%s447] sm:$0xff] %vm443, 0.0
        %449 = vst.msk [vmem:[%s447 + $0x8] sm:$0x3] %vm445, 0.0
        %vm450 = vcmask 253952
        %451 = vst.msk [vmem:[#allocation2] sm:$0x1] %vm450, 0.0
        %452 = vst.msk [vmem:[#allocation2 + $0x10] sm:$0x1] %vm450, 0.0
        %453 = vst.msk [vmem:[#allocation2 + $0x20] sm:$0x1] %vm450, 0.0
        %454 = vst.msk [vmem:[#allocation2 + $0x30] sm:$0x1] %vm450, 0.0
        %455 = vst.msk [vmem:[#allocation2 + $0x40] sm:$0x1] %vm450, 0.0
        %456 = vst.msk [vmem:[#allocation2 + $0x50] sm:$0x1] %vm450, 0.0
        %457 = vst.msk [vmem:[#allocation2 + $0x60] sm:$0x1] %vm450, 0.0
        %458 = vst.msk [vmem:[#allocation2 + $0x70] sm:$0x1] %vm450, 0.0
        %459 = vst.msk [vmem:[#allocation2 + $0x80] sm:$0x1] %vm450, 0.0
        %460 = vst.msk [vmem:[#allocation2 + $0x90] sm:$0x1] %vm450, 0.0
        %461 = vst.msk [vmem:[#allocation2 + $0x9] sm:$0x1] %vm450, 0.0
        %462 = vst.msk [vmem:[#allocation2 + $0x19] sm:$0x1] %vm450, 0.0
        %463 = vst.msk [vmem:[#allocation2 + $0x29] sm:$0x1] %vm450, 0.0
        %464 = vst.msk [vmem:[#allocation2 + $0x39] sm:$0x1] %vm450, 0.0
        %465 = vst.msk [vmem:[#allocation2 + $0x49] sm:$0x1] %vm450, 0.0
        %466 = vst.msk [vmem:[#allocation2 + $0x59] sm:$0x1] %vm450, 0.0
        %467 = vst.msk [vmem:[#allocation2 + $0x69] sm:$0x1] %vm450, 0.0
        %468 = vst.msk [vmem:[#allocation2 + $0x79] sm:$0x1] %vm450, 0.0
        %469 = vst.msk [vmem:[#allocation2 + $0x89] sm:$0x1] %vm450, 0.0
        %470 = vst.msk [vmem:[#allocation2 + $0x99] sm:$0x1] %vm450, 0.0
        %vm471 = vcmask 130048
        %472 = vst.msk [vmem:[#allocation3] sm:$0xff] %vm471, 0.0
        %vm473 = vcmask 123904
        %474 = vst.msk [vmem:[#allocation3 + $0x8] sm:$0x3] %vm473, 0.0
        %s475 = scalar_lea.vmem [#allocation3], 144
        %476 = vst.msk [vmem:[%s475] sm:$0xff] %vm471, 0.0
        %477 = vst.msk [vmem:[%s475 + $0x8] sm:$0x3] %vm473, 0.0
        %vm478 = vcmask 122880
        %479 = vst.msk [vmem:[#allocation3] sm:$0x1] %vm478, 0.0
        %480 = vst.msk [vmem:[#allocation3 + $0x10] sm:$0x1] %vm478, 0.0
        %481 = vst.msk [vmem:[#allocation3 + $0x20] sm:$0x1] %vm478, 0.0
        %482 = vst.msk [vmem:[#allocation3 + $0x30] sm:$0x1] %vm478, 0.0
        %483 = vst.msk [vmem:[#allocation3 + $0x40] sm:$0x1] %vm478, 0.0
        %484 = vst.msk [vmem:[#allocation3 + $0x50] sm:$0x1] %vm478, 0.0
        %485 = vst.msk [vmem:[#allocation3 + $0x60] sm:$0x1] %vm478, 0.0
        %486 = vst.msk [vmem:[#allocation3 + $0x70] sm:$0x1] %vm478, 0.0
        %487 = vst.msk [vmem:[#allocation3 + $0x80] sm:$0x1] %vm478, 0.0
        %488 = vst.msk [vmem:[#allocation3 + $0x90] sm:$0x1] %vm478, 0.0
        %489 = vst.msk [vmem:[#allocation3 + $0x9] sm:$0x1] %vm478, 0.0
        %490 = vst.msk [vmem:[#allocation3 + $0x19] sm:$0x1] %vm478, 0.0
        %491 = vst.msk [vmem:[#allocation3 + $0x29] sm:$0x1] %vm478, 0.0
        %492 = vst.msk [vmem:[#allocation3 + $0x39] sm:$0x1] %vm478, 0.0
        %493 = vst.msk [vmem:[#allocation3 + $0x49] sm:$0x1] %vm478, 0.0
        %494 = vst.msk [vmem:[#allocation3 + $0x59] sm:$0x1] %vm478, 0.0
        %495 = vst.msk [vmem:[#allocation3 + $0x69] sm:$0x1] %vm478, 0.0
        %496 = vst.msk [vmem:[#allocation3 + $0x79] sm:$0x1] %vm478, 0.0
        %497 = vst.msk [vmem:[#allocation3 + $0x89] sm:$0x1] %vm478, 0.0
        %498 = vst.msk [vmem:[#allocation3 + $0x99] sm:$0x1] %vm478, 0.0
        %v499 = vld [vmem:[%s433] sm:$0x3]
        %v500 = vld [vmem:[%s369] sm:$0xff]
        %v501 = vld [vmem:[%s369 + $0x8] sm:$0xff]
        %v502 = vld [vmem:[%s369 + $0x10] sm:$0xff]
        %v503 = vld [vmem:[%s369 + $0x18] sm:$0xff]
        %v504 = vld [vmem:[%s369 + $0x20] sm:$0xff]
        %v505 = vld [vmem:[%s369 + $0x28] sm:$0xff]
        %v506 = vld [vmem:[%s369 + $0x30] sm:$0xff]
        %v507 = vld [vmem:[%s369 + $0x38] sm:$0xff]
        %v508 = vlaneseq
        %v509 = vshrl.u32 %v508, 7
        %v510 = vsub.s32 0, %v509
        %v511 = vrot.slane %v499, %v510
        %v512 = vmul.f32 %v500, %v511
        %v513 = vmul.f32 %v501, %v511
        %v514 = vmul.f32 %v502, %v511
        %v515 = vmul.f32 %v503, %v511
        %v516 = vmul.f32 %v504, %v511
        %v517 = vmul.f32 %v505, %v511
        %v518 = vmul.f32 %v506, %v511
        %v519 = vmul.f32 %v507, %v511
        %v520 = vlaneseq
        %v521 = vshrl.u32 %v520, 7
        %v522 = vsub.s32 1, %v521
        %v523 = vrot.slane %v499, %v522
        %v524 = vadd.f32 %v512, %v523
        %v525 = vadd.f32 %v513, %v523
        %v526 = vadd.f32 %v514, %v523
        %v527 = vadd.f32 %v515, %v523
        %v528 = vadd.f32 %v516, %v523
        %v529 = vadd.f32 %v517, %v523
        %v530 = vadd.f32 %v518, %v523
        %v531 = vadd.f32 %v519, %v523
        %vm532 = vcmp.ge.f32.partialorder %v524, 0.0
        %vm533 = vcmp.ge.f32.partialorder %v525, 0.0
        %vm534 = vcmp.ge.f32.partialorder %v526, 0.0
        %vm535 = vcmp.ge.f32.partialorder %v527, 0.0
        %vm536 = vcmp.ge.f32.partialorder %v528, 0.0
        %vm537 = vcmp.ge.f32.partialorder %v529, 0.0
        %vm538 = vcmp.ge.f32.partialorder %v530, 0.0
        %vm539 = vcmp.ge.f32.partialorder %v531, 0.0
        %v540 = vmul.f32 %v524, 0.01
        %v541 = vmul.f32 %v525, 0.01
        %v542 = vmul.f32 %v526, 0.01
        %v543 = vmul.f32 %v527, 0.01
        %v544 = vmul.f32 %v528, 0.01
        %v545 = vmul.f32 %v529, 0.01
        %v546 = vmul.f32 %v530, 0.01
        %v547 = vmul.f32 %v531, 0.01
        %v548 = vsel %vm532, %v524, %v540
        %v549 = vsel %vm533, %v525, %v541
        %v550 = vsel %vm534, %v526, %v542
        %v551 = vsel %vm535, %v527, %v543
        %v552 = vsel %vm536, %v528, %v544
        %v553 = vsel %vm537, %v529, %v545
        %v554 = vsel %vm538, %v530, %v546
        %v555 = vsel %vm539, %v531, %v547
        %v556 = vpack.c.bf16 %v549, %v548
        %v557 = vpack.c.bf16 %v551, %v550
        %v558 = vpack.c.bf16 %v553, %v552
        %v559 = vpack.c.bf16 %v555, %v554
        %v560 = vld [vmem:[%s5] sm:$0xf]
        %vm561 = vcmask 64512
        %v563 = vsel %vm561, %v556, 0
        %v566 = vsel %vm561, %v557, 0
        %v569 = vsel %vm561, %v558, 0
        %v572 = vsel %vm561, %v559, 0
        %vm574 = vcmask 1043456
        %v576 = vsel %vm574, %v560, 0
        %578 = vmatprep.subr.bf16.mxu0 0
        %579 = vmatpush1.bf16.msra.mxu0 %v576
        %580 = vmatprep.subr.bf16.mxu0 0
        %581 = vmatpush1.bf16.msra.mxu0 0
        %582 = vmatprep.subr.bf16.mxu0 0
        %583 = vmatpush1.bf16.msra.mxu0 0
        %584 = vmatprep.subr.bf16.mxu0 0
        %585 = vmatpush1.bf16.msra.mxu0 0
        %586 = vmatprep.subr.bf16.mxu0 0
        %587 = vmatpush1.bf16.msra.mxu0 0
        %588 = vmatprep.subr.bf16.mxu0 0
        %589 = vmatpush1.bf16.msra.mxu0 0
        %590 = vmatprep.subr.bf16.mxu0 0
        %591 = vmatpush1.bf16.msra.mxu0 0
        %592 = vmatprep.subr.bf16.mxu0 0
        %593 = vmatpush1.bf16.msra.mxu0 0
        %594 = vmatprep.subr.bf16.mxu0 0
        %595 = vmatpush1.bf16.msra.mxu0 0
        %596 = vmatprep.subr.bf16.mxu0 0
        %597 = vmatpush1.bf16.msra.mxu0 0
        %598 = vmatprep.subr.bf16.mxu0 0
        %599 = vmatpush1.bf16.msra.mxu0 0
        %600 = vmatprep.subr.bf16.mxu0 0
        %601 = vmatpush1.bf16.msra.mxu0 0
        %602 = vmatprep.subr.bf16.mxu0 0
        %603 = vmatpush1.bf16.msra.mxu0 0
        %604 = vmatprep.subr.bf16.mxu0 0
        %605 = vmatpush1.bf16.msra.mxu0 0
        %606 = vmatprep.subr.bf16.mxu0 0
        %607 = vmatpush1.bf16.msra.mxu0 0
        %608 = vmatprep.subr.bf16.mxu0 0
        %609 = vmatpush1.bf16.msra.mxu0 0
        %610 = vmatprep.mubr.bf16.mxu0 0
        %611 = vmatmul.mubr.bf16.gmra.mrb[0].mxu0 %v563
        %v612 = vpop.f32.mrb[0].mxu0
        %v613 = vadd.f32 0.0, %v612
        %v614 = vpop.f32.mrb[0].mxu0
        %v615 = vpop.f32.mrb[0].mxu0
        %v616 = vadd.f32 0.0, %v615
        %v617 = vpop.f32.mrb[0].mxu0
        %618 = vmatprep.mubr.bf16.mxu0 0
        %619 = vmatmul.mubr.bf16.gmra.mrb[0].mxu0 %v566
        %v620 = vpop.f32.mrb[0].mxu0
        %v621 = vadd.f32 0.0, %v620
        %v622 = vpop.f32.mrb[0].mxu0
        %v623 = vpop.f32.mrb[0].mxu0
        %v624 = vadd.f32 0.0, %v623
        %v625 = vpop.f32.mrb[0].mxu0
        %626 = vmatprep.mubr.bf16.mxu0 0
        %627 = vmatmul.mubr.bf16.gmra.mrb[0].mxu0 %v569
        %v628 = vpop.f32.mrb[0].mxu0
        %v629 = vadd.f32 0.0, %v628
        %v630 = vpop.f32.mrb[0].mxu0
        %v631 = vpop.f32.mrb[0].mxu0
        %v632 = vadd.f32 0.0, %v631
        %v633 = vpop.f32.mrb[0].mxu0
        %634 = vmatprep.mubr.bf16.mxu0 0
        %635 = vmatmul.mubr.bf16.gmra.mrb[0].mxu0 %v572
        %v636 = vpop.f32.mrb[0].mxu0
        %v637 = vadd.f32 0.0, %v636
        %v638 = vpop.f32.mrb[0].mxu0
        %v639 = vpop.f32.mrb[0].mxu0
        %v640 = vadd.f32 0.0, %v639
        %v641 = vpop.f32.mrb[0].mxu0
        %642 = vdwg.mxu0
        %v643 = vld [vmem:[%s378] sm:$0xff]
        %v644 = vld [vmem:[%s378 + $0x8] sm:$0xff]
        %v645 = vld [vmem:[%s378 + $0x10] sm:$0xff]
        %v646 = vld [vmem:[%s378 + $0x18] sm:$0xff]
        %v647 = vld [vmem:[%s378 + $0x20] sm:$0xff]
        %v648 = vld [vmem:[%s378 + $0x28] sm:$0xff]
        %v649 = vld [vmem:[%s378 + $0x30] sm:$0xff]
        %v650 = vld [vmem:[%s378 + $0x38] sm:$0xff]
        %659 = vrot.lane.b32.xlu0 %v643, 4
        %v660 = vpop.permute.xlu0 %659
        %661 = vrot.lane.b32.xlu0 %v644, 4
        %v662 = vpop.permute.xlu0 %661
        %663 = vrot.lane.b32.xlu0 %v645, 4
        %v664 = vpop.permute.xlu0 %663
        %665 = vrot.lane.b32.xlu0 %v646, 4
        %v666 = vpop.permute.xlu0 %665
        %667 = vrot.lane.b32.xlu0 %v647, 4
        %v668 = vpop.permute.xlu0 %667
        %669 = vrot.lane.b32.xlu0 %v648, 4
        %v670 = vpop.permute.xlu0 %669
        %671 = vrot.lane.b32.xlu0 %v649, 4
        %v672 = vpop.permute.xlu0 %671
        %673 = vrot.lane.b32.xlu0 %v650, 4
        %v674 = vpop.permute.xlu0 %673
        %691 = vrot.lane.b32.xlu0 %v613, 4
        %v692 = vpop.permute.xlu0 %691
        %693 = vrot.lane.b32.xlu0 %v616, 4
        %v694 = vpop.permute.xlu0 %693
        %695 = vrot.lane.b32.xlu0 %v621, 4
        %v696 = vpop.permute.xlu0 %695
        %697 = vrot.lane.b32.xlu0 %v624, 4
        %v698 = vpop.permute.xlu0 %697
        %699 = vrot.lane.b32.xlu0 %v629, 4
        %v700 = vpop.permute.xlu0 %699
        %701 = vrot.lane.b32.xlu0 %v632, 4
        %v702 = vpop.permute.xlu0 %701
        %703 = vrot.lane.b32.xlu0 %v637, 4
        %v704 = vpop.permute.xlu0 %703
        %705 = vrot.lane.b32.xlu0 %v640, 4
        %v706 = vpop.permute.xlu0 %705
        %715 = vrot.lane.b32.xlu0 %v643, 8
        %v716 = vpop.permute.xlu0 %715
        %717 = vrot.lane.b32.xlu0 %v644, 8
        %v718 = vpop.permute.xlu0 %717
        %719 = vrot.lane.b32.xlu0 %v645, 8
        %v720 = vpop.permute.xlu0 %719
        %721 = vrot.lane.b32.xlu0 %v646, 8
        %v722 = vpop.permute.xlu0 %721
        %723 = vrot.lane.b32.xlu0 %v647, 8
        %v724 = vpop.permute.xlu0 %723
        %725 = vrot.lane.b32.xlu0 %v648, 8
        %v726 = vpop.permute.xlu0 %725
        %727 = vrot.lane.b32.xlu0 %v649, 8
        %v728 = vpop.permute.xlu0 %727
        %729 = vrot.lane.b32.xlu0 %v650, 8
        %v730 = vpop.permute.xlu0 %729
        %739 = vrot.lane.b32.xlu0 %v613, 8
        %v740 = vpop.permute.xlu0 %739
        %741 = vrot.lane.b32.xlu0 %v616, 8
        %v742 = vpop.permute.xlu0 %741
        %743 = vrot.lane.b32.xlu0 %v621, 8
        %v744 = vpop.permute.xlu0 %743
        %745 = vrot.lane.b32.xlu0 %v624, 8
        %v746 = vpop.permute.xlu0 %745
        %747 = vrot.lane.b32.xlu0 %v629, 8
        %v748 = vpop.permute.xlu0 %747
        %749 = vrot.lane.b32.xlu0 %v632, 8
        %v750 = vpop.permute.xlu0 %749
        %751 = vrot.lane.b32.xlu0 %v637, 8
        %v752 = vpop.permute.xlu0 %751
        %753 = vrot.lane.b32.xlu0 %v640, 8
        %v754 = vpop.permute.xlu0 %753
        %763 = vrot.lane.b32.xlu0 %v643, 12
        %v764 = vpop.permute.xlu0 %763
        %765 = vrot.lane.b32.xlu0 %v644, 12
        %v766 = vpop.permute.xlu0 %765
        %767 = vrot.lane.b32.xlu0 %v645, 12
        %v768 = vpop.permute.xlu0 %767
        %769 = vrot.lane.b32.xlu0 %v646, 12
        %v770 = vpop.permute.xlu0 %769
        %771 = vrot.lane.b32.xlu0 %v647, 12
        %v772 = vpop.permute.xlu0 %771
        %773 = vrot.lane.b32.xlu0 %v648, 12
        %v774 = vpop.permute.xlu0 %773
        %775 = vrot.lane.b32.xlu0 %v649, 12
        %v776 = vpop.permute.xlu0 %775
        %777 = vrot.lane.b32.xlu0 %v650, 12
        %v778 = vpop.permute.xlu0 %777
        %787 = vrot.lane.b32.xlu0 %v613, 12
        %v788 = vpop.permute.xlu0 %787
        %789 = vrot.lane.b32.xlu0 %v616, 12
        %v790 = vpop.permute.xlu0 %789
        %791 = vrot.lane.b32.xlu0 %v621, 12
        %v792 = vpop.permute.xlu0 %791
        %793 = vrot.lane.b32.xlu0 %v624, 12
        %v794 = vpop.permute.xlu0 %793
        %795 = vrot.lane.b32.xlu0 %v629, 12
        %v796 = vpop.permute.xlu0 %795
        %797 = vrot.lane.b32.xlu0 %v632, 12
        %v798 = vpop.permute.xlu0 %797
        %799 = vrot.lane.b32.xlu0 %v637, 12
        %v800 = vpop.permute.xlu0 %799
        %801 = vrot.lane.b32.xlu0 %v640, 12
        %v802 = vpop.permute.xlu0 %801
        %811 = vrot.lane.b32.xlu0 %v643, 16
        %v812 = vpop.permute.xlu0 %811
        %813 = vrot.lane.b32.xlu0 %v644, 16
        %v814 = vpop.permute.xlu0 %813
        %815 = vrot.lane.b32.xlu0 %v645, 16
        %v816 = vpop.permute.xlu0 %815
        %817 = vrot.lane.b32.xlu0 %v646, 16
        %v818 = vpop.permute.xlu0 %817
        %819 = vrot.lane.b32.xlu0 %v647, 16
        %v820 = vpop.permute.xlu0 %819
        %821 = vrot.lane.b32.xlu0 %v648, 16
        %v822 = vpop.permute.xlu0 %821
        %823 = vrot.lane.b32.xlu0 %v649, 16
        %v824 = vpop.permute.xlu0 %823
        %825 = vrot.lane.b32.xlu0 %v650, 16
        %v826 = vpop.permute.xlu0 %825
        %vm835 = vcmask 31744
        %v836 = vsel %vm835, %v613, %v660
        %v837 = vsel %vm835, %v616, %v662
        %v838 = vsel %vm835, %v621, %v664
        %v839 = vsel %vm835, %v624, %v666
        %v840 = vsel %vm835, %v629, %v668
        %v841 = vsel %vm835, %v632, %v670
        %v842 = vsel %vm835, %v637, %v672
        %v843 = vsel %vm835, %v640, %v674
        %v844 = vsel %vm561, %v836, %v692
        %v845 = vsel %vm561, %v837, %v694
        %v846 = vsel %vm561, %v838, %v696
        %v847 = vsel %vm561, %v839, %v698
        %v848 = vsel %vm561, %v840, %v700
        %v849 = vsel %vm561, %v841, %v702
        %v850 = vsel %vm561, %v842, %v704
        %v851 = vsel %vm561, %v843, %v706
        %vm852 = vcmask 97280
        %v853 = vsel %vm852, %v844, %v716
        %v854 = vsel %vm852, %v845, %v718
        %v855 = vsel %vm852, %v846, %v720
        %v856 = vsel %vm852, %v847, %v722
        %v857 = vsel %vm852, %v848, %v724
        %v858 = vsel %vm852, %v849, %v726
        %v859 = vsel %vm852, %v850, %v728
        %v860 = vsel %vm852, %v851, %v730
        %v861 = vsel %vm471, %v853, %v740
        %v862 = vsel %vm471, %v854, %v742
        %v863 = vsel %vm471, %v855, %v744
        %v864 = vsel %vm471, %v856, %v746
        %v865 = vsel %vm471, %v857, %v748
        %v866 = vsel %vm471, %v858, %v750
        %v867 = vsel %vm471, %v859, %v752
        %v868 = vsel %vm471, %v860, %v754
        %vm869 = vcmask 162816
        %v870 = vsel %vm869, %v861, %v764
        %v871 = vsel %vm869, %v862, %v766
        %v872 = vsel %vm869, %v863, %v768
        %v873 = vsel %vm869, %v864, %v770
        %v874 = vsel %vm869, %v865, %v772
        %v875 = vsel %vm869, %v866, %v774
        %v876 = vsel %vm869, %v867, %v776
        %v877 = vsel %vm869, %v868, %v778
        %vm878 = vcmask 195584
        %v879 = vsel %vm878, %v870, %v788
        %v880 = vsel %vm878, %v871, %v790
        %v881 = vsel %vm878, %v872, %v792
        %v882 = vsel %vm878, %v873, %v794
        %v883 = vsel %vm878, %v874, %v796
        %v884 = vsel %vm878, %v875, %v798
        %v885 = vsel %vm878, %v876, %v800
        %v886 = vsel %vm878, %v877, %v802
        %vm887 = vcmask 228352
        %v888 = vsel %vm887, %v879, %v812
        %v889 = vsel %vm887, %v880, %v814
        %v890 = vsel %vm887, %v881, %v816
        %v891 = vsel %vm887, %v882, %v818
        %v892 = vsel %vm887, %v883, %v820
        %v893 = vsel %vm887, %v884, %v822
        %v894 = vsel %vm887, %v885, %v824
        %v895 = vsel %vm887, %v886, %v826
        %v896 = vld [vmem:[%s8] sm:$0xf]
        %v897 = vpack.c.bf16 %v889, %v888
        %v898 = vpack.c.bf16 %v891, %v890
        %v899 = vpack.c.bf16 %v893, %v892
        %v900 = vpack.c.bf16 %v895, %v894
        %v902 = vsel %vm561, %v897, 0
        %v905 = vsel %vm561, %v898, 0
        %v908 = vsel %vm561, %v899, 0
        %v911 = vsel %vm561, %v900, 0
        %v914 = vsel %vm574, %v896, 0
        %916 = vmatprep.subr.bf16.mxu0 0
        %917 = vmatpush1.bf16.msra.mxu0 %v914
        %918 = vmatprep.subr.bf16.mxu0 0
        %919 = vmatpush1.bf16.msra.mxu0 0
        %920 = vmatprep.subr.bf16.mxu0 0
        %921 = vmatpush1.bf16.msra.mxu0 0
        %922 = vmatprep.subr.bf16.mxu0 0
        %923 = vmatpush1.bf16.msra.mxu0 0
        %924 = vmatprep.subr.bf16.mxu0 0
        %925 = vmatpush1.bf16.msra.mxu0 0
        %926 = vmatprep.subr.bf16.mxu0 0
        %927 = vmatpush1.bf16.msra.mxu0 0
        %928 = vmatprep.subr.bf16.mxu0 0
        %929 = vmatpush1.bf16.msra.mxu0 0
        %930 = vmatprep.subr.bf16.mxu0 0
        %931 = vmatpush1.bf16.msra.mxu0 0
        %932 = vmatprep.subr.bf16.mxu0 0
        %933 = vmatpush1.bf16.msra.mxu0 0
        %934 = vmatprep.subr.bf16.mxu0 0
        %935 = vmatpush1.bf16.msra.mxu0 0
        %936 = vmatprep.subr.bf16.mxu0 0
        %937 = vmatpush1.bf16.msra.mxu0 0
        %938 = vmatprep.subr.bf16.mxu0 0
        %939 = vmatpush1.bf16.msra.mxu0 0
        %940 = vmatprep.subr.bf16.mxu0 0
        %941 = vmatpush1.bf16.msra.mxu0 0
        %942 = vmatprep.subr.bf16.mxu0 0
        %943 = vmatpush1.bf16.msra.mxu0 0
        %944 = vmatprep.subr.bf16.mxu0 0
        %945 = vmatpush1.bf16.msra.mxu0 0
        %946 = vmatprep.subr.bf16.mxu0 0
        %947 = vmatpush1.bf16.msra.mxu0 0
        %948 = vmatprep.mubr.bf16.mxu0 0
        %949 = vmatmul.mubr.bf16.gmra.mrb[0].mxu0 %v902
        %v950 = vpop.f32.mrb[0].mxu0
        %v951 = vadd.f32 0.0, %v950
        %v952 = vpop.f32.mrb[0].mxu0
        %v953 = vpop.f32.mrb[0].mxu0
        %v954 = vadd.f32 0.0, %v953
        %v955 = vpop.f32.mrb[0].mxu0
        %956 = vmatprep.mubr.bf16.mxu0 0
        %957 = vmatmul.mubr.bf16.gmra.mrb[0].mxu0 %v905
        %v958 = vpop.f32.mrb[0].mxu0
        %v959 = vadd.f32 0.0, %v958
        %v960 = vpop.f32.mrb[0].mxu0
        %v961 = vpop.f32.mrb[0].mxu0
        %v962 = vadd.f32 0.0, %v961
        %v963 = vpop.f32.mrb[0].mxu0
        %964 = vmatprep.mubr.bf16.mxu0 0
        %965 = vmatmul.mubr.bf16.gmra.mrb[0].mxu0 %v908
        %v966 = vpop.f32.mrb[0].mxu0
        %v967 = vadd.f32 0.0, %v966
        %v968 = vpop.f32.mrb[0].mxu0
        %v969 = vpop.f32.mrb[0].mxu0
        %v970 = vadd.f32 0.0, %v969
        %v971 = vpop.f32.mrb[0].mxu0
        %972 = vmatprep.mubr.bf16.mxu0 0
        %973 = vmatmul.mubr.bf16.gmra.mrb[0].mxu0 %v911
        %v974 = vpop.f32.mrb[0].mxu0
        %v975 = vadd.f32 0.0, %v974
        %v976 = vpop.f32.mrb[0].mxu0
        %v977 = vpop.f32.mrb[0].mxu0
        %v978 = vadd.f32 0.0, %v977
        %v979 = vpop.f32.mrb[0].mxu0
        %980 = vdwg.mxu0
        %985 = vrot.lane.b32.xlu0 %v897, 120
        %v986 = vpop.permute.xlu0 %985
        %987 = vrot.lane.b32.xlu0 %v898, 120
        %v988 = vpop.permute.xlu0 %987
        %989 = vrot.lane.b32.xlu0 %v899, 120
        %v990 = vpop.permute.xlu0 %989
        %991 = vrot.lane.b32.xlu0 %v900, 120
        %v992 = vpop.permute.xlu0 %991
        %v994 = vsel %vm561, %v986, 0
        %v997 = vsel %vm561, %v988, 0
        %v1000 = vsel %vm561, %v990, 0
        %v1003 = vsel %vm561, %v992, 0
        %1005 = vmatprep.subr.bf16.mxu0 0
        %1006 = vmatpush1.bf16.msra.mxu0 %v914
        %1007 = vmatprep.subr.bf16.mxu0 0
        %1008 = vmatpush1.bf16.msra.mxu0 0
        %1009 = vmatprep.subr.bf16.mxu0 0
        %1010 = vmatpush1.bf16.msra.mxu0 0
        %1011 = vmatprep.subr.bf16.mxu0 0
        %1012 = vmatpush1.bf16.msra.mxu0 0
        %1013 = vmatprep.subr.bf16.mxu0 0
        %1014 = vmatpush1.bf16.msra.mxu0 0
        %1015 = vmatprep.subr.bf16.mxu0 0
        %1016 = vmatpush1.bf16.msra.mxu0 0
        %1017 = vmatprep.subr.bf16.mxu0 0
        %1018 = vmatpush1.bf16.msra.mxu0 0
        %1019 = vmatprep.subr.bf16.mxu0 0
        %1020 = vmatpush1.bf16.msra.mxu0 0
        %1021 = vmatprep.subr.bf16.mxu0 0
        %1022 = vmatpush1.bf16.msra.mxu0 0
        %1023 = vmatprep.subr.bf16.mxu0 0
        %1024 = vmatpush1.bf16.msra.mxu0 0
        %1025 = vmatprep.subr.bf16.mxu0 0
        %1026 = vmatpush1.bf16.msra.mxu0 0
        %1027 = vmatprep.subr.bf16.mxu0 0
        %1028 = vmatpush1.bf16.msra.mxu0 0
        %1029 = vmatprep.subr.bf16.mxu0 0
        %1030 = vmatpush1.bf16.msra.mxu0 0
        %1031 = vmatprep.subr.bf16.mxu0 0
        %1032 = vmatpush1.bf16.msra.mxu0 0
        %1033 = vmatprep.subr.bf16.mxu0 0
        %1034 = vmatpush1.bf16.msra.mxu0 0
        %1035 = vmatprep.subr.bf16.mxu0 0
        %1036 = vmatpush1.bf16.msra.mxu0 0
        %1037 = vmatprep.mubr.bf16.mxu0 0
        %1038 = vmatmul.mubr.bf16.gmra.mrb[0].mxu0 %v994
        %v1039 = vpop.f32.mrb[0].mxu0
        %v1040 = vadd.f32 0.0, %v1039
        %v1041 = vpop.f32.mrb[0].mxu0
        %v1042 = vpop.f32.mrb[0].mxu0
        %v1043 = vadd.f32 0.0, %v1042
        %v1044 = vpop.f32.mrb[0].mxu0
        %1045 = vmatprep.mubr.bf16.mxu0 0
        %1046 = vmatmul.mubr.bf16.gmra.mrb[0].mxu0 %v997
        %v1047 = vpop.f32.mrb[0].mxu0
        %v1048 = vadd.f32 0.0, %v1047
        %v1049 = vpop.f32.mrb[0].mxu0
        %v1050 = vpop.f32.mrb[0].mxu0
        %v1051 = vadd.f32 0.0, %v1050
        %v1052 = vpop.f32.mrb[0].mxu0
        %1053 = vmatprep.mubr.bf16.mxu0 0
        %1054 = vmatmul.mubr.bf16.gmra.mrb[0].mxu0 %v1000
        %v1055 = vpop.f32.mrb[0].mxu0
        %v1056 = vadd.f32 0.0, %v1055
        %v1057 = vpop.f32.mrb[0].mxu0
        %v1058 = vpop.f32.mrb[0].mxu0
        %v1059 = vadd.f32 0.0, %v1058
        %v1060 = vpop.f32.mrb[0].mxu0
        %1061 = vmatprep.mubr.bf16.mxu0 0
        %1062 = vmatmul.mubr.bf16.gmra.mrb[0].mxu0 %v1003
        %v1063 = vpop.f32.mrb[0].mxu0
        %v1064 = vadd.f32 0.0, %v1063
        %v1065 = vpop.f32.mrb[0].mxu0
        %v1066 = vpop.f32.mrb[0].mxu0
        %v1067 = vadd.f32 0.0, %v1066
        %v1068 = vpop.f32.mrb[0].mxu0
        %1069 = vdwg.mxu0
        %1070 = vrot.lane.b32.xlu0 %v897, 112
        %v1071 = vpop.permute.xlu0 %1070
        %1072 = vrot.lane.b32.xlu0 %v898, 112
        %v1073 = vpop.permute.xlu0 %1072
        %1074 = vrot.lane.b32.xlu0 %v899, 112
        %v1075 = vpop.permute.xlu0 %1074
        %1076 = vrot.lane.b32.xlu0 %v900, 112
        %v1077 = vpop.permute.xlu0 %1076
        %v1079 = vsel %vm561, %v1071, 0
        %v1082 = vsel %vm561, %v1073, 0
        %v1085 = vsel %vm561, %v1075, 0
        %v1088 = vsel %vm561, %v1077, 0
        %1090 = vmatprep.subr.bf16.mxu0 0
        %1091 = vmatpush1.bf16.msra.mxu0 %v914
        %1092 = vmatprep.subr.bf16.mxu0 0
        %1093 = vmatpush1.bf16.msra.mxu0 0
        %1094 = vmatprep.subr.bf16.mxu0 0
        %1095 = vmatpush1.bf16.msra.mxu0 0
        %1096 = vmatprep.subr.bf16.mxu0 0
        %1097 = vmatpush1.bf16.msra.mxu0 0
        %1098 = vmatprep.subr.bf16.mxu0 0
        %1099 = vmatpush1.bf16.msra.mxu0 0
        %1100 = vmatprep.subr.bf16.mxu0 0
        %1101 = vmatpush1.bf16.msra.mxu0 0
        %1102 = vmatprep.subr.bf16.mxu0 0
        %1103 = vmatpush1.bf16.msra.mxu0 0
        %1104 = vmatprep.subr.bf16.mxu0 0
        %1105 = vmatpush1.bf16.msra.mxu0 0
        %1106 = vmatprep.subr.bf16.mxu0 0
        %1107 = vmatpush1.bf16.msra.mxu0 0
        %1108 = vmatprep.subr.bf16.mxu0 0
        %1109 = vmatpush1.bf16.msra.mxu0 0
        %1110 = vmatprep.subr.bf16.mxu0 0
        %1111 = vmatpush1.bf16.msra.mxu0 0
        %1112 = vmatprep.subr.bf16.mxu0 0
        %1113 = vmatpush1.bf16.msra.mxu0 0
        %1114 = vmatprep.subr.bf16.mxu0 0
        %1115 = vmatpush1.bf16.msra.mxu0 0
        %1116 = vmatprep.subr.bf16.mxu0 0
        %1117 = vmatpush1.bf16.msra.mxu0 0
        %1118 = vmatprep.subr.bf16.mxu0 0
        %1119 = vmatpush1.bf16.msra.mxu0 0
        %1120 = vmatprep.subr.bf16.mxu0 0
        %1121 = vmatpush1.bf16.msra.mxu0 0
        %1122 = vmatprep.mubr.bf16.mxu0 0
        %1123 = vmatmul.mubr.bf16.gmra.mrb[0].mxu0 %v1079
        %v1124 = vpop.f32.mrb[0].mxu0
        %v1125 = vadd.f32 0.0, %v1124
        %v1126 = vpop.f32.mrb[0].mxu0
        %v1127 = vpop.f32.mrb[0].mxu0
        %v1128 = vadd.f32 0.0, %v1127
        %v1129 = vpop.f32.mrb[0].mxu0
        %1130 = vmatprep.mubr.bf16.mxu0 0
        %1131 = vmatmul.mubr.bf16.gmra.mrb[0].mxu0 %v1082
        %v1132 = vpop.f32.mrb[0].mxu0
        %v1133 = vadd.f32 0.0, %v1132
        %v1134 = vpop.f32.mrb[0].mxu0
        %v1135 = vpop.f32.mrb[0].mxu0
        %v1136 = vadd.f32 0.0, %v1135
        %v1137 = vpop.f32.mrb[0].mxu0
        %1138 = vmatprep.mubr.bf16.mxu0 0
        %1139 = vmatmul.mubr.bf16.gmra.mrb[0].mxu0 %v1085
        %v1140 = vpop.f32.mrb[0].mxu0
        %v1141 = vadd.f32 0.0, %v1140
        %v1142 = vpop.f32.mrb[0].mxu0
        %v1143 = vpop.f32.mrb[0].mxu0
        %v1144 = vadd.f32 0.0, %v1143
        %v1145 = vpop.f32.mrb[0].mxu0
        %1146 = vmatprep.mubr.bf16.mxu0 0
        %1147 = vmatmul.mubr.bf16.gmra.mrb[0].mxu0 %v1088
        %v1148 = vpop.f32.mrb[0].mxu0
        %v1149 = vadd.f32 0.0, %v1148
        %v1150 = vpop.f32.mrb[0].mxu0
        %v1151 = vpop.f32.mrb[0].mxu0
        %v1152 = vadd.f32 0.0, %v1151
        %v1153 = vpop.f32.mrb[0].mxu0
        %1154 = vdwg.mxu0
        %1155 = vrot.lane.b32.xlu0 %v897, 104
        %v1156 = vpop.permute.xlu0 %1155
        %1157 = vrot.lane.b32.xlu0 %v898, 104
        %v1158 = vpop.permute.xlu0 %1157
        %1159 = vrot.lane.b32.xlu0 %v899, 104
        %v1160 = vpop.permute.xlu0 %1159
        %1161 = vrot.lane.b32.xlu0 %v900, 104
        %v1162 = vpop.permute.xlu0 %1161
        %v1164 = vsel %vm561, %v1156, 0
        %v1167 = vsel %vm561, %v1158, 0
        %v1170 = vsel %vm561, %v1160, 0
        %v1173 = vsel %vm561, %v1162, 0
        %1175 = vmatprep.subr.bf16.mxu0 0
        %1176 = vmatpush1.bf16.msra.mxu0 %v914
        %1177 = vmatprep.subr.bf16.mxu0 0
        %1178 = vmatpush1.bf16.msra.mxu0 0
        %1179 = vmatprep.subr.bf16.mxu0 0
        %1180 = vmatpush1.bf16.msra.mxu0 0
        %1181 = vmatprep.subr.bf16.mxu0 0
        %1182 = vmatpush1.bf16.msra.mxu0 0
        %1183 = vmatprep.subr.bf16.mxu0 0
        %1184 = vmatpush1.bf16.msra.mxu0 0
        %1185 = vmatprep.subr.bf16.mxu0 0
        %1186 = vmatpush1.bf16.msra.mxu0 0
        %1187 = vmatprep.subr.bf16.mxu0 0
        %1188 = vmatpush1.bf16.msra.mxu0 0
        %1189 = vmatprep.subr.bf16.mxu0 0
        %1190 = vmatpush1.bf16.msra.mxu0 0
        %1191 = vmatprep.subr.bf16.mxu0 0
        %1192 = vmatpush1.bf16.msra.mxu0 0
        %1193 = vmatprep.subr.bf16.mxu0 0
        %1194 = vmatpush1.bf16.msra.mxu0 0
        %1195 = vmatprep.subr.bf16.mxu0 0
        %1196 = vmatpush1.bf16.msra.mxu0 0
        %1197 = vmatprep.subr.bf16.mxu0 0
        %1198 = vmatpush1.bf16.msra.mxu0 0
        %1199 = vmatprep.subr.bf16.mxu0 0
        %1200 = vmatpush1.bf16.msra.mxu0 0
        %1201 = vmatprep.subr.bf16.mxu0 0
        %1202 = vmatpush1.bf16.msra.mxu0 0
        %1203 = vmatprep.subr.bf16.mxu0 0
        %1204 = vmatpush1.bf16.msra.mxu0 0
        %1205 = vmatprep.subr.bf16.mxu0 0
        %1206 = vmatpush1.bf16.msra.mxu0 0
        %1207 = vmatprep.mubr.bf16.mxu0 0
        %1208 = vmatmul.mubr.bf16.gmra.mrb[0].mxu0 %v1164
        %v1209 = vpop.f32.mrb[0].mxu0
        %v1210 = vadd.f32 0.0, %v1209
        %v1211 = vpop.f32.mrb[0].mxu0
        %v1212 = vpop.f32.mrb[0].mxu0
        %v1213 = vadd.f32 0.0, %v1212
        %v1214 = vpop.f32.mrb[0].mxu0
        %1215 = vmatprep.mubr.bf16.mxu0 0
        %1216 = vmatmul.mubr.bf16.gmra.mrb[0].mxu0 %v1167
        %v1217 = vpop.f32.mrb[0].mxu0
        %v1218 = vadd.f32 0.0, %v1217
        %v1219 = vpop.f32.mrb[0].mxu0
        %v1220 = vpop.f32.mrb[0].mxu0
        %v1221 = vadd.f32 0.0, %v1220
        %v1222 = vpop.f32.mrb[0].mxu0
        %1223 = vmatprep.mubr.bf16.mxu0 0
        %1224 = vmatmul.mubr.bf16.gmra.mrb[0].mxu0 %v1170
        %v1225 = vpop.f32.mrb[0].mxu0
        %v1226 = vadd.f32 0.0, %v1225
        %v1227 = vpop.f32.mrb[0].mxu0
        %v1228 = vpop.f32.mrb[0].mxu0
        %v1229 = vadd.f32 0.0, %v1228
        %v1230 = vpop.f32.mrb[0].mxu0
        %1231 = vmatprep.mubr.bf16.mxu0 0
        %1232 = vmatmul.mubr.bf16.gmra.mrb[0].mxu0 %v1173
        %v1233 = vpop.f32.mrb[0].mxu0
        %v1234 = vadd.f32 0.0, %v1233
        %v1235 = vpop.f32.mrb[0].mxu0
        %v1236 = vpop.f32.mrb[0].mxu0
        %v1237 = vadd.f32 0.0, %v1236
        %v1238 = vpop.f32.mrb[0].mxu0
        %1239 = vdwg.mxu0
        %1248 = vrot.lane.b32.xlu0 %v1040, 4
        %v1249 = vpop.permute.xlu0 %1248
        %1250 = vrot.lane.b32.xlu0 %v1043, 4
        %v1251 = vpop.permute.xlu0 %1250
        %1252 = vrot.lane.b32.xlu0 %v1048, 4
        %v1253 = vpop.permute.xlu0 %1252
        %1254 = vrot.lane.b32.xlu0 %v1051, 4
        %v1255 = vpop.permute.xlu0 %1254
        %1256 = vrot.lane.b32.xlu0 %v1056, 4
        %v1257 = vpop.permute.xlu0 %1256
        %1258 = vrot.lane.b32.xlu0 %v1059, 4
        %v1259 = vpop.permute.xlu0 %1258
        %1260 = vrot.lane.b32.xlu0 %v1064, 4
        %v1261 = vpop.permute.xlu0 %1260
        %1262 = vrot.lane.b32.xlu0 %v1067, 4
        %v1263 = vpop.permute.xlu0 %1262
        %1280 = vrot.lane.b32.xlu0 %v1125, 8
        %v1281 = vpop.permute.xlu0 %1280
        %1282 = vrot.lane.b32.xlu0 %v1128, 8
        %v1283 = vpop.permute.xlu0 %1282
        %1284 = vrot.lane.b32.xlu0 %v1133, 8
        %v1285 = vpop.permute.xlu0 %1284
        %1286 = vrot.lane.b32.xlu0 %v1136, 8
        %v1287 = vpop.permute.xlu0 %1286
        %1288 = vrot.lane.b32.xlu0 %v1141, 8
        %v1289 = vpop.permute.xlu0 %1288
        %1290 = vrot.lane.b32.xlu0 %v1144, 8
        %v1291 = vpop.permute.xlu0 %1290
        %1292 = vrot.lane.b32.xlu0 %v1149, 8
        %v1293 = vpop.permute.xlu0 %1292
        %1294 = vrot.lane.b32.xlu0 %v1152, 8
        %v1295 = vpop.permute.xlu0 %1294
        %1312 = vrot.lane.b32.xlu0 %v1210, 12
        %v1313 = vpop.permute.xlu0 %1312
        %1314 = vrot.lane.b32.xlu0 %v1213, 12
        %v1315 = vpop.permute.xlu0 %1314
        %1316 = vrot.lane.b32.xlu0 %v1218, 12
        %v1317 = vpop.permute.xlu0 %1316
        %1318 = vrot.lane.b32.xlu0 %v1221, 12
        %v1319 = vpop.permute.xlu0 %1318
        %1320 = vrot.lane.b32.xlu0 %v1226, 12
        %v1321 = vpop.permute.xlu0 %1320
        %1322 = vrot.lane.b32.xlu0 %v1229, 12
        %v1323 = vpop.permute.xlu0 %1322
        %1324 = vrot.lane.b32.xlu0 %v1234, 12
        %v1325 = vpop.permute.xlu0 %1324
        %1326 = vrot.lane.b32.xlu0 %v1237, 12
        %v1327 = vpop.permute.xlu0 %1326
        %v1336 = vsel %vm835, %v951, %v1249
        %v1337 = vsel %vm835, %v954, %v1251
        %v1338 = vsel %vm835, %v959, %v1253
        %v1339 = vsel %vm835, %v962, %v1255
        %v1340 = vsel %vm835, %v967, %v1257
        %v1341 = vsel %vm835, %v970, %v1259
        %v1342 = vsel %vm835, %v975, %v1261
        %v1343 = vsel %vm835, %v978, %v1263
        %v1344 = vsel %vm561, %v1336, %v1281
        %v1345 = vsel %vm561, %v1337, %v1283
        %v1346 = vsel %vm561, %v1338, %v1285
        %v1347 = vsel %vm561, %v1339, %v1287
        %v1348 = vsel %vm561, %v1340, %v1289
        %v1349 = vsel %vm561, %v1341, %v1291
        %v1350 = vsel %vm561, %v1342, %v1293
        %v1351 = vsel %vm561, %v1343, %v1295
        %v1352 = vsel %vm852, %v1344, %v1313
        %v1353 = vsel %vm852, %v1345, %v1315
        %v1354 = vsel %vm852, %v1346, %v1317
        %v1355 = vsel %vm852, %v1347, %v1319
        %v1356 = vsel %vm852, %v1348, %v1321
        %v1357 = vsel %vm852, %v1349, %v1323
        %v1358 = vsel %vm852, %v1350, %v1325
        %v1359 = vsel %vm852, %v1351, %v1327
        %v1360 = vld [vmem:[%s437] sm:$0x3]
        %v1361 = vlaneseq
        %v1362 = vshrl.u32 %v1361, 7
        %v1363 = vsub.s32 0, %v1362
        %v1364 = vrot.slane %v1360, %v1363
        %v1365 = vmul.f32 %v888, %v1364
        %v1366 = vmul.f32 %v889, %v1364
        %v1367 = vmul.f32 %v890, %v1364
        %v1368 = vmul.f32 %v891, %v1364
        %v1369 = vmul.f32 %v892, %v1364
        %v1370 = vmul.f32 %v893, %v1364
        %v1371 = vmul.f32 %v894, %v1364
        %v1372 = vmul.f32 %v895, %v1364
        %v1373 = vlaneseq
        %v1374 = vshrl.u32 %v1373, 7
        %v1375 = vsub.s32 1, %v1374
        %v1376 = vrot.slane %v1360, %v1375
        %v1377 = vadd.f32 %v1365, %v1376
        %v1378 = vadd.f32 %v1366, %v1376
        %v1379 = vadd.f32 %v1367, %v1376
        %v1380 = vadd.f32 %v1368, %v1376
        %v1381 = vadd.f32 %v1369, %v1376
        %v1382 = vadd.f32 %v1370, %v1376
        %v1383 = vadd.f32 %v1371, %v1376
        %v1384 = vadd.f32 %v1372, %v1376
        %vm1385 = vcmp.ge.f32.partialorder %v1377, 0.0
        %vm1386 = vcmp.ge.f32.partialorder %v1378, 0.0
        %vm1387 = vcmp.ge.f32.partialorder %v1379, 0.0
        %vm1388 = vcmp.ge.f32.partialorder %v1380, 0.0
        %vm1389 = vcmp.ge.f32.partialorder %v1381, 0.0
        %vm1390 = vcmp.ge.f32.partialorder %v1382, 0.0
        %vm1391 = vcmp.ge.f32.partialorder %v1383, 0.0
        %vm1392 = vcmp.ge.f32.partialorder %v1384, 0.0
        %v1393 = vmul.f32 %v1377, 0.01
        %v1394 = vmul.f32 %v1378, 0.01
        %v1395 = vmul.f32 %v1379, 0.01
        %v1396 = vmul.f32 %v1380, 0.01
        %v1397 = vmul.f32 %v1381, 0.01
        %v1398 = vmul.f32 %v1382, 0.01
        %v1399 = vmul.f32 %v1383, 0.01
        %v1400 = vmul.f32 %v1384, 0.01
        %v1401 = vsel %vm1385, %v1377, %v1393
        %v1402 = vsel %vm1386, %v1378, %v1394
        %v1403 = vsel %vm1387, %v1379, %v1395
        %v1404 = vsel %vm1388, %v1380, %v1396
        %v1405 = vsel %vm1389, %v1381, %v1397
        %v1406 = vsel %vm1390, %v1382, %v1398
        %v1407 = vsel %vm1391, %v1383, %v1399
        %v1408 = vsel %vm1392, %v1384, %v1400
        %s1409 = scalar_lea.vmem [#allocation2], 16
        %1410 = vst.msk [vmem:[%s1409 + $0x1] sm:$0xff] %vm443, %v1401
        %1411 = vst.msk [vmem:[%s1409 + $0x11] sm:$0xff] %vm443, %v1402
        %1412 = vst.msk [vmem:[%s1409 + $0x21] sm:$0xff] %vm443, %v1403
        %1413 = vst.msk [vmem:[%s1409 + $0x31] sm:$0xff] %vm443, %v1404
        %1414 = vst.msk [vmem:[%s1409 + $0x41] sm:$0xff] %vm443, %v1405
        %1415 = vst.msk [vmem:[%s1409 + $0x51] sm:$0xff] %vm443, %v1406
        %1416 = vst.msk [vmem:[%s1409 + $0x61] sm:$0xff] %vm443, %v1407
        %1417 = vst.msk [vmem:[%s1409 + $0x71] sm:$0xff] %vm443, %v1408
        %v1418 = vld [vmem:[%s6] sm:$0xf]
        %v1419 = vld [vmem:[%s6 + $0x4] sm:$0xf]
        %v1420 = vld [vmem:[%s6 + $0x8] sm:$0xf]
        %v1421 = vld [vmem:[%s6 + $0xc] sm:$0xf]
        %v1422 = vld [vmem:[%s6 + $0x10] sm:$0xf]
        %v1423 = vld [vmem:[%s6 + $0x14] sm:$0xf]
        %v1424 = vld [vmem:[%s6 + $0x18] sm:$0xf]
        %v1425 = vld [vmem:[%s6 + $0x1c] sm:$0xf]
        %v1426 = vld [vmem:[%s6 + $0x20] sm:$0xf]
        %v1427 = vld [vmem:[#allocation2] sm:$0xff]
        %v1428 = vld [vmem:[#allocation2 + $0x10] sm:$0xff]
        %v1429 = vld [vmem:[#allocation2 + $0x20] sm:$0xff]
        %v1430 = vld [vmem:[#allocation2 + $0x30] sm:$0xff]
        %v1431 = vld [vmem:[#allocation2 + $0x40] sm:$0xff]
        %v1432 = vld [vmem:[#allocation2 + $0x50] sm:$0xff]
        %v1433 = vld [vmem:[#allocation2 + $0x60] sm:$0xff]
        %v1434 = vld [vmem:[#allocation2 + $0x70] sm:$0xff]
        %v1435 = vld [vmem:[#allocation2 + $0x80] sm:$0xff]
        %v1436 = vld [vmem:[#allocation2 + $0x90] sm:$0xff]
        %v1437 = vpack.c.bf16 %v1427, %v1427
        %v1438 = vpack.c.bf16 %v1428, %v1428
        %v1439 = vpack.c.bf16 %v1429, %v1429
        %v1440 = vpack.c.bf16 %v1430, %v1430
        %v1441 = vpack.c.bf16 %v1431, %v1431
        %v1442 = vpack.c.bf16 %v1432, %v1432
        %v1443 = vpack.c.bf16 %v1433, %v1433
        %v1444 = vpack.c.bf16 %v1434, %v1434
        %v1445 = vpack.c.bf16 %v1435, %v1435
        %v1446 = vpack.c.bf16 %v1436, %v1436
        %v1447 = vld [vmem:[#allocation2 + $0x1] sm:$0xff]
        %v1448 = vld [vmem:[#allocation2 + $0x11] sm:$0xff]
        %v1449 = vld [vmem:[#allocation2 + $0x21] sm:$0xff]
        %v1450 = vld [vmem:[#allocation2 + $0x31] sm:$0xff]
        %v1451 = vld [vmem:[#allocation2 + $0x41] sm:$0xff]
        %v1452 = vld [vmem:[#allocation2 + $0x51] sm:$0xff]
        %v1453 = vld [vmem:[#allocation2 + $0x61] sm:$0xff]
        %v1454 = vld [vmem:[#allocation2 + $0x71] sm:$0xff]
        %v1455 = vld [vmem:[#allocation2 + $0x81] sm:$0xff]
        %v1456 = vld [vmem:[#allocation2 + $0x91] sm:$0xff]
        %v1457 = vpack.c.bf16 %v1447, %v1447
        %v1458 = vpack.c.bf16 %v1448, %v1448
        %v1459 = vpack.c.bf16 %v1449, %v1449
        %v1460 = vpack.c.bf16 %v1450, %v1450
        %v1461 = vpack.c.bf16 %v1451, %v1451
        %v1462 = vpack.c.bf16 %v1452, %v1452
        %v1463 = vpack.c.bf16 %v1453, %v1453
        %v1464 = vpack.c.bf16 %v1454, %v1454
        %v1465 = vpack.c.bf16 %v1455, %v1455
        %v1466 = vpack.c.bf16 %v1456, %v1456
        %v1467 = vld [vmem:[#allocation2 + $0x2] sm:$0xff]
        %v1468 = vld [vmem:[#allocation2 + $0x12] sm:$0xff]
        %v1469 = vld [vmem:[#allocation2 + $0x22] sm:$0xff]
        %v1470 = vld [vmem:[#allocation2 + $0x32] sm:$0xff]
        %v1471 = vld [vmem:[#allocation2 + $0x42] sm:$0xff]
        %v1472 = vld [vmem:[#allocation2 + $0x52] sm:$0xff]
        %v1473 = vld [vmem:[#allocation2 + $0x62] sm:$0xff]
        %v1474 = vld [vmem:[#allocation2 + $0x72] sm:$0xff]
        %v1475 = vld [vmem:[#allocation2 + $0x82] sm:$0xff]
        %v1476 = vld [vmem:[#allocation2 + $0x92] sm:$0xff]
        %v1477 = vpack.c.bf16 %v1467, %v1467
        %v1478 = vpack.c.bf16 %v1468, %v1468
        %v1479 = vpack.c.bf16 %v1469, %v1469
        %v1480 = vpack.c.bf16 %v1470, %v1470
        %v1481 = vpack.c.bf16 %v1471, %v1471
        %v1482 = vpack.c.bf16 %v1472, %v1472
        %v1483 = vpack.c.bf16 %v1473, %v1473
        %v1484 = vpack.c.bf16 %v1474, %v1474
        %v1485 = vpack.c.bf16 %v1475, %v1475
        %v1486 = vpack.c.bf16 %v1476, %v1476
        %1495 = vrot.lane.b32.xlu0 %v1437, 104
        %v1496 = vpop.permute.xlu0 %1495
        %1497 = vrot.lane.b32.xlu0 %v1438, 104
        %v1498 = vpop.permute.xlu0 %1497
        %1499 = vrot.lane.b32.xlu0 %v1439, 104
        %v1500 = vpop.permute.xlu0 %1499
        %1501 = vrot.lane.b32.xlu0 %v1440, 104
        %v1502 = vpop.permute.xlu0 %1501
        %1503 = vrot.lane.b32.xlu0 %v1441, 104
        %v1504 = vpop.permute.xlu0 %1503
        %1505 = vrot.lane.b32.xlu0 %v1442, 104
        %v1506 = vpop.permute.xlu0 %1505
        %1507 = vrot.lane.b32.xlu0 %v1443, 104
        %v1508 = vpop.permute.xlu0 %1507
        %1509 = vrot.lane.b32.xlu0 %v1444, 104
        %v1510 = vpop.permute.xlu0 %1509
        %1519 = vrot.lane.b32.xlu0 %v1457, 120
        %v1520 = vpop.permute.xlu0 %1519
        %1521 = vrot.lane.b32.xlu0 %v1458, 120
        %v1522 = vpop.permute.xlu0 %1521
        %1523 = vrot.lane.b32.xlu0 %v1459, 120
        %v1524 = vpop.permute.xlu0 %1523
        %1525 = vrot.lane.b32.xlu0 %v1460, 120
        %v1526 = vpop.permute.xlu0 %1525
        %1527 = vrot.lane.b32.xlu0 %v1461, 120
        %v1528 = vpop.permute.xlu0 %1527
        %1529 = vrot.lane.b32.xlu0 %v1462, 120
        %v1530 = vpop.permute.xlu0 %1529
        %1531 = vrot.lane.b32.xlu0 %v1463, 120
        %v1532 = vpop.permute.xlu0 %1531
        %1533 = vrot.lane.b32.xlu0 %v1464, 120
        %v1534 = vpop.permute.xlu0 %1533
        %1536 = vrot.lane.b32.xlu0 %v1438, 16
        %v1537 = vpop.permute.xlu0 %1536
        %1538 = vrot.lane.b32.xlu0 %v1439, 16
        %v1539 = vpop.permute.xlu0 %1538
        %1540 = vrot.lane.b32.xlu0 %v1440, 16
        %v1541 = vpop.permute.xlu0 %1540
        %1542 = vrot.lane.b32.xlu0 %v1441, 16
        %v1543 = vpop.permute.xlu0 %1542
        %1544 = vrot.lane.b32.xlu0 %v1442, 16
        %v1545 = vpop.permute.xlu0 %1544
        %1546 = vrot.lane.b32.xlu0 %v1443, 16
        %v1547 = vpop.permute.xlu0 %1546
        %1548 = vrot.lane.b32.xlu0 %v1444, 16
        %v1549 = vpop.permute.xlu0 %1548
        %1550 = vrot.lane.b32.xlu0 %v1445, 16
        %v1551 = vpop.permute.xlu0 %1550
        %1553 = vrot.lane.b32.xlu0 %v1458, 32
        %v1554 = vpop.permute.xlu0 %1553
        %1555 = vrot.lane.b32.xlu0 %v1459, 32
        %v1556 = vpop.permute.xlu0 %1555
        %1557 = vrot.lane.b32.xlu0 %v1460, 32
        %v1558 = vpop.permute.xlu0 %1557
        %1559 = vrot.lane.b32.xlu0 %v1461, 32
        %v1560 = vpop.permute.xlu0 %1559
        %1561 = vrot.lane.b32.xlu0 %v1462, 32
        %v1562 = vpop.permute.xlu0 %1561
        %1563 = vrot.lane.b32.xlu0 %v1463, 32
        %v1564 = vpop.permute.xlu0 %1563
        %1565 = vrot.lane.b32.xlu0 %v1464, 32
        %v1566 = vpop.permute.xlu0 %1565
        %1567 = vrot.lane.b32.xlu0 %v1465, 32
        %v1568 = vpop.permute.xlu0 %1567
        %1569 = vrot.lane.b32.xlu0 %v1438, 24
        %v1570 = vpop.permute.xlu0 %1569
        %1571 = vrot.lane.b32.xlu0 %v1439, 24
        %v1572 = vpop.permute.xlu0 %1571
        %1573 = vrot.lane.b32.xlu0 %v1440, 24
        %v1574 = vpop.permute.xlu0 %1573
        %1575 = vrot.lane.b32.xlu0 %v1441, 24
        %v1576 = vpop.permute.xlu0 %1575
        %1577 = vrot.lane.b32.xlu0 %v1442, 24
        %v1578 = vpop.permute.xlu0 %1577
        %1579 = vrot.lane.b32.xlu0 %v1443, 24
        %v1580 = vpop.permute.xlu0 %1579
        %1581 = vrot.lane.b32.xlu0 %v1444, 24
        %v1582 = vpop.permute.xlu0 %1581
        %1583 = vrot.lane.b32.xlu0 %v1445, 24
        %v1584 = vpop.permute.xlu0 %1583
        %1585 = vrot.lane.b32.xlu0 %v1458, 40
        %v1586 = vpop.permute.xlu0 %1585
        %1587 = vrot.lane.b32.xlu0 %v1459, 40
        %v1588 = vpop.permute.xlu0 %1587
        %1589 = vrot.lane.b32.xlu0 %v1460, 40
        %v1590 = vpop.permute.xlu0 %1589
        %1591 = vrot.lane.b32.xlu0 %v1461, 40
        %v1592 = vpop.permute.xlu0 %1591
        %1593 = vrot.lane.b32.xlu0 %v1462, 40
        %v1594 = vpop.permute.xlu0 %1593
        %1595 = vrot.lane.b32.xlu0 %v1463, 40
        %v1596 = vpop.permute.xlu0 %1595
        %1597 = vrot.lane.b32.xlu0 %v1464, 40
        %v1598 = vpop.permute.xlu0 %1597
        %1599 = vrot.lane.b32.xlu0 %v1465, 40
        %v1600 = vpop.permute.xlu0 %1599
        %v1603 = vsel %vm561, %v1496, %v1520
        %v1606 = vsel %vm561, %v1498, %v1522
        %v1609 = vsel %vm561, %v1500, %v1524
        %v1612 = vsel %vm561, %v1502, %v1526
        %v1615 = vsel %vm561, %v1504, %v1528
        %v1618 = vsel %vm561, %v1506, %v1530
        %v1621 = vsel %vm561, %v1508, %v1532
        %v1624 = vsel %vm561, %v1510, %v1534
        %v1625 = vsel %vm471, %v1603, %v1520
        %v1626 = vsel %vm471, %v1606, %v1522
        %v1627 = vsel %vm471, %v1609, %v1524
        %v1628 = vsel %vm471, %v1612, %v1526
        %v1629 = vsel %vm471, %v1615, %v1528
        %v1630 = vsel %vm471, %v1618, %v1530
        %v1631 = vsel %vm471, %v1621, %v1532
        %v1632 = vsel %vm471, %v1624, %v1534
        %v1634 = vsel %vm878, %v1625, %v1537
        %v1636 = vsel %vm878, %v1626, %v1539
        %v1638 = vsel %vm878, %v1627, %v1541
        %v1640 = vsel %vm878, %v1628, %v1543
        %v1642 = vsel %vm878, %v1629, %v1545
        %v1644 = vsel %vm878, %v1630, %v1547
        %v1646 = vsel %vm878, %v1631, %v1549
        %v1648 = vsel %vm878, %v1632, %v1551
        %v1650 = vsel %vm443, %v1634, %v1554
        %v1652 = vsel %vm443, %v1636, %v1556
        %v1654 = vsel %vm443, %v1638, %v1558
        %v1656 = vsel %vm443, %v1640, %v1560
        %v1658 = vsel %vm443, %v1642, %v1562
        %v1660 = vsel %vm443, %v1644, %v1564
        %v1662 = vsel %vm443, %v1646, %v1566
        %v1664 = vsel %vm443, %v1648, %v1568
        %vm1665 = vcmask 326656
        %v1666 = vsel %vm1665, %v1650, %v1554
        %v1667 = vsel %vm1665, %v1652, %v1556
        %v1668 = vsel %vm1665, %v1654, %v1558
        %v1669 = vsel %vm1665, %v1656, %v1560
        %v1670 = vsel %vm1665, %v1658, %v1562
        %v1671 = vsel %vm1665, %v1660, %v1564
        %v1672 = vsel %vm1665, %v1662, %v1566
        %v1673 = vsel %vm1665, %v1664, %v1568
        %vm1674 = vcmask 392192
        %v1676 = vsel %vm1674, %v1666, %v1570
        %v1678 = vsel %vm1674, %v1667, %v1572
        %v1680 = vsel %vm1674, %v1668, %v1574
        %v1682 = vsel %vm1674, %v1669, %v1576
        %v1684 = vsel %vm1674, %v1670, %v1578
        %v1686 = vsel %vm1674, %v1671, %v1580
        %v1688 = vsel %vm1674, %v1672, %v1582
        %v1690 = vsel %vm1674, %v1673, %v1584
        %vm1691 = vcmask 457728
        %v1693 = vsel %vm1691, %v1676, %v1586
        %v1695 = vsel %vm1691, %v1678, %v1588
        %v1697 = vsel %vm1691, %v1680, %v1590
        %v1699 = vsel %vm1691, %v1682, %v1592
        %v1701 = vsel %vm1691, %v1684, %v1594
        %v1703 = vsel %vm1691, %v1686, %v1596
        %v1705 = vsel %vm1691, %v1688, %v1598
        %v1707 = vsel %vm1691, %v1690, %v1600
        %vm1708 = vcmask 523264
        %v1709 = vsel %vm1708, %v1693, %v1586
        %v1710 = vsel %vm1708, %v1695, %v1588
        %v1711 = vsel %vm1708, %v1697, %v1590
        %v1712 = vsel %vm1708, %v1699, %v1592
        %v1713 = vsel %vm1708, %v1701, %v1594
        %v1714 = vsel %vm1708, %v1703, %v1596
        %v1715 = vsel %vm1708, %v1705, %v1598
        %v1716 = vsel %vm1708, %v1707, %v1600
        %v1725 = vunpack.c.l.b16 %v1709
        %v1726 = vunpack.c.l.b16 %v1710
        %v1727 = vunpack.c.l.b16 %v1711
        %v1728 = vunpack.c.l.b16 %v1712
        %v1729 = vunpack.c.l.b16 %v1713
        %v1730 = vunpack.c.l.b16 %v1714
        %v1731 = vunpack.c.l.b16 %v1715
        %v1732 = vunpack.c.l.b16 %v1716
        %v1733 = vpack.c.b16 %v1726, %v1725
        %v1734 = vpack.c.b16 %v1728, %v1727
        %v1735 = vpack.c.b16 %v1730, %v1729
        %v1736 = vpack.c.b16 %v1732, %v1731
        %v1746 = vunpack.c.l.b16 %v1418
        %v1747 = vunpack.c.l.b16 %v1419
        %v1748 = vunpack.c.l.b16 %v1420
        %v1749 = vunpack.c.l.b16 %v1421
        %v1750 = vunpack.c.l.b16 %v1422
        %v1751 = vunpack.c.l.b16 %v1423
        %v1752 = vunpack.c.l.b16 %v1424
        %v1753 = vunpack.c.l.b16 %v1425
        %v1754 = vunpack.c.l.b16 %v1426
        %v1755 = vpack.c.b16 %v1747, %v1746
        %v1756 = vpack.c.b16 %v1749, %v1748
        %v1757 = vpack.c.b16 %v1751, %v1750
        %v1758 = vpack.c.b16 %v1753, %v1752
        %v1759 = vpack.c.b16 %v1754, %v1754
        %vm1764 = vcmask 588800
        %v1766 = vsel %vm1764, %v1733, 0
        %v1769 = vsel %vm1764, %v1734, 0
        %v1772 = vsel %vm1764, %v1735, 0
        %v1775 = vsel %vm1764, %v1736, 0
        %v1778 = vsel %vm574, %v1759, 0
        %1780 = vmatprep.subr.bf16.mxu0 0
        %1781 = vmatpush1.bf16.msra.mxu0 %v1755
        %1782 = vmatprep.subr.bf16.mxu0 0
        %1783 = vmatpush1.bf16.msra.mxu0 %v1756
        %1784 = vmatprep.subr.bf16.mxu0 0
        %1785 = vmatpush1.bf16.msra.mxu0 %v1757
        %1786 = vmatprep.subr.bf16.mxu0 0
        %1787 = vmatpush1.bf16.msra.mxu0 %v1758
        %1788 = vmatprep.subr.bf16.mxu0 0
        %1789 = vmatpush1.bf16.msra.mxu0 %v1778
        %1790 = vmatprep.subr.bf16.mxu0 0
        %1791 = vmatpush1.bf16.msra.mxu0 0
        %1792 = vmatprep.subr.bf16.mxu0 0
        %1793 = vmatpush1.bf16.msra.mxu0 0
        %1794 = vmatprep.subr.bf16.mxu0 0
        %1795 = vmatpush1.bf16.msra.mxu0 0
        %1796 = vmatprep.subr.bf16.mxu0 0
        %1797 = vmatpush1.bf16.msra.mxu0 0
        %1798 = vmatprep.subr.bf16.mxu0 0
        %1799 = vmatpush1.bf16.msra.mxu0 0
        %1800 = vmatprep.subr.bf16.mxu0 0
        %1801 = vmatpush1.bf16.msra.mxu0 0
        %1802 = vmatprep.subr.bf16.mxu0 0
        %1803 = vmatpush1.bf16.msra.mxu0 0
        %1804 = vmatprep.subr.bf16.mxu0 0
        %1805 = vmatpush1.bf16.msra.mxu0 0
        %1806 = vmatprep.subr.bf16.mxu0 0
        %1807 = vmatpush1.bf16.msra.mxu0 0
        %1808 = vmatprep.subr.bf16.mxu0 0
        %1809 = vmatpush1.bf16.msra.mxu0 0
        %1810 = vmatprep.subr.bf16.mxu0 0
        %1811 = vmatpush1.bf16.msra.mxu0 0
        %1812 = vmatprep.mubr.bf16.mxu0 0
        %1813 = vmatmul.mubr.bf16.gmra.mrb[0].mxu0 %v1766
        %v1814 = vpop.f32.mrb[0].mxu0
        %v1815 = vadd.f32 0.0, %v1814
        %v1816 = vpop.f32.mrb[0].mxu0
        %v1817 = vpop.f32.mrb[0].mxu0
        %v1818 = vadd.f32 0.0, %v1817
        %v1819 = vpop.f32.mrb[0].mxu0
        %1820 = vmatprep.mubr.bf16.mxu0 0
        %1821 = vmatmul.mubr.bf16.gmra.mrb[0].mxu0 %v1769
        %v1822 = vpop.f32.mrb[0].mxu0
        %v1823 = vadd.f32 0.0, %v1822
        %v1824 = vpop.f32.mrb[0].mxu0
        %v1825 = vpop.f32.mrb[0].mxu0
        %v1826 = vadd.f32 0.0, %v1825
        %v1827 = vpop.f32.mrb[0].mxu0
        %1828 = vmatprep.mubr.bf16.mxu0 0
        %1829 = vmatmul.mubr.bf16.gmra.mrb[0].mxu0 %v1772
        %v1830 = vpop.f32.mrb[0].mxu0
        %v1831 = vadd.f32 0.0, %v1830
        %v1832 = vpop.f32.mrb[0].mxu0
        %v1833 = vpop.f32.mrb[0].mxu0
        %v1834 = vadd.f32 0.0, %v1833
        %v1835 = vpop.f32.mrb[0].mxu0
        %1836 = vmatprep.mubr.bf16.mxu0 0
        %1837 = vmatmul.mubr.bf16.gmra.mrb[0].mxu0 %v1775
        %v1838 = vpop.f32.mrb[0].mxu0
        %v1839 = vadd.f32 0.0, %v1838
        %v1840 = vpop.f32.mrb[0].mxu0
        %v1841 = vpop.f32.mrb[0].mxu0
        %v1842 = vadd.f32 0.0, %v1841
        %v1843 = vpop.f32.mrb[0].mxu0
        %1844 = vdwg.mxu0
        %1845 = vrot.lane.b32.xlu0 %v1457, 112
        %v1846 = vpop.permute.xlu0 %1845
        %1847 = vrot.lane.b32.xlu0 %v1458, 112
        %v1848 = vpop.permute.xlu0 %1847
        %1849 = vrot.lane.b32.xlu0 %v1459, 112
        %v1850 = vpop.permute.xlu0 %1849
        %1851 = vrot.lane.b32.xlu0 %v1460, 112
        %v1852 = vpop.permute.xlu0 %1851
        %1853 = vrot.lane.b32.xlu0 %v1461, 112
        %v1854 = vpop.permute.xlu0 %1853
        %1855 = vrot.lane.b32.xlu0 %v1462, 112
        %v1856 = vpop.permute.xlu0 %1855
        %1857 = vrot.lane.b32.xlu0 %v1463, 112
        %v1858 = vpop.permute.xlu0 %1857
        %1859 = vrot.lane.b32.xlu0 %v1464, 112
        %v1860 = vpop.permute.xlu0 %1859
        %1861 = vrot.lane.b32.xlu0 %v1458, 24
        %v1862 = vpop.permute.xlu0 %1861
        %1863 = vrot.lane.b32.xlu0 %v1459, 24
        %v1864 = vpop.permute.xlu0 %1863
        %1865 = vrot.lane.b32.xlu0 %v1460, 24
        %v1866 = vpop.permute.xlu0 %1865
        %1867 = vrot.lane.b32.xlu0 %v1461, 24
        %v1868 = vpop.permute.xlu0 %1867
        %1869 = vrot.lane.b32.xlu0 %v1462, 24
        %v1870 = vpop.permute.xlu0 %1869
        %1871 = vrot.lane.b32.xlu0 %v1463, 24
        %v1872 = vpop.permute.xlu0 %1871
        %1873 = vrot.lane.b32.xlu0 %v1464, 24
        %v1874 = vpop.permute.xlu0 %1873
        %1875 = vrot.lane.b32.xlu0 %v1465, 24
        %v1876 = vpop.permute.xlu0 %1875
        %1885 = vrot.lane.b32.xlu0 %v1478, 40
        %v1886 = vpop.permute.xlu0 %1885
        %1887 = vrot.lane.b32.xlu0 %v1479, 40
        %v1888 = vpop.permute.xlu0 %1887
        %1889 = vrot.lane.b32.xlu0 %v1480, 40
        %v1890 = vpop.permute.xlu0 %1889
        %1891 = vrot.lane.b32.xlu0 %v1481, 40
        %v1892 = vpop.permute.xlu0 %1891
        %1893 = vrot.lane.b32.xlu0 %v1482, 40
        %v1894 = vpop.permute.xlu0 %1893
        %1895 = vrot.lane.b32.xlu0 %v1483, 40
        %v1896 = vpop.permute.xlu0 %1895
        %1897 = vrot.lane.b32.xlu0 %v1484, 40
        %v1898 = vpop.permute.xlu0 %1897
        %1899 = vrot.lane.b32.xlu0 %v1485, 40
        %v1900 = vpop.permute.xlu0 %1899
        %1901 = vrot.lane.b32.xlu0 %v1478, 48
        %v1902 = vpop.permute.xlu0 %1901
        %1903 = vrot.lane.b32.xlu0 %v1479, 48
        %v1904 = vpop.permute.xlu0 %1903
        %1905 = vrot.lane.b32.xlu0 %v1480, 48
        %v1906 = vpop.permute.xlu0 %1905
        %1907 = vrot.lane.b32.xlu0 %v1481, 48
        %v1908 = vpop.permute.xlu0 %1907
        %1909 = vrot.lane.b32.xlu0 %v1482, 48
        %v1910 = vpop.permute.xlu0 %1909
        %1911 = vrot.lane.b32.xlu0 %v1483, 48
        %v1912 = vpop.permute.xlu0 %1911
        %1913 = vrot.lane.b32.xlu0 %v1484, 48
        %v1914 = vpop.permute.xlu0 %1913
        %1915 = vrot.lane.b32.xlu0 %v1485, 48
        %v1916 = vpop.permute.xlu0 %1915
        %v1926 = vsel %vm471, %v1846, %v1477
        %v1928 = vsel %vm471, %v1848, %v1478
        %v1930 = vsel %vm471, %v1850, %v1479
        %v1932 = vsel %vm471, %v1852, %v1480
        %v1934 = vsel %vm471, %v1854, %v1481
        %v1936 = vsel %vm471, %v1856, %v1482
        %v1938 = vsel %vm471, %v1858, %v1483
        %v1940 = vsel %vm471, %v1860, %v1484
        %v1942 = vsel %vm878, %v1926, %v1862
        %v1944 = vsel %vm878, %v1928, %v1864
        %v1946 = vsel %vm878, %v1930, %v1866
        %v1948 = vsel %vm878, %v1932, %v1868
        %v1950 = vsel %vm878, %v1934, %v1870
        %v1952 = vsel %vm878, %v1936, %v1872
        %v1954 = vsel %vm878, %v1938, %v1874
        %v1956 = vsel %vm878, %v1940, %v1876
        %v1957 = vsel %vm443, %v1942, %v1862
        %v1958 = vsel %vm443, %v1944, %v1864
        %v1959 = vsel %vm443, %v1946, %v1866
        %v1960 = vsel %vm443, %v1948, %v1868
        %v1961 = vsel %vm443, %v1950, %v1870
        %v1962 = vsel %vm443, %v1952, %v1872
        %v1963 = vsel %vm443, %v1954, %v1874
        %v1964 = vsel %vm443, %v1956, %v1876
        %v1966 = vsel %vm1665, %v1957, %v1886
        %v1968 = vsel %vm1665, %v1958, %v1888
        %v1970 = vsel %vm1665, %v1959, %v1890
        %v1972 = vsel %vm1665, %v1960, %v1892
        %v1974 = vsel %vm1665, %v1961, %v1894
        %v1976 = vsel %vm1665, %v1962, %v1896
        %v1978 = vsel %vm1665, %v1963, %v1898
        %v1980 = vsel %vm1665, %v1964, %v1900
        %v1981 = vsel %vm1674, %v1966, %v1554
        %v1982 = vsel %vm1674, %v1968, %v1556
        %v1983 = vsel %vm1674, %v1970, %v1558
        %v1984 = vsel %vm1674, %v1972, %v1560
        %v1985 = vsel %vm1674, %v1974, %v1562
        %v1986 = vsel %vm1674, %v1976, %v1564
        %v1987 = vsel %vm1674, %v1978, %v1566
        %v1988 = vsel %vm1674, %v1980, %v1568
        %v1989 = vsel %vm1691, %v1981, %v1554
        %v1990 = vsel %vm1691, %v1982, %v1556
        %v1991 = vsel %vm1691, %v1983, %v1558
        %v1992 = vsel %vm1691, %v1984, %v1560
        %v1993 = vsel %vm1691, %v1985, %v1562
        %v1994 = vsel %vm1691, %v1986, %v1564
        %v1995 = vsel %vm1691, %v1987, %v1566
        %v1996 = vsel %vm1691, %v1988, %v1568
        %v1998 = vsel %vm1708, %v1989, %v1902
        %v2000 = vsel %vm1708, %v1990, %v1904
        %v2002 = vsel %vm1708, %v1991, %v1906
        %v2004 = vsel %vm1708, %v1992, %v1908
        %v2006 = vsel %vm1708, %v1993, %v1910
        %v2008 = vsel %vm1708, %v1994, %v1912
        %v2010 = vsel %vm1708, %v1995, %v1914
        %v2012 = vsel %vm1708, %v1996, %v1916
        %v2021 = vunpack.c.l.b16 %v1998
        %v2022 = vunpack.c.l.b16 %v2000
        %v2023 = vunpack.c.l.b16 %v2002
        %v2024 = vunpack.c.l.b16 %v2004
        %v2025 = vunpack.c.l.b16 %v2006
        %v2026 = vunpack.c.l.b16 %v2008
        %v2027 = vunpack.c.l.b16 %v2010
        %v2028 = vunpack.c.l.b16 %v2012
        %v2029 = vpack.c.b16 %v2022, %v2021
        %v2030 = vpack.c.b16 %v2024, %v2023
        %v2031 = vpack.c.b16 %v2026, %v2025
        %v2032 = vpack.c.b16 %v2028, %v2027
        %v2034 = vsel %vm1764, %v2029, 0
        %v2037 = vsel %vm1764, %v2030, 0
        %v2040 = vsel %vm1764, %v2031, 0
        %v2043 = vsel %vm1764, %v2032, 0
        %2045 = vmatprep.subr.bf16.mxu0 0
        %2046 = vmatpush1.bf16.msra.mxu0 %v1755
        %2047 = vmatprep.subr.bf16.mxu0 0
        %2048 = vmatpush1.bf16.msra.mxu0 %v1756
        %2049 = vmatprep.subr.bf16.mxu0 0
        %2050 = vmatpush1.bf16.msra.mxu0 %v1757
        %2051 = vmatprep.subr.bf16.mxu0 0
        %2052 = vmatpush1.bf16.msra.mxu0 %v1758
        %2053 = vmatprep.subr.bf16.mxu0 0
        %2054 = vmatpush1.bf16.msra.mxu0 %v1778
        %2055 = vmatprep.subr.bf16.mxu0 0
        %2056 = vmatpush1.bf16.msra.mxu0 0
        %2057 = vmatprep.subr.bf16.mxu0 0
        %2058 = vmatpush1.bf16.msra.mxu0 0
        %2059 = vmatprep.subr.bf16.mxu0 0
        %2060 = vmatpush1.bf16.msra.mxu0 0
        %2061 = vmatprep.subr.bf16.mxu0 0
        %2062 = vmatpush1.bf16.msra.mxu0 0
        %2063 = vmatprep.subr.bf16.mxu0 0
        %2064 = vmatpush1.bf16.msra.mxu0 0
        %2065 = vmatprep.subr.bf16.mxu0 0
        %2066 = vmatpush1.bf16.msra.mxu0 0
        %2067 = vmatprep.subr.bf16.mxu0 0
        %2068 = vmatpush1.bf16.msra.mxu0 0
        %2069 = vmatprep.subr.bf16.mxu0 0
        %2070 = vmatpush1.bf16.msra.mxu0 0
        %2071 = vmatprep.subr.bf16.mxu0 0
        %2072 = vmatpush1.bf16.msra.mxu0 0
        %2073 = vmatprep.subr.bf16.mxu0 0
        %2074 = vmatpush1.bf16.msra.mxu0 0
        %2075 = vmatprep.subr.bf16.mxu0 0
        %2076 = vmatpush1.bf16.msra.mxu0 0
        %2077 = vmatprep.mubr.bf16.mxu0 0
        %2078 = vmatmul.mubr.bf16.gmra.mrb[0].mxu0 %v2034
        %v2079 = vpop.f32.mrb[0].mxu0
        %v2080 = vadd.f32 0.0, %v2079
        %v2081 = vpop.f32.mrb[0].mxu0
        %v2082 = vpop.f32.mrb[0].mxu0
        %v2083 = vadd.f32 0.0, %v2082
        %v2084 = vpop.f32.mrb[0].mxu0
        %2085 = vmatprep.mubr.bf16.mxu0 0
        %2086 = vmatmul.mubr.bf16.gmra.mrb[0].mxu0 %v2037
        %v2087 = vpop.f32.mrb[0].mxu0
        %v2088 = vadd.f32 0.0, %v2087
        %v2089 = vpop.f32.mrb[0].mxu0
        %v2090 = vpop.f32.mrb[0].mxu0
        %v2091 = vadd.f32 0.0, %v2090
        %v2092 = vpop.f32.mrb[0].mxu0
        %2093 = vmatprep.mubr.bf16.mxu0 0
        %2094 = vmatmul.mubr.bf16.gmra.mrb[0].mxu0 %v2040
        %v2095 = vpop.f32.mrb[0].mxu0
        %v2096 = vadd.f32 0.0, %v2095
        %v2097 = vpop.f32.mrb[0].mxu0
        %v2098 = vpop.f32.mrb[0].mxu0
        %v2099 = vadd.f32 0.0, %v2098
        %v2100 = vpop.f32.mrb[0].mxu0
        %2101 = vmatprep.mubr.bf16.mxu0 0
        %2102 = vmatmul.mubr.bf16.gmra.mrb[0].mxu0 %v2043
        %v2103 = vpop.f32.mrb[0].mxu0
        %v2104 = vadd.f32 0.0, %v2103
        %v2105 = vpop.f32.mrb[0].mxu0
        %v2106 = vpop.f32.mrb[0].mxu0
        %v2107 = vadd.f32 0.0, %v2106
        %v2108 = vpop.f32.mrb[0].mxu0
        %2109 = vdwg.mxu0
        %2110 = vrot.lane.b32.xlu0 %v1438, 120
        %v2111 = vpop.permute.xlu0 %2110
        %2112 = vrot.lane.b32.xlu0 %v1439, 120
        %v2113 = vpop.permute.xlu0 %2112
        %2114 = vrot.lane.b32.xlu0 %v1440, 120
        %v2115 = vpop.permute.xlu0 %2114
        %2116 = vrot.lane.b32.xlu0 %v1441, 120
        %v2117 = vpop.permute.xlu0 %2116
        %2118 = vrot.lane.b32.xlu0 %v1442, 120
        %v2119 = vpop.permute.xlu0 %2118
        %2120 = vrot.lane.b32.xlu0 %v1443, 120
        %v2121 = vpop.permute.xlu0 %2120
        %2122 = vrot.lane.b32.xlu0 %v1444, 120
        %v2123 = vpop.permute.xlu0 %2122
        %2124 = vrot.lane.b32.xlu0 %v1445, 120
        %v2125 = vpop.permute.xlu0 %2124
        %2126 = vrot.lane.b32.xlu0 %v1458, 8
        %v2127 = vpop.permute.xlu0 %2126
        %2128 = vrot.lane.b32.xlu0 %v1459, 8
        %v2129 = vpop.permute.xlu0 %2128
        %2130 = vrot.lane.b32.xlu0 %v1460, 8
        %v2131 = vpop.permute.xlu0 %2130
        %2132 = vrot.lane.b32.xlu0 %v1461, 8
        %v2133 = vpop.permute.xlu0 %2132
        %2134 = vrot.lane.b32.xlu0 %v1462, 8
        %v2135 = vpop.permute.xlu0 %2134
        %2136 = vrot.lane.b32.xlu0 %v1463, 8
        %v2137 = vpop.permute.xlu0 %2136
        %2138 = vrot.lane.b32.xlu0 %v1464, 8
        %v2139 = vpop.permute.xlu0 %2138
        %2140 = vrot.lane.b32.xlu0 %v1465, 8
        %v2141 = vpop.permute.xlu0 %2140
        %2142 = vrot.lane.b32.xlu0 %v1458, 16
        %v2143 = vpop.permute.xlu0 %2142
        %2144 = vrot.lane.b32.xlu0 %v1459, 16
        %v2145 = vpop.permute.xlu0 %2144
        %2146 = vrot.lane.b32.xlu0 %v1460, 16
        %v2147 = vpop.permute.xlu0 %2146
        %2148 = vrot.lane.b32.xlu0 %v1461, 16
        %v2149 = vpop.permute.xlu0 %2148
        %2150 = vrot.lane.b32.xlu0 %v1462, 16
        %v2151 = vpop.permute.xlu0 %2150
        %2152 = vrot.lane.b32.xlu0 %v1463, 16
        %v2153 = vpop.permute.xlu0 %2152
        %2154 = vrot.lane.b32.xlu0 %v1464, 16
        %v2155 = vpop.permute.xlu0 %2154
        %2156 = vrot.lane.b32.xlu0 %v1465, 16
        %v2157 = vpop.permute.xlu0 %2156
        %2159 = vrot.lane.b32.xlu0 %v1439, 40
        %v2160 = vpop.permute.xlu0 %2159
        %2161 = vrot.lane.b32.xlu0 %v1440, 40
        %v2162 = vpop.permute.xlu0 %2161
        %2163 = vrot.lane.b32.xlu0 %v1441, 40
        %v2164 = vpop.permute.xlu0 %2163
        %2165 = vrot.lane.b32.xlu0 %v1442, 40
        %v2166 = vpop.permute.xlu0 %2165
        %2167 = vrot.lane.b32.xlu0 %v1443, 40
        %v2168 = vpop.permute.xlu0 %2167
        %2169 = vrot.lane.b32.xlu0 %v1444, 40
        %v2170 = vpop.permute.xlu0 %2169
        %2171 = vrot.lane.b32.xlu0 %v1445, 40
        %v2172 = vpop.permute.xlu0 %2171
        %2173 = vrot.lane.b32.xlu0 %v1446, 40
        %v2174 = vpop.permute.xlu0 %2173
        %2176 = vrot.lane.b32.xlu0 %v1459, 56
        %v2177 = vpop.permute.xlu0 %2176
        %2178 = vrot.lane.b32.xlu0 %v1460, 56
        %v2179 = vpop.permute.xlu0 %2178
        %2180 = vrot.lane.b32.xlu0 %v1461, 56
        %v2181 = vpop.permute.xlu0 %2180
        %2182 = vrot.lane.b32.xlu0 %v1462, 56
        %v2183 = vpop.permute.xlu0 %2182
        %2184 = vrot.lane.b32.xlu0 %v1463, 56
        %v2185 = vpop.permute.xlu0 %2184
        %2186 = vrot.lane.b32.xlu0 %v1464, 56
        %v2187 = vpop.permute.xlu0 %2186
        %2188 = vrot.lane.b32.xlu0 %v1465, 56
        %v2189 = vpop.permute.xlu0 %2188
        %2190 = vrot.lane.b32.xlu0 %v1466, 56
        %v2191 = vpop.permute.xlu0 %2190
        %v2194 = vsel %vm561, %v2111, %v2127
        %v2197 = vsel %vm561, %v2113, %v2129
        %v2200 = vsel %vm561, %v2115, %v2131
        %v2203 = vsel %vm561, %v2117, %v2133
        %v2206 = vsel %vm561, %v2119, %v2135
        %v2209 = vsel %vm561, %v2121, %v2137
        %v2212 = vsel %vm561, %v2123, %v2139
        %v2215 = vsel %vm561, %v2125, %v2141
        %v2216 = vsel %vm471, %v2194, %v2127
        %v2217 = vsel %vm471, %v2197, %v2129
        %v2218 = vsel %vm471, %v2200, %v2131
        %v2219 = vsel %vm471, %v2203, %v2133
        %v2220 = vsel %vm471, %v2206, %v2135
        %v2221 = vsel %vm471, %v2209, %v2137
        %v2222 = vsel %vm471, %v2212, %v2139
        %v2223 = vsel %vm471, %v2215, %v2141
        %v2225 = vsel %vm878, %v2216, %v1438
        %v2227 = vsel %vm878, %v2217, %v1439
        %v2229 = vsel %vm878, %v2218, %v1440
        %v2231 = vsel %vm878, %v2219, %v1441
        %v2233 = vsel %vm878, %v2220, %v1442
        %v2235 = vsel %vm878, %v2221, %v1443
        %v2237 = vsel %vm878, %v2222, %v1444
        %v2239 = vsel %vm878, %v2223, %v1445
        %v2241 = vsel %vm443, %v2225, %v2143
        %v2243 = vsel %vm443, %v2227, %v2145
        %v2245 = vsel %vm443, %v2229, %v2147
        %v2247 = vsel %vm443, %v2231, %v2149
        %v2249 = vsel %vm443, %v2233, %v2151
        %v2251 = vsel %vm443, %v2235, %v2153
        %v2253 = vsel %vm443, %v2237, %v2155
        %v2255 = vsel %vm443, %v2239, %v2157
        %v2256 = vsel %vm1665, %v2241, %v2143
        %v2257 = vsel %vm1665, %v2243, %v2145
        %v2258 = vsel %vm1665, %v2245, %v2147
        %v2259 = vsel %vm1665, %v2247, %v2149
        %v2260 = vsel %vm1665, %v2249, %v2151
        %v2261 = vsel %vm1665, %v2251, %v2153
        %v2262 = vsel %vm1665, %v2253, %v2155
        %v2263 = vsel %vm1665, %v2255, %v2157
        %v2265 = vsel %vm1674, %v2256, %v2160
        %v2267 = vsel %vm1674, %v2257, %v2162
        %v2269 = vsel %vm1674, %v2258, %v2164
        %v2271 = vsel %vm1674, %v2259, %v2166
        %v2273 = vsel %vm1674, %v2260, %v2168
        %v2275 = vsel %vm1674, %v2261, %v2170
        %v2277 = vsel %vm1674, %v2262, %v2172
        %v2279 = vsel %vm1674, %v2263, %v2174
        %v2281 = vsel %vm1691, %v2265, %v2177
        %v2283 = vsel %vm1691, %v2267, %v2179
        %v2285 = vsel %vm1691, %v2269, %v2181
        %v2287 = vsel %vm1691, %v2271, %v2183
        %v2289 = vsel %vm1691, %v2273, %v2185
        %v2291 = vsel %vm1691, %v2275, %v2187
        %v2293 = vsel %vm1691, %v2277, %v2189
        %v2295 = vsel %vm1691, %v2279, %v2191
        %v2296 = vsel %vm1708, %v2281, %v2177
        %v2297 = vsel %vm1708, %v2283, %v2179
        %v2298 = vsel %vm1708, %v2285, %v2181
        %v2299 = vsel %vm1708, %v2287, %v2183
        %v2300 = vsel %vm1708, %v2289, %v2185
        %v2301 = vsel %vm1708, %v2291, %v2187
        %v2302 = vsel %vm1708, %v2293, %v2189
        %v2303 = vsel %vm1708, %v2295, %v2191
        %v2312 = vunpack.c.l.b16 %v2296
        %v2313 = vunpack.c.l.b16 %v2297
        %v2314 = vunpack.c.l.b16 %v2298
        %v2315 = vunpack.c.l.b16 %v2299
        %v2316 = vunpack.c.l.b16 %v2300
        %v2317 = vunpack.c.l.b16 %v2301
        %v2318 = vunpack.c.l.b16 %v2302
        %v2319 = vunpack.c.l.b16 %v2303
        %v2320 = vpack.c.b16 %v2313, %v2312
        %v2321 = vpack.c.b16 %v2315, %v2314
        %v2322 = vpack.c.b16 %v2317, %v2316
        %v2323 = vpack.c.b16 %v2319, %v2318
        %v2325 = vsel %vm1764, %v2320, 0
        %v2328 = vsel %vm1764, %v2321, 0
        %v2331 = vsel %vm1764, %v2322, 0
        %v2334 = vsel %vm1764, %v2323, 0
        %2336 = vmatprep.subr.bf16.mxu0 0
        %2337 = vmatpush1.bf16.msra.mxu0 %v1755
        %2338 = vmatprep.subr.bf16.mxu0 0
        %2339 = vmatpush1.bf16.msra.mxu0 %v1756
        %2340 = vmatprep.subr.bf16.mxu0 0
        %2341 = vmatpush1.bf16.msra.mxu0 %v1757
        %2342 = vmatprep.subr.bf16.mxu0 0
        %2343 = vmatpush1.bf16.msra.mxu0 %v1758
        %2344 = vmatprep.subr.bf16.mxu0 0
        %2345 = vmatpush1.bf16.msra.mxu0 %v1778
        %2346 = vmatprep.subr.bf16.mxu0 0
        %2347 = vmatpush1.bf16.msra.mxu0 0
        %2348 = vmatprep.subr.bf16.mxu0 0
        %2349 = vmatpush1.bf16.msra.mxu0 0
        %2350 = vmatprep.subr.bf16.mxu0 0
        %2351 = vmatpush1.bf16.msra.mxu0 0
        %2352 = vmatprep.subr.bf16.mxu0 0
        %2353 = vmatpush1.bf16.msra.mxu0 0
        %2354 = vmatprep.subr.bf16.mxu0 0
        %2355 = vmatpush1.bf16.msra.mxu0 0
        %2356 = vmatprep.subr.bf16.mxu0 0
        %2357 = vmatpush1.bf16.msra.mxu0 0
        %2358 = vmatprep.subr.bf16.mxu0 0
        %2359 = vmatpush1.bf16.msra.mxu0 0
        %2360 = vmatprep.subr.bf16.mxu0 0
        %2361 = vmatpush1.bf16.msra.mxu0 0
        %2362 = vmatprep.subr.bf16.mxu0 0
        %2363 = vmatpush1.bf16.msra.mxu0 0
        %2364 = vmatprep.subr.bf16.mxu0 0
        %2365 = vmatpush1.bf16.msra.mxu0 0
        %2366 = vmatprep.subr.bf16.mxu0 0
        %2367 = vmatpush1.bf16.msra.mxu0 0
        %2368 = vmatprep.mubr.bf16.mxu0 0
        %2369 = vmatmul.mubr.bf16.gmra.mrb[0].mxu0 %v2325
        %v2370 = vpop.f32.mrb[0].mxu0
        %v2371 = vadd.f32 0.0, %v2370
        %v2372 = vpop.f32.mrb[0].mxu0
        %v2373 = vpop.f32.mrb[0].mxu0
        %v2374 = vadd.f32 0.0, %v2373
        %v2375 = vpop.f32.mrb[0].mxu0
        %2376 = vmatprep.mubr.bf16.mxu0 0
        %2377 = vmatmul.mubr.bf16.gmra.mrb[0].mxu0 %v2328
        %v2378 = vpop.f32.mrb[0].mxu0
        %v2379 = vadd.f32 0.0, %v2378
        %v2380 = vpop.f32.mrb[0].mxu0
        %v2381 = vpop.f32.mrb[0].mxu0
        %v2382 = vadd.f32 0.0, %v2381
        %v2383 = vpop.f32.mrb[0].mxu0
        %2384 = vmatprep.mubr.bf16.mxu0 0
        %2385 = vmatmul.mubr.bf16.gmra.mrb[0].mxu0 %v2331
        %v2386 = vpop.f32.mrb[0].mxu0
        %v2387 = vadd.f32 0.0, %v2386
        %v2388 = vpop.f32.mrb[0].mxu0
        %v2389 = vpop.f32.mrb[0].mxu0
        %v2390 = vadd.f32 0.0, %v2389
        %v2391 = vpop.f32.mrb[0].mxu0
        %2392 = vmatprep.mubr.bf16.mxu0 0
        %2393 = vmatmul.mubr.bf16.gmra.mrb[0].mxu0 %v2334
        %v2394 = vpop.f32.mrb[0].mxu0
        %v2395 = vadd.f32 0.0, %v2394
        %v2396 = vpop.f32.mrb[0].mxu0
        %v2397 = vpop.f32.mrb[0].mxu0
        %v2398 = vadd.f32 0.0, %v2397
        %v2399 = vpop.f32.mrb[0].mxu0
        %2400 = vdwg.mxu0
        %2401 = vrot.lane.b32.xlu0 %v1478, 16
        %v2402 = vpop.permute.xlu0 %2401
        %2403 = vrot.lane.b32.xlu0 %v1479, 16
        %v2404 = vpop.permute.xlu0 %2403
        %2405 = vrot.lane.b32.xlu0 %v1480, 16
        %v2406 = vpop.permute.xlu0 %2405
        %2407 = vrot.lane.b32.xlu0 %v1481, 16
        %v2408 = vpop.permute.xlu0 %2407
        %2409 = vrot.lane.b32.xlu0 %v1482, 16
        %v2410 = vpop.permute.xlu0 %2409
        %2411 = vrot.lane.b32.xlu0 %v1483, 16
        %v2412 = vpop.permute.xlu0 %2411
        %2413 = vrot.lane.b32.xlu0 %v1484, 16
        %v2414 = vpop.permute.xlu0 %2413
        %2415 = vrot.lane.b32.xlu0 %v1485, 16
        %v2416 = vpop.permute.xlu0 %2415
        %2417 = vrot.lane.b32.xlu0 %v1478, 24
        %v2418 = vpop.permute.xlu0 %2417
        %2419 = vrot.lane.b32.xlu0 %v1479, 24
        %v2420 = vpop.permute.xlu0 %2419
        %2421 = vrot.lane.b32.xlu0 %v1480, 24
        %v2422 = vpop.permute.xlu0 %2421
        %2423 = vrot.lane.b32.xlu0 %v1481, 24
        %v2424 = vpop.permute.xlu0 %2423
        %2425 = vrot.lane.b32.xlu0 %v1482, 24
        %v2426 = vpop.permute.xlu0 %2425
        %2427 = vrot.lane.b32.xlu0 %v1483, 24
        %v2428 = vpop.permute.xlu0 %2427
        %2429 = vrot.lane.b32.xlu0 %v1484, 24
        %v2430 = vpop.permute.xlu0 %2429
        %2431 = vrot.lane.b32.xlu0 %v1485, 24
        %v2432 = vpop.permute.xlu0 %2431
        %2433 = vrot.lane.b32.xlu0 %v1459, 48
        %v2434 = vpop.permute.xlu0 %2433
        %2435 = vrot.lane.b32.xlu0 %v1460, 48
        %v2436 = vpop.permute.xlu0 %2435
        %2437 = vrot.lane.b32.xlu0 %v1461, 48
        %v2438 = vpop.permute.xlu0 %2437
        %2439 = vrot.lane.b32.xlu0 %v1462, 48
        %v2440 = vpop.permute.xlu0 %2439
        %2441 = vrot.lane.b32.xlu0 %v1463, 48
        %v2442 = vpop.permute.xlu0 %2441
        %2443 = vrot.lane.b32.xlu0 %v1464, 48
        %v2444 = vpop.permute.xlu0 %2443
        %2445 = vrot.lane.b32.xlu0 %v1465, 48
        %v2446 = vpop.permute.xlu0 %2445
        %2447 = vrot.lane.b32.xlu0 %v1466, 48
        %v2448 = vpop.permute.xlu0 %2447
        %2450 = vrot.lane.b32.xlu0 %v1479, 64
        %v2451 = vpop.permute.xlu0 %2450
        %2452 = vrot.lane.b32.xlu0 %v1480, 64
        %v2453 = vpop.permute.xlu0 %2452
        %2454 = vrot.lane.b32.xlu0 %v1481, 64
        %v2455 = vpop.permute.xlu0 %2454
        %2456 = vrot.lane.b32.xlu0 %v1482, 64
        %v2457 = vpop.permute.xlu0 %2456
        %2458 = vrot.lane.b32.xlu0 %v1483, 64
        %v2459 = vpop.permute.xlu0 %2458
        %2460 = vrot.lane.b32.xlu0 %v1484, 64
        %v2461 = vpop.permute.xlu0 %2460
        %2462 = vrot.lane.b32.xlu0 %v1485, 64
        %v2463 = vpop.permute.xlu0 %2462
        %2464 = vrot.lane.b32.xlu0 %v1486, 64
        %v2465 = vpop.permute.xlu0 %2464
        %v2475 = vsel %vm471, %v1458, %v2402
        %v2477 = vsel %vm471, %v1459, %v2404
        %v2479 = vsel %vm471, %v1460, %v2406
        %v2481 = vsel %vm471, %v1461, %v2408
        %v2483 = vsel %vm471, %v1462, %v2410
        %v2485 = vsel %vm471, %v1463, %v2412
        %v2487 = vsel %vm471, %v1464, %v2414
        %v2489 = vsel %vm471, %v1465, %v2416
        %v2490 = vsel %vm878, %v2475, %v2127
        %v2491 = vsel %vm878, %v2477, %v2129
        %v2492 = vsel %vm878, %v2479, %v2131
        %v2493 = vsel %vm878, %v2481, %v2133
        %v2494 = vsel %vm878, %v2483, %v2135
        %v2495 = vsel %vm878, %v2485, %v2137
        %v2496 = vsel %vm878, %v2487, %v2139
        %v2497 = vsel %vm878, %v2489, %v2141
        %v2498 = vsel %vm443, %v2490, %v2127
        %v2499 = vsel %vm443, %v2491, %v2129
        %v2500 = vsel %vm443, %v2492, %v2131
        %v2501 = vsel %vm443, %v2493, %v2133
        %v2502 = vsel %vm443, %v2494, %v2135
        %v2503 = vsel %vm443, %v2495, %v2137
        %v2504 = vsel %vm443, %v2496, %v2139
        %v2505 = vsel %vm443, %v2497, %v2141
        %v2507 = vsel %vm1665, %v2498, %v2418
        %v2509 = vsel %vm1665, %v2499, %v2420
        %v2511 = vsel %vm1665, %v2500, %v2422
        %v2513 = vsel %vm1665, %v2501, %v2424
        %v2515 = vsel %vm1665, %v2502, %v2426
        %v2517 = vsel %vm1665, %v2503, %v2428
        %v2519 = vsel %vm1665, %v2504, %v2430
        %v2521 = vsel %vm1665, %v2505, %v2432
        %v2523 = vsel %vm1674, %v2507, %v2434
        %v2525 = vsel %vm1674, %v2509, %v2436
        %v2527 = vsel %vm1674, %v2511, %v2438
        %v2529 = vsel %vm1674, %v2513, %v2440
        %v2531 = vsel %vm1674, %v2515, %v2442
        %v2533 = vsel %vm1674, %v2517, %v2444
        %v2535 = vsel %vm1674, %v2519, %v2446
        %v2537 = vsel %vm1674, %v2521, %v2448
        %v2538 = vsel %vm1691, %v2523, %v2434
        %v2539 = vsel %vm1691, %v2525, %v2436
        %v2540 = vsel %vm1691, %v2527, %v2438
        %v2541 = vsel %vm1691, %v2529, %v2440
        %v2542 = vsel %vm1691, %v2531, %v2442
        %v2543 = vsel %vm1691, %v2533, %v2444
        %v2544 = vsel %vm1691, %v2535, %v2446
        %v2545 = vsel %vm1691, %v2537, %v2448
        %v2547 = vsel %vm1708, %v2538, %v2451
        %v2549 = vsel %vm1708, %v2539, %v2453
        %v2551 = vsel %vm1708, %v2540, %v2455
        %v2553 = vsel %vm1708, %v2541, %v2457
        %v2555 = vsel %vm1708, %v2542, %v2459
        %v2557 = vsel %vm1708, %v2543, %v2461
        %v2559 = vsel %vm1708, %v2544, %v2463
        %v2561 = vsel %vm1708, %v2545, %v2465
        %v2570 = vunpack.c.l.b16 %v2547
        %v2571 = vunpack.c.l.b16 %v2549
        %v2572 = vunpack.c.l.b16 %v2551
        %v2573 = vunpack.c.l.b16 %v2553
        %v2574 = vunpack.c.l.b16 %v2555
        %v2575 = vunpack.c.l.b16 %v2557
        %v2576 = vunpack.c.l.b16 %v2559
        %v2577 = vunpack.c.l.b16 %v2561
        %v2578 = vpack.c.b16 %v2571, %v2570
        %v2579 = vpack.c.b16 %v2573, %v2572
        %v2580 = vpack.c.b16 %v2575, %v2574
        %v2581 = vpack.c.b16 %v2577, %v2576
        %v2583 = vsel %vm1764, %v2578, 0
        %v2586 = vsel %vm1764, %v2579, 0
        %v2589 = vsel %vm1764, %v2580, 0
        %v2592 = vsel %vm1764, %v2581, 0
        %2594 = vmatprep.subr.bf16.mxu0 0
        %2595 = vmatpush1.bf16.msra.mxu0 %v1755
        %2596 = vmatprep.subr.bf16.mxu0 0
        %2597 = vmatpush1.bf16.msra.mxu0 %v1756
        %2598 = vmatprep.subr.bf16.mxu0 0
        %2599 = vmatpush1.bf16.msra.mxu0 %v1757
        %2600 = vmatprep.subr.bf16.mxu0 0
        %2601 = vmatpush1.bf16.msra.mxu0 %v1758
        %2602 = vmatprep.subr.bf16.mxu0 0
        %2603 = vmatpush1.bf16.msra.mxu0 %v1778
        %2604 = vmatprep.subr.bf16.mxu0 0
        %2605 = vmatpush1.bf16.msra.mxu0 0
        %2606 = vmatprep.subr.bf16.mxu0 0
        %2607 = vmatpush1.bf16.msra.mxu0 0
        %2608 = vmatprep.subr.bf16.mxu0 0
        %2609 = vmatpush1.bf16.msra.mxu0 0
        %2610 = vmatprep.subr.bf16.mxu0 0
        %2611 = vmatpush1.bf16.msra.mxu0 0
        %2612 = vmatprep.subr.bf16.mxu0 0
        %2613 = vmatpush1.bf16.msra.mxu0 0
        %2614 = vmatprep.subr.bf16.mxu0 0
        %2615 = vmatpush1.bf16.msra.mxu0 0
        %2616 = vmatprep.subr.bf16.mxu0 0
        %2617 = vmatpush1.bf16.msra.mxu0 0
        %2618 = vmatprep.subr.bf16.mxu0 0
        %2619 = vmatpush1.bf16.msra.mxu0 0
        %2620 = vmatprep.subr.bf16.mxu0 0
        %2621 = vmatpush1.bf16.msra.mxu0 0
        %2622 = vmatprep.subr.bf16.mxu0 0
        %2623 = vmatpush1.bf16.msra.mxu0 0
        %2624 = vmatprep.subr.bf16.mxu0 0
        %2625 = vmatpush1.bf16.msra.mxu0 0
        %2626 = vmatprep.mubr.bf16.mxu0 0
        %2627 = vmatmul.mubr.bf16.gmra.mrb[0].mxu0 %v2583
        %v2628 = vpop.f32.mrb[0].mxu0
        %v2629 = vadd.f32 0.0, %v2628
        %v2630 = vpop.f32.mrb[0].mxu0
        %v2631 = vpop.f32.mrb[0].mxu0
        %v2632 = vadd.f32 0.0, %v2631
        %v2633 = vpop.f32.mrb[0].mxu0
        %2634 = vmatprep.mubr.bf16.mxu0 0
        %2635 = vmatmul.mubr.bf16.gmra.mrb[0].mxu0 %v2586
        %v2636 = vpop.f32.mrb[0].mxu0
        %v2637 = vadd.f32 0.0, %v2636
        %v2638 = vpop.f32.mrb[0].mxu0
        %v2639 = vpop.f32.mrb[0].mxu0
        %v2640 = vadd.f32 0.0, %v2639
        %v2641 = vpop.f32.mrb[0].mxu0
        %2642 = vmatprep.mubr.bf16.mxu0 0
        %2643 = vmatmul.mubr.bf16.gmra.mrb[0].mxu0 %v2589
        %v2644 = vpop.f32.mrb[0].mxu0
        %v2645 = vadd.f32 0.0, %v2644
        %v2646 = vpop.f32.mrb[0].mxu0
        %v2647 = vpop.f32.mrb[0].mxu0
        %v2648 = vadd.f32 0.0, %v2647
        %v2649 = vpop.f32.mrb[0].mxu0
        %2650 = vmatprep.mubr.bf16.mxu0 0
        %2651 = vmatmul.mubr.bf16.gmra.mrb[0].mxu0 %v2592
        %v2652 = vpop.f32.mrb[0].mxu0
        %v2653 = vadd.f32 0.0, %v2652
        %v2654 = vpop.f32.mrb[0].mxu0
        %v2655 = vpop.f32.mrb[0].mxu0
        %v2656 = vadd.f32 0.0, %v2655
        %v2657 = vpop.f32.mrb[0].mxu0
        %2658 = vdwg.mxu0
        %2667 = vrot.lane.b32.xlu0 %v2080, 4
        %v2668 = vpop.permute.xlu0 %2667
        %2669 = vrot.lane.b32.xlu0 %v2083, 4
        %v2670 = vpop.permute.xlu0 %2669
        %2671 = vrot.lane.b32.xlu0 %v2088, 4
        %v2672 = vpop.permute.xlu0 %2671
        %2673 = vrot.lane.b32.xlu0 %v2091, 4
        %v2674 = vpop.permute.xlu0 %2673
        %2675 = vrot.lane.b32.xlu0 %v2096, 4
        %v2676 = vpop.permute.xlu0 %2675
        %2677 = vrot.lane.b32.xlu0 %v2099, 4
        %v2678 = vpop.permute.xlu0 %2677
        %2679 = vrot.lane.b32.xlu0 %v2104, 4
        %v2680 = vpop.permute.xlu0 %2679
        %2681 = vrot.lane.b32.xlu0 %v2107, 4
        %v2682 = vpop.permute.xlu0 %2681
        %2699 = vrot.lane.b32.xlu0 %v2371, 8
        %v2700 = vpop.permute.xlu0 %2699
        %2701 = vrot.lane.b32.xlu0 %v2374, 8
        %v2702 = vpop.permute.xlu0 %2701
        %2703 = vrot.lane.b32.xlu0 %v2379, 8
        %v2704 = vpop.permute.xlu0 %2703
        %2705 = vrot.lane.b32.xlu0 %v2382, 8
        %v2706 = vpop.permute.xlu0 %2705
        %2707 = vrot.lane.b32.xlu0 %v2387, 8
        %v2708 = vpop.permute.xlu0 %2707
        %2709 = vrot.lane.b32.xlu0 %v2390, 8
        %v2710 = vpop.permute.xlu0 %2709
        %2711 = vrot.lane.b32.xlu0 %v2395, 8
        %v2712 = vpop.permute.xlu0 %2711
        %2713 = vrot.lane.b32.xlu0 %v2398, 8
        %v2714 = vpop.permute.xlu0 %2713
        %2731 = vrot.lane.b32.xlu0 %v2629, 12
        %v2732 = vpop.permute.xlu0 %2731
        %2733 = vrot.lane.b32.xlu0 %v2632, 12
        %v2734 = vpop.permute.xlu0 %2733
        %2735 = vrot.lane.b32.xlu0 %v2637, 12
        %v2736 = vpop.permute.xlu0 %2735
        %2737 = vrot.lane.b32.xlu0 %v2640, 12
        %v2738 = vpop.permute.xlu0 %2737
        %2739 = vrot.lane.b32.xlu0 %v2645, 12
        %v2740 = vpop.permute.xlu0 %2739
        %2741 = vrot.lane.b32.xlu0 %v2648, 12
        %v2742 = vpop.permute.xlu0 %2741
        %2743 = vrot.lane.b32.xlu0 %v2653, 12
        %v2744 = vpop.permute.xlu0 %2743
        %2745 = vrot.lane.b32.xlu0 %v2656, 12
        %v2746 = vpop.permute.xlu0 %2745
        %v2755 = vsel %vm835, %v1815, %v2668
        %v2756 = vsel %vm835, %v1818, %v2670
        %v2757 = vsel %vm835, %v1823, %v2672
        %v2758 = vsel %vm835, %v1826, %v2674
        %v2759 = vsel %vm835, %v1831, %v2676
        %v2760 = vsel %vm835, %v1834, %v2678
        %v2761 = vsel %vm835, %v1839, %v2680
        %v2762 = vsel %vm835, %v1842, %v2682
        %v2763 = vsel %vm561, %v2755, %v2700
        %v2764 = vsel %vm561, %v2756, %v2702
        %v2765 = vsel %vm561, %v2757, %v2704
        %v2766 = vsel %vm561, %v2758, %v2706
        %v2767 = vsel %vm561, %v2759, %v2708
        %v2768 = vsel %vm561, %v2760, %v2710
        %v2769 = vsel %vm561, %v2761, %v2712
        %v2770 = vsel %vm561, %v2762, %v2714
        %v2771 = vsel %vm852, %v2763, %v2732
        %v2772 = vsel %vm852, %v2764, %v2734
        %v2773 = vsel %vm852, %v2765, %v2736
        %v2774 = vsel %vm852, %v2766, %v2738
        %v2775 = vsel %vm852, %v2767, %v2740
        %v2776 = vsel %vm852, %v2768, %v2742
        %v2777 = vsel %vm852, %v2769, %v2744
        %v2778 = vsel %vm852, %v2770, %v2746
        %v2779 = vld [vmem:[%s441] sm:$0x7]
        %v2780 = vlaneseq
        %v2781 = vshrl.u32 %v2780, 7
        %v2782 = vsub.s32 0, %v2781
        %v2783 = vrot.slane %v2779, %v2782
        %v2784 = vmul.f32 %v2771, %v2783
        %v2785 = vmul.f32 %v2772, %v2783
        %v2786 = vmul.f32 %v2773, %v2783
        %v2787 = vmul.f32 %v2774, %v2783
        %v2788 = vmul.f32 %v2775, %v2783
        %v2789 = vmul.f32 %v2776, %v2783
        %v2790 = vmul.f32 %v2777, %v2783
        %v2791 = vmul.f32 %v2778, %v2783
        %v2792 = vlaneseq
        %v2793 = vshrl.u32 %v2792, 7
        %v2794 = vsub.s32 1, %v2793
        %v2795 = vrot.slane %v2779, %v2794
        %v2796 = vadd.f32 %v2784, %v2795
        %v2797 = vadd.f32 %v2785, %v2795
        %v2798 = vadd.f32 %v2786, %v2795
        %v2799 = vadd.f32 %v2787, %v2795
        %v2800 = vadd.f32 %v2788, %v2795
        %v2801 = vadd.f32 %v2789, %v2795
        %v2802 = vadd.f32 %v2790, %v2795
        %v2803 = vadd.f32 %v2791, %v2795
        %vm2804 = vcmp.ge.f32.partialorder %v2796, 0.0
        %vm2805 = vcmp.ge.f32.partialorder %v2797, 0.0
        %vm2806 = vcmp.ge.f32.partialorder %v2798, 0.0
        %vm2807 = vcmp.ge.f32.partialorder %v2799, 0.0
        %vm2808 = vcmp.ge.f32.partialorder %v2800, 0.0
        %vm2809 = vcmp.ge.f32.partialorder %v2801, 0.0
        %vm2810 = vcmp.ge.f32.partialorder %v2802, 0.0
        %vm2811 = vcmp.ge.f32.partialorder %v2803, 0.0
        %v2812 = vmul.f32 %v2796, 0.01
        %v2813 = vmul.f32 %v2797, 0.01
        %v2814 = vmul.f32 %v2798, 0.01
        %v2815 = vmul.f32 %v2799, 0.01
        %v2816 = vmul.f32 %v2800, 0.01
        %v2817 = vmul.f32 %v2801, 0.01
        %v2818 = vmul.f32 %v2802, 0.01
        %v2819 = vmul.f32 %v2803, 0.01
        %v2820 = vsel %vm2804, %v2796, %v2812
        %v2821 = vsel %vm2805, %v2797, %v2813
        %v2822 = vsel %vm2806, %v2798, %v2814
        %v2823 = vsel %vm2807, %v2799, %v2815
        %v2824 = vsel %vm2808, %v2800, %v2816
        %v2825 = vsel %vm2809, %v2801, %v2817
        %v2826 = vsel %vm2810, %v2802, %v2818
        %v2827 = vsel %vm2811, %v2803, %v2819
        %s2828 = scalar_lea.vmem [#allocation3], 16
        %2829 = vst.msk [vmem:[%s2828 + $0x1] sm:$0xff] %vm471, %v2820
        %2830 = vst.msk [vmem:[%s2828 + $0x11] sm:$0xff] %vm471, %v2821
        %2831 = vst.msk [vmem:[%s2828 + $0x21] sm:$0xff] %vm471, %v2822
        %2832 = vst.msk [vmem:[%s2828 + $0x31] sm:$0xff] %vm471, %v2823
        %2833 = vst.msk [vmem:[%s2828 + $0x41] sm:$0xff] %vm471, %v2824
        %2834 = vst.msk [vmem:[%s2828 + $0x51] sm:$0xff] %vm471, %v2825
        %2835 = vst.msk [vmem:[%s2828 + $0x61] sm:$0xff] %vm471, %v2826
        %2836 = vst.msk [vmem:[%s2828 + $0x71] sm:$0xff] %vm471, %v2827
        %v2837 = vld [vmem:[%s7] sm:$0xf]
        %v2838 = vld [vmem:[%s7 + $0x4] sm:$0xf]
        %v2839 = vld [vmem:[%s7 + $0x8] sm:$0xf]
        %v2840 = vld [vmem:[%s7 + $0xc] sm:$0xf]
        %v2841 = vld [vmem:[%s7 + $0x10] sm:$0x3]
        %v2842 = vld [vmem:[#allocation3] sm:$0xff]
        %v2843 = vld [vmem:[#allocation3 + $0x10] sm:$0xff]
        %v2844 = vld [vmem:[#allocation3 + $0x20] sm:$0xff]
        %v2845 = vld [vmem:[#allocation3 + $0x30] sm:$0xff]
        %v2846 = vld [vmem:[#allocation3 + $0x40] sm:$0xff]
        %v2847 = vld [vmem:[#allocation3 + $0x50] sm:$0xff]
        %v2848 = vld [vmem:[#allocation3 + $0x60] sm:$0xff]
        %v2849 = vld [vmem:[#allocation3 + $0x70] sm:$0xff]
        %v2850 = vld [vmem:[#allocation3 + $0x80] sm:$0xff]
        %v2851 = vld [vmem:[#allocation3 + $0x90] sm:$0xff]
        %v2852 = vpack.c.bf16 %v2842, %v2842
        %v2853 = vpack.c.bf16 %v2843, %v2843
        %v2854 = vpack.c.bf16 %v2844, %v2844
        %v2855 = vpack.c.bf16 %v2845, %v2845
        %v2856 = vpack.c.bf16 %v2846, %v2846
        %v2857 = vpack.c.bf16 %v2847, %v2847
        %v2858 = vpack.c.bf16 %v2848, %v2848
        %v2859 = vpack.c.bf16 %v2849, %v2849
        %v2860 = vpack.c.bf16 %v2850, %v2850
        %v2861 = vpack.c.bf16 %v2851, %v2851
        %v2862 = vld [vmem:[#allocation3 + $0x1] sm:$0xff]
        %v2863 = vld [vmem:[#allocation3 + $0x11] sm:$0xff]
        %v2864 = vld [vmem:[#allocation3 + $0x21] sm:$0xff]
        %v2865 = vld [vmem:[#allocation3 + $0x31] sm:$0xff]
        %v2866 = vld [vmem:[#allocation3 + $0x41] sm:$0xff]
        %v2867 = vld [vmem:[#allocation3 + $0x51] sm:$0xff]
        %v2868 = vld [vmem:[#allocation3 + $0x61] sm:$0xff]
        %v2869 = vld [vmem:[#allocation3 + $0x71] sm:$0xff]
        %v2870 = vld [vmem:[#allocation3 + $0x81] sm:$0xff]
        %v2871 = vld [vmem:[#allocation3 + $0x91] sm:$0xff]
        %v2872 = vpack.c.bf16 %v2862, %v2862
        %v2873 = vpack.c.bf16 %v2863, %v2863
        %v2874 = vpack.c.bf16 %v2864, %v2864
        %v2875 = vpack.c.bf16 %v2865, %v2865
        %v2876 = vpack.c.bf16 %v2866, %v2866
        %v2877 = vpack.c.bf16 %v2867, %v2867
        %v2878 = vpack.c.bf16 %v2868, %v2868
        %v2879 = vpack.c.bf16 %v2869, %v2869
        %v2880 = vpack.c.bf16 %v2870, %v2870
        %v2881 = vpack.c.bf16 %v2871, %v2871
        %v2882 = vld [vmem:[#allocation3 + $0x2] sm:$0xff]
        %v2883 = vld [vmem:[#allocation3 + $0x12] sm:$0xff]
        %v2884 = vld [vmem:[#allocation3 + $0x22] sm:$0xff]
        %v2885 = vld [vmem:[#allocation3 + $0x32] sm:$0xff]
        %v2886 = vld [vmem:[#allocation3 + $0x42] sm:$0xff]
        %v2887 = vld [vmem:[#allocation3 + $0x52] sm:$0xff]
        %v2888 = vld [vmem:[#allocation3 + $0x62] sm:$0xff]
        %v2889 = vld [vmem:[#allocation3 + $0x72] sm:$0xff]
        %v2890 = vld [vmem:[#allocation3 + $0x82] sm:$0xff]
        %v2891 = vld [vmem:[#allocation3 + $0x92] sm:$0xff]
        %v2892 = vpack.c.bf16 %v2882, %v2882
        %v2893 = vpack.c.bf16 %v2883, %v2883
        %v2894 = vpack.c.bf16 %v2884, %v2884
        %v2895 = vpack.c.bf16 %v2885, %v2885
        %v2896 = vpack.c.bf16 %v2886, %v2886
        %v2897 = vpack.c.bf16 %v2887, %v2887
        %v2898 = vpack.c.bf16 %v2888, %v2888
        %v2899 = vpack.c.bf16 %v2889, %v2889
        %v2900 = vpack.c.bf16 %v2890, %v2890
        %v2901 = vpack.c.bf16 %v2891, %v2891
        %2910 = vrot.lane.b32.xlu0 %v2852, 116
        %v2911 = vpop.permute.xlu0 %2910
        %2912 = vrot.lane.b32.xlu0 %v2853, 116
        %v2913 = vpop.permute.xlu0 %2912
        %2914 = vrot.lane.b32.xlu0 %v2854, 116
        %v2915 = vpop.permute.xlu0 %2914
        %2916 = vrot.lane.b32.xlu0 %v2855, 116
        %v2917 = vpop.permute.xlu0 %2916
        %2918 = vrot.lane.b32.xlu0 %v2856, 116
        %v2919 = vpop.permute.xlu0 %2918
        %2920 = vrot.lane.b32.xlu0 %v2857, 116
        %v2921 = vpop.permute.xlu0 %2920
        %2922 = vrot.lane.b32.xlu0 %v2858, 116
        %v2923 = vpop.permute.xlu0 %2922
        %2924 = vrot.lane.b32.xlu0 %v2859, 116
        %v2925 = vpop.permute.xlu0 %2924
        %2934 = vrot.lane.b32.xlu0 %v2872, 124
        %v2935 = vpop.permute.xlu0 %2934
        %2936 = vrot.lane.b32.xlu0 %v2873, 124
        %v2937 = vpop.permute.xlu0 %2936
        %2938 = vrot.lane.b32.xlu0 %v2874, 124
        %v2939 = vpop.permute.xlu0 %2938
        %2940 = vrot.lane.b32.xlu0 %v2875, 124
        %v2941 = vpop.permute.xlu0 %2940
        %2942 = vrot.lane.b32.xlu0 %v2876, 124
        %v2943 = vpop.permute.xlu0 %2942
        %2944 = vrot.lane.b32.xlu0 %v2877, 124
        %v2945 = vpop.permute.xlu0 %2944
        %2946 = vrot.lane.b32.xlu0 %v2878, 124
        %v2947 = vpop.permute.xlu0 %2946
        %2948 = vrot.lane.b32.xlu0 %v2879, 124
        %v2949 = vpop.permute.xlu0 %2948
        %2951 = vrot.lane.b32.xlu0 %v2853, 8
        %v2952 = vpop.permute.xlu0 %2951
        %2953 = vrot.lane.b32.xlu0 %v2854, 8
        %v2954 = vpop.permute.xlu0 %2953
        %2955 = vrot.lane.b32.xlu0 %v2855, 8
        %v2956 = vpop.permute.xlu0 %2955
        %2957 = vrot.lane.b32.xlu0 %v2856, 8
        %v2958 = vpop.permute.xlu0 %2957
        %2959 = vrot.lane.b32.xlu0 %v2857, 8
        %v2960 = vpop.permute.xlu0 %2959
        %2961 = vrot.lane.b32.xlu0 %v2858, 8
        %v2962 = vpop.permute.xlu0 %2961
        %2963 = vrot.lane.b32.xlu0 %v2859, 8
        %v2964 = vpop.permute.xlu0 %2963
        %2965 = vrot.lane.b32.xlu0 %v2860, 8
        %v2966 = vpop.permute.xlu0 %2965
        %2968 = vrot.lane.b32.xlu0 %v2873, 16
        %v2969 = vpop.permute.xlu0 %2968
        %2970 = vrot.lane.b32.xlu0 %v2874, 16
        %v2971 = vpop.permute.xlu0 %2970
        %2972 = vrot.lane.b32.xlu0 %v2875, 16
        %v2973 = vpop.permute.xlu0 %2972
        %2974 = vrot.lane.b32.xlu0 %v2876, 16
        %v2975 = vpop.permute.xlu0 %2974
        %2976 = vrot.lane.b32.xlu0 %v2877, 16
        %v2977 = vpop.permute.xlu0 %2976
        %2978 = vrot.lane.b32.xlu0 %v2878, 16
        %v2979 = vpop.permute.xlu0 %2978
        %2980 = vrot.lane.b32.xlu0 %v2879, 16
        %v2981 = vpop.permute.xlu0 %2980
        %2982 = vrot.lane.b32.xlu0 %v2880, 16
        %v2983 = vpop.permute.xlu0 %2982
        %2984 = vrot.lane.b32.xlu0 %v2853, 12
        %v2985 = vpop.permute.xlu0 %2984
        %2986 = vrot.lane.b32.xlu0 %v2854, 12
        %v2987 = vpop.permute.xlu0 %2986
        %2988 = vrot.lane.b32.xlu0 %v2855, 12
        %v2989 = vpop.permute.xlu0 %2988
        %2990 = vrot.lane.b32.xlu0 %v2856, 12
        %v2991 = vpop.permute.xlu0 %2990
        %2992 = vrot.lane.b32.xlu0 %v2857, 12
        %v2993 = vpop.permute.xlu0 %2992
        %2994 = vrot.lane.b32.xlu0 %v2858, 12
        %v2995 = vpop.permute.xlu0 %2994
        %2996 = vrot.lane.b32.xlu0 %v2859, 12
        %v2997 = vpop.permute.xlu0 %2996
        %2998 = vrot.lane.b32.xlu0 %v2860, 12
        %v2999 = vpop.permute.xlu0 %2998
        %3000 = vrot.lane.b32.xlu0 %v2873, 20
        %v3001 = vpop.permute.xlu0 %3000
        %3002 = vrot.lane.b32.xlu0 %v2874, 20
        %v3003 = vpop.permute.xlu0 %3002
        %3004 = vrot.lane.b32.xlu0 %v2875, 20
        %v3005 = vpop.permute.xlu0 %3004
        %3006 = vrot.lane.b32.xlu0 %v2876, 20
        %v3007 = vpop.permute.xlu0 %3006
        %3008 = vrot.lane.b32.xlu0 %v2877, 20
        %v3009 = vpop.permute.xlu0 %3008
        %3010 = vrot.lane.b32.xlu0 %v2878, 20
        %v3011 = vpop.permute.xlu0 %3010
        %3012 = vrot.lane.b32.xlu0 %v2879, 20
        %v3013 = vpop.permute.xlu0 %3012
        %3014 = vrot.lane.b32.xlu0 %v2880, 20
        %v3015 = vpop.permute.xlu0 %3014
        %v3018 = vsel %vm835, %v2911, %v2935
        %v3021 = vsel %vm835, %v2913, %v2937
        %v3024 = vsel %vm835, %v2915, %v2939
        %v3027 = vsel %vm835, %v2917, %v2941
        %v3030 = vsel %vm835, %v2919, %v2943
        %v3033 = vsel %vm835, %v2921, %v2945
        %v3036 = vsel %vm835, %v2923, %v2947
        %v3039 = vsel %vm835, %v2925, %v2949
        %v3040 = vsel %vm561, %v3018, %v2935
        %v3041 = vsel %vm561, %v3021, %v2937
        %v3042 = vsel %vm561, %v3024, %v2939
        %v3043 = vsel %vm561, %v3027, %v2941
        %v3044 = vsel %vm561, %v3030, %v2943
        %v3045 = vsel %vm561, %v3033, %v2945
        %v3046 = vsel %vm561, %v3036, %v2947
        %v3047 = vsel %vm561, %v3039, %v2949
        %v3049 = vsel %vm852, %v3040, %v2952
        %v3051 = vsel %vm852, %v3041, %v2954
        %v3053 = vsel %vm852, %v3042, %v2956
        %v3055 = vsel %vm852, %v3043, %v2958
        %v3057 = vsel %vm852, %v3044, %v2960
        %v3059 = vsel %vm852, %v3045, %v2962
        %v3061 = vsel %vm852, %v3046, %v2964
        %v3063 = vsel %vm852, %v3047, %v2966
        %v3065 = vsel %vm471, %v3049, %v2969
        %v3067 = vsel %vm471, %v3051, %v2971
        %v3069 = vsel %vm471, %v3053, %v2973
        %v3071 = vsel %vm471, %v3055, %v2975
        %v3073 = vsel %vm471, %v3057, %v2977
        %v3075 = vsel %vm471, %v3059, %v2979
        %v3077 = vsel %vm471, %v3061, %v2981
        %v3079 = vsel %vm471, %v3063, %v2983
        %v3080 = vsel %vm869, %v3065, %v2969
        %v3081 = vsel %vm869, %v3067, %v2971
        %v3082 = vsel %vm869, %v3069, %v2973
        %v3083 = vsel %vm869, %v3071, %v2975
        %v3084 = vsel %vm869, %v3073, %v2977
        %v3085 = vsel %vm869, %v3075, %v2979
        %v3086 = vsel %vm869, %v3077, %v2981
        %v3087 = vsel %vm869, %v3079, %v2983
        %v3089 = vsel %vm878, %v3080, %v2985
        %v3091 = vsel %vm878, %v3081, %v2987
        %v3093 = vsel %vm878, %v3082, %v2989
        %v3095 = vsel %vm878, %v3083, %v2991
        %v3097 = vsel %vm878, %v3084, %v2993
        %v3099 = vsel %vm878, %v3085, %v2995
        %v3101 = vsel %vm878, %v3086, %v2997
        %v3103 = vsel %vm878, %v3087, %v2999
        %v3105 = vsel %vm887, %v3089, %v3001
        %v3107 = vsel %vm887, %v3091, %v3003
        %v3109 = vsel %vm887, %v3093, %v3005
        %v3111 = vsel %vm887, %v3095, %v3007
        %v3113 = vsel %vm887, %v3097, %v3009
        %v3115 = vsel %vm887, %v3099, %v3011
        %v3117 = vsel %vm887, %v3101, %v3013
        %v3119 = vsel %vm887, %v3103, %v3015
        %v3120 = vsel %vm443, %v3105, %v3001
        %v3121 = vsel %vm443, %v3107, %v3003
        %v3122 = vsel %vm443, %v3109, %v3005
        %v3123 = vsel %vm443, %v3111, %v3007
        %v3124 = vsel %vm443, %v3113, %v3009
        %v3125 = vsel %vm443, %v3115, %v3011
        %v3126 = vsel %vm443, %v3117, %v3013
        %v3127 = vsel %vm443, %v3119, %v3015
        %v3136 = vunpack.c.l.b16 %v3120
        %v3137 = vunpack.c.l.b16 %v3121
        %v3138 = vunpack.c.l.b16 %v3122
        %v3139 = vunpack.c.l.b16 %v3123
        %v3140 = vunpack.c.l.b16 %v3124
        %v3141 = vunpack.c.l.b16 %v3125
        %v3142 = vunpack.c.l.b16 %v3126
        %v3143 = vunpack.c.l.b16 %v3127
        %v3144 = vpack.c.b16 %v3137, %v3136
        %v3145 = vpack.c.b16 %v3139, %v3138
        %v3146 = vpack.c.b16 %v3141, %v3140
        %v3147 = vpack.c.b16 %v3143, %v3142
        %v3153 = vunpack.c.l.b16 %v2837
        %v3154 = vunpack.c.l.b16 %v2838
        %v3155 = vunpack.c.l.b16 %v2839
        %v3156 = vunpack.c.l.b16 %v2840
        %v3157 = vunpack.c.l.b16 %v2841
        %v3158 = vpack.c.b16 %v3154, %v3153
        %v3159 = vpack.c.b16 %v3156, %v3155
        %v3160 = vpack.c.b16 %v3157, %v3157
        %vm3163 = vcmask 293888
        %v3165 = vsel %vm3163, %v3144, 0
        %v3168 = vsel %vm3163, %v3145, 0
        %v3171 = vsel %vm3163, %v3146, 0
        %v3174 = vsel %vm3163, %v3147, 0
        %vm3176 = vcmask 1041408
        %v3178 = vsel %vm3176, %v3160, 0
        %3180 = vmatprep.subr.bf16.mxu0 0
        %3181 = vmatpush1.bf16.msra.mxu0 %v3158
        %3182 = vmatprep.subr.bf16.mxu0 0
        %3183 = vmatpush1.bf16.msra.mxu0 %v3159
        %3184 = vmatprep.subr.bf16.mxu0 0
        %3185 = vmatpush1.bf16.msra.mxu0 %v3178
        %3186 = vmatprep.subr.bf16.mxu0 0
        %3187 = vmatpush1.bf16.msra.mxu0 0
        %3188 = vmatprep.subr.bf16.mxu0 0
        %3189 = vmatpush1.bf16.msra.mxu0 0
        %3190 = vmatprep.subr.bf16.mxu0 0
        %3191 = vmatpush1.bf16.msra.mxu0 0
        %3192 = vmatprep.subr.bf16.mxu0 0
        %3193 = vmatpush1.bf16.msra.mxu0 0
        %3194 = vmatprep.subr.bf16.mxu0 0
        %3195 = vmatpush1.bf16.msra.mxu0 0
        %3196 = vmatprep.subr.bf16.mxu0 0
        %3197 = vmatpush1.bf16.msra.mxu0 0
        %3198 = vmatprep.subr.bf16.mxu0 0
        %3199 = vmatpush1.bf16.msra.mxu0 0
        %3200 = vmatprep.subr.bf16.mxu0 0
        %3201 = vmatpush1.bf16.msra.mxu0 0
        %3202 = vmatprep.subr.bf16.mxu0 0
        %3203 = vmatpush1.bf16.msra.mxu0 0
        %3204 = vmatprep.subr.bf16.mxu0 0
        %3205 = vmatpush1.bf16.msra.mxu0 0
        %3206 = vmatprep.subr.bf16.mxu0 0
        %3207 = vmatpush1.bf16.msra.mxu0 0
        %3208 = vmatprep.subr.bf16.mxu0 0
        %3209 = vmatpush1.bf16.msra.mxu0 0
        %3210 = vmatprep.subr.bf16.mxu0 0
        %3211 = vmatpush1.bf16.msra.mxu0 0
        %3212 = vmatprep.mubr.bf16.mxu0 0
        %3213 = vmatmul.mubr.bf16.gmra.mrb[0].mxu0 %v3165
        %v3214 = vpop.f32.mrb[0].mxu0
        %v3215 = vadd.f32 0.0, %v3214
        %v3216 = vpop.f32.mrb[0].mxu0
        %v3217 = vpop.f32.mrb[0].mxu0
        %v3218 = vadd.f32 0.0, %v3217
        %v3219 = vpop.f32.mrb[0].mxu0
        %3220 = vmatprep.mubr.bf16.mxu0 0
        %3221 = vmatmul.mubr.bf16.gmra.mrb[0].mxu0 %v3168
        %v3222 = vpop.f32.mrb[0].mxu0
        %v3223 = vadd.f32 0.0, %v3222
        %v3224 = vpop.f32.mrb[0].mxu0
        %v3225 = vpop.f32.mrb[0].mxu0
        %v3226 = vadd.f32 0.0, %v3225
        %v3227 = vpop.f32.mrb[0].mxu0
        %3228 = vmatprep.mubr.bf16.mxu0 0
        %3229 = vmatmul.mubr.bf16.gmra.mrb[0].mxu0 %v3171
        %v3230 = vpop.f32.mrb[0].mxu0
        %v3231 = vadd.f32 0.0, %v3230
        %v3232 = vpop.f32.mrb[0].mxu0
        %v3233 = vpop.f32.mrb[0].mxu0
        %v3234 = vadd.f32 0.0, %v3233
        %v3235 = vpop.f32.mrb[0].mxu0
        %3236 = vmatprep.mubr.bf16.mxu0 0
        %3237 = vmatmul.mubr.bf16.gmra.mrb[0].mxu0 %v3174
        %v3238 = vpop.f32.mrb[0].mxu0
        %v3239 = vadd.f32 0.0, %v3238
        %v3240 = vpop.f32.mrb[0].mxu0
        %v3241 = vpop.f32.mrb[0].mxu0
        %v3242 = vadd.f32 0.0, %v3241
        %v3243 = vpop.f32.mrb[0].mxu0
        %3244 = vdwg.mxu0
        %3245 = vrot.lane.b32.xlu0 %v2872, 120
        %v3246 = vpop.permute.xlu0 %3245
        %3247 = vrot.lane.b32.xlu0 %v2873, 120
        %v3248 = vpop.permute.xlu0 %3247
        %3249 = vrot.lane.b32.xlu0 %v2874, 120
        %v3250 = vpop.permute.xlu0 %3249
        %3251 = vrot.lane.b32.xlu0 %v2875, 120
        %v3252 = vpop.permute.xlu0 %3251
        %3253 = vrot.lane.b32.xlu0 %v2876, 120
        %v3254 = vpop.permute.xlu0 %3253
        %3255 = vrot.lane.b32.xlu0 %v2877, 120
        %v3256 = vpop.permute.xlu0 %3255
        %3257 = vrot.lane.b32.xlu0 %v2878, 120
        %v3258 = vpop.permute.xlu0 %3257
        %3259 = vrot.lane.b32.xlu0 %v2879, 120
        %v3260 = vpop.permute.xlu0 %3259
        %3261 = vrot.lane.b32.xlu0 %v2873, 12
        %v3262 = vpop.permute.xlu0 %3261
        %3263 = vrot.lane.b32.xlu0 %v2874, 12
        %v3264 = vpop.permute.xlu0 %3263
        %3265 = vrot.lane.b32.xlu0 %v2875, 12
        %v3266 = vpop.permute.xlu0 %3265
        %3267 = vrot.lane.b32.xlu0 %v2876, 12
        %v3268 = vpop.permute.xlu0 %3267
        %3269 = vrot.lane.b32.xlu0 %v2877, 12
        %v3270 = vpop.permute.xlu0 %3269
        %3271 = vrot.lane.b32.xlu0 %v2878, 12
        %v3272 = vpop.permute.xlu0 %3271
        %3273 = vrot.lane.b32.xlu0 %v2879, 12
        %v3274 = vpop.permute.xlu0 %3273
        %3275 = vrot.lane.b32.xlu0 %v2880, 12
        %v3276 = vpop.permute.xlu0 %3275
        %3285 = vrot.lane.b32.xlu0 %v2893, 20
        %v3286 = vpop.permute.xlu0 %3285
        %3287 = vrot.lane.b32.xlu0 %v2894, 20
        %v3288 = vpop.permute.xlu0 %3287
        %3289 = vrot.lane.b32.xlu0 %v2895, 20
        %v3290 = vpop.permute.xlu0 %3289
        %3291 = vrot.lane.b32.xlu0 %v2896, 20
        %v3292 = vpop.permute.xlu0 %3291
        %3293 = vrot.lane.b32.xlu0 %v2897, 20
        %v3294 = vpop.permute.xlu0 %3293
        %3295 = vrot.lane.b32.xlu0 %v2898, 20
        %v3296 = vpop.permute.xlu0 %3295
        %3297 = vrot.lane.b32.xlu0 %v2899, 20
        %v3298 = vpop.permute.xlu0 %3297
        %3299 = vrot.lane.b32.xlu0 %v2900, 20
        %v3300 = vpop.permute.xlu0 %3299
        %3301 = vrot.lane.b32.xlu0 %v2893, 24
        %v3302 = vpop.permute.xlu0 %3301
        %3303 = vrot.lane.b32.xlu0 %v2894, 24
        %v3304 = vpop.permute.xlu0 %3303
        %3305 = vrot.lane.b32.xlu0 %v2895, 24
        %v3306 = vpop.permute.xlu0 %3305
        %3307 = vrot.lane.b32.xlu0 %v2896, 24
        %v3308 = vpop.permute.xlu0 %3307
        %3309 = vrot.lane.b32.xlu0 %v2897, 24
        %v3310 = vpop.permute.xlu0 %3309
        %3311 = vrot.lane.b32.xlu0 %v2898, 24
        %v3312 = vpop.permute.xlu0 %3311
        %3313 = vrot.lane.b32.xlu0 %v2899, 24
        %v3314 = vpop.permute.xlu0 %3313
        %3315 = vrot.lane.b32.xlu0 %v2900, 24
        %v3316 = vpop.permute.xlu0 %3315
        %v3326 = vsel %vm561, %v3246, %v2892
        %v3328 = vsel %vm561, %v3248, %v2893
        %v3330 = vsel %vm561, %v3250, %v2894
        %v3332 = vsel %vm561, %v3252, %v2895
        %v3334 = vsel %vm561, %v3254, %v2896
        %v3336 = vsel %vm561, %v3256, %v2897
        %v3338 = vsel %vm561, %v3258, %v2898
        %v3340 = vsel %vm561, %v3260, %v2899
        %v3342 = vsel %vm852, %v3326, %v3262
        %v3344 = vsel %vm852, %v3328, %v3264
        %v3346 = vsel %vm852, %v3330, %v3266
        %v3348 = vsel %vm852, %v3332, %v3268
        %v3350 = vsel %vm852, %v3334, %v3270
        %v3352 = vsel %vm852, %v3336, %v3272
        %v3354 = vsel %vm852, %v3338, %v3274
        %v3356 = vsel %vm852, %v3340, %v3276
        %v3357 = vsel %vm471, %v3342, %v3262
        %v3358 = vsel %vm471, %v3344, %v3264
        %v3359 = vsel %vm471, %v3346, %v3266
        %v3360 = vsel %vm471, %v3348, %v3268
        %v3361 = vsel %vm471, %v3350, %v3270
        %v3362 = vsel %vm471, %v3352, %v3272
        %v3363 = vsel %vm471, %v3354, %v3274
        %v3364 = vsel %vm471, %v3356, %v3276
        %v3366 = vsel %vm869, %v3357, %v3286
        %v3368 = vsel %vm869, %v3358, %v3288
        %v3370 = vsel %vm869, %v3359, %v3290
        %v3372 = vsel %vm869, %v3360, %v3292
        %v3374 = vsel %vm869, %v3361, %v3294
        %v3376 = vsel %vm869, %v3362, %v3296
        %v3378 = vsel %vm869, %v3363, %v3298
        %v3380 = vsel %vm869, %v3364, %v3300
        %v3381 = vsel %vm878, %v3366, %v2969
        %v3382 = vsel %vm878, %v3368, %v2971
        %v3383 = vsel %vm878, %v3370, %v2973
        %v3384 = vsel %vm878, %v3372, %v2975
        %v3385 = vsel %vm878, %v3374, %v2977
        %v3386 = vsel %vm878, %v3376, %v2979
        %v3387 = vsel %vm878, %v3378, %v2981
        %v3388 = vsel %vm878, %v3380, %v2983
        %v3389 = vsel %vm887, %v3381, %v2969
        %v3390 = vsel %vm887, %v3382, %v2971
        %v3391 = vsel %vm887, %v3383, %v2973
        %v3392 = vsel %vm887, %v3384, %v2975
        %v3393 = vsel %vm887, %v3385, %v2977
        %v3394 = vsel %vm887, %v3386, %v2979
        %v3395 = vsel %vm887, %v3387, %v2981
        %v3396 = vsel %vm887, %v3388, %v2983
        %v3398 = vsel %vm443, %v3389, %v3302
        %v3400 = vsel %vm443, %v3390, %v3304
        %v3402 = vsel %vm443, %v3391, %v3306
        %v3404 = vsel %vm443, %v3392, %v3308
        %v3406 = vsel %vm443, %v3393, %v3310
        %v3408 = vsel %vm443, %v3394, %v3312
        %v3410 = vsel %vm443, %v3395, %v3314
        %v3412 = vsel %vm443, %v3396, %v3316
        %v3421 = vunpack.c.l.b16 %v3398
        %v3422 = vunpack.c.l.b16 %v3400
        %v3423 = vunpack.c.l.b16 %v3402
        %v3424 = vunpack.c.l.b16 %v3404
        %v3425 = vunpack.c.l.b16 %v3406
        %v3426 = vunpack.c.l.b16 %v3408
        %v3427 = vunpack.c.l.b16 %v3410
        %v3428 = vunpack.c.l.b16 %v3412
        %v3429 = vpack.c.b16 %v3422, %v3421
        %v3430 = vpack.c.b16 %v3424, %v3423
        %v3431 = vpack.c.b16 %v3426, %v3425
        %v3432 = vpack.c.b16 %v3428, %v3427
        %v3434 = vsel %vm3163, %v3429, 0
        %v3437 = vsel %vm3163, %v3430, 0
        %v3440 = vsel %vm3163, %v3431, 0
        %v3443 = vsel %vm3163, %v3432, 0
        %3445 = vmatprep.subr.bf16.mxu0 0
        %3446 = vmatpush1.bf16.msra.mxu0 %v3158
        %3447 = vmatprep.subr.bf16.mxu0 0
        %3448 = vmatpush1.bf16.msra.mxu0 %v3159
        %3449 = vmatprep.subr.bf16.mxu0 0
        %3450 = vmatpush1.bf16.msra.mxu0 %v3178
        %3451 = vmatprep.subr.bf16.mxu0 0
        %3452 = vmatpush1.bf16.msra.mxu0 0
        %3453 = vmatprep.subr.bf16.mxu0 0
        %3454 = vmatpush1.bf16.msra.mxu0 0
        %3455 = vmatprep.subr.bf16.mxu0 0
        %3456 = vmatpush1.bf16.msra.mxu0 0
        %3457 = vmatprep.subr.bf16.mxu0 0
        %3458 = vmatpush1.bf16.msra.mxu0 0
        %3459 = vmatprep.subr.bf16.mxu0 0
        %3460 = vmatpush1.bf16.msra.mxu0 0
        %3461 = vmatprep.subr.bf16.mxu0 0
        %3462 = vmatpush1.bf16.msra.mxu0 0
        %3463 = vmatprep.subr.bf16.mxu0 0
        %3464 = vmatpush1.bf16.msra.mxu0 0
        %3465 = vmatprep.subr.bf16.mxu0 0
        %3466 = vmatpush1.bf16.msra.mxu0 0
        %3467 = vmatprep.subr.bf16.mxu0 0
        %3468 = vmatpush1.bf16.msra.mxu0 0
        %3469 = vmatprep.subr.bf16.mxu0 0
        %3470 = vmatpush1.bf16.msra.mxu0 0
        %3471 = vmatprep.subr.bf16.mxu0 0
        %3472 = vmatpush1.bf16.msra.mxu0 0
        %3473 = vmatprep.subr.bf16.mxu0 0
        %3474 = vmatpush1.bf16.msra.mxu0 0
        %3475 = vmatprep.subr.bf16.mxu0 0
        %3476 = vmatpush1.bf16.msra.mxu0 0
        %3477 = vmatprep.mubr.bf16.mxu0 0
        %3478 = vmatmul.mubr.bf16.gmra.mrb[0].mxu0 %v3434
        %v3479 = vpop.f32.mrb[0].mxu0
        %v3480 = vadd.f32 0.0, %v3479
        %v3481 = vpop.f32.mrb[0].mxu0
        %v3482 = vpop.f32.mrb[0].mxu0
        %v3483 = vadd.f32 0.0, %v3482
        %v3484 = vpop.f32.mrb[0].mxu0
        %3485 = vmatprep.mubr.bf16.mxu0 0
        %3486 = vmatmul.mubr.bf16.gmra.mrb[0].mxu0 %v3437
        %v3487 = vpop.f32.mrb[0].mxu0
        %v3488 = vadd.f32 0.0, %v3487
        %v3489 = vpop.f32.mrb[0].mxu0
        %v3490 = vpop.f32.mrb[0].mxu0
        %v3491 = vadd.f32 0.0, %v3490
        %v3492 = vpop.f32.mrb[0].mxu0
        %3493 = vmatprep.mubr.bf16.mxu0 0
        %3494 = vmatmul.mubr.bf16.gmra.mrb[0].mxu0 %v3440
        %v3495 = vpop.f32.mrb[0].mxu0
        %v3496 = vadd.f32 0.0, %v3495
        %v3497 = vpop.f32.mrb[0].mxu0
        %v3498 = vpop.f32.mrb[0].mxu0
        %v3499 = vadd.f32 0.0, %v3498
        %v3500 = vpop.f32.mrb[0].mxu0
        %3501 = vmatprep.mubr.bf16.mxu0 0
        %3502 = vmatmul.mubr.bf16.gmra.mrb[0].mxu0 %v3443
        %v3503 = vpop.f32.mrb[0].mxu0
        %v3504 = vadd.f32 0.0, %v3503
        %v3505 = vpop.f32.mrb[0].mxu0
        %v3506 = vpop.f32.mrb[0].mxu0
        %v3507 = vadd.f32 0.0, %v3506
        %v3508 = vpop.f32.mrb[0].mxu0
        %3509 = vdwg.mxu0
        %3510 = vrot.lane.b32.xlu0 %v2853, 124
        %v3511 = vpop.permute.xlu0 %3510
        %3512 = vrot.lane.b32.xlu0 %v2854, 124
        %v3513 = vpop.permute.xlu0 %3512
        %3514 = vrot.lane.b32.xlu0 %v2855, 124
        %v3515 = vpop.permute.xlu0 %3514
        %3516 = vrot.lane.b32.xlu0 %v2856, 124
        %v3517 = vpop.permute.xlu0 %3516
        %3518 = vrot.lane.b32.xlu0 %v2857, 124
        %v3519 = vpop.permute.xlu0 %3518
        %3520 = vrot.lane.b32.xlu0 %v2858, 124
        %v3521 = vpop.permute.xlu0 %3520
        %3522 = vrot.lane.b32.xlu0 %v2859, 124
        %v3523 = vpop.permute.xlu0 %3522
        %3524 = vrot.lane.b32.xlu0 %v2860, 124
        %v3525 = vpop.permute.xlu0 %3524
        %3526 = vrot.lane.b32.xlu0 %v2873, 4
        %v3527 = vpop.permute.xlu0 %3526
        %3528 = vrot.lane.b32.xlu0 %v2874, 4
        %v3529 = vpop.permute.xlu0 %3528
        %3530 = vrot.lane.b32.xlu0 %v2875, 4
        %v3531 = vpop.permute.xlu0 %3530
        %3532 = vrot.lane.b32.xlu0 %v2876, 4
        %v3533 = vpop.permute.xlu0 %3532
        %3534 = vrot.lane.b32.xlu0 %v2877, 4
        %v3535 = vpop.permute.xlu0 %3534
        %3536 = vrot.lane.b32.xlu0 %v2878, 4
        %v3537 = vpop.permute.xlu0 %3536
        %3538 = vrot.lane.b32.xlu0 %v2879, 4
        %v3539 = vpop.permute.xlu0 %3538
        %3540 = vrot.lane.b32.xlu0 %v2880, 4
        %v3541 = vpop.permute.xlu0 %3540
        %3542 = vrot.lane.b32.xlu0 %v2873, 8
        %v3543 = vpop.permute.xlu0 %3542
        %3544 = vrot.lane.b32.xlu0 %v2874, 8
        %v3545 = vpop.permute.xlu0 %3544
        %3546 = vrot.lane.b32.xlu0 %v2875, 8
        %v3547 = vpop.permute.xlu0 %3546
        %3548 = vrot.lane.b32.xlu0 %v2876, 8
        %v3549 = vpop.permute.xlu0 %3548
        %3550 = vrot.lane.b32.xlu0 %v2877, 8
        %v3551 = vpop.permute.xlu0 %3550
        %3552 = vrot.lane.b32.xlu0 %v2878, 8
        %v3553 = vpop.permute.xlu0 %3552
        %3554 = vrot.lane.b32.xlu0 %v2879, 8
        %v3555 = vpop.permute.xlu0 %3554
        %3556 = vrot.lane.b32.xlu0 %v2880, 8
        %v3557 = vpop.permute.xlu0 %3556
        %3559 = vrot.lane.b32.xlu0 %v2854, 20
        %v3560 = vpop.permute.xlu0 %3559
        %3561 = vrot.lane.b32.xlu0 %v2855, 20
        %v3562 = vpop.permute.xlu0 %3561
        %3563 = vrot.lane.b32.xlu0 %v2856, 20
        %v3564 = vpop.permute.xlu0 %3563
        %3565 = vrot.lane.b32.xlu0 %v2857, 20
        %v3566 = vpop.permute.xlu0 %3565
        %3567 = vrot.lane.b32.xlu0 %v2858, 20
        %v3568 = vpop.permute.xlu0 %3567
        %3569 = vrot.lane.b32.xlu0 %v2859, 20
        %v3570 = vpop.permute.xlu0 %3569
        %3571 = vrot.lane.b32.xlu0 %v2860, 20
        %v3572 = vpop.permute.xlu0 %3571
        %3573 = vrot.lane.b32.xlu0 %v2861, 20
        %v3574 = vpop.permute.xlu0 %3573
        %3576 = vrot.lane.b32.xlu0 %v2874, 28
        %v3577 = vpop.permute.xlu0 %3576
        %3578 = vrot.lane.b32.xlu0 %v2875, 28
        %v3579 = vpop.permute.xlu0 %3578
        %3580 = vrot.lane.b32.xlu0 %v2876, 28
        %v3581 = vpop.permute.xlu0 %3580
        %3582 = vrot.lane.b32.xlu0 %v2877, 28
        %v3583 = vpop.permute.xlu0 %3582
        %3584 = vrot.lane.b32.xlu0 %v2878, 28
        %v3585 = vpop.permute.xlu0 %3584
        %3586 = vrot.lane.b32.xlu0 %v2879, 28
        %v3587 = vpop.permute.xlu0 %3586
        %3588 = vrot.lane.b32.xlu0 %v2880, 28
        %v3589 = vpop.permute.xlu0 %3588
        %3590 = vrot.lane.b32.xlu0 %v2881, 28
        %v3591 = vpop.permute.xlu0 %3590
        %v3594 = vsel %vm835, %v3511, %v3527
        %v3597 = vsel %vm835, %v3513, %v3529
        %v3600 = vsel %vm835, %v3515, %v3531
        %v3603 = vsel %vm835, %v3517, %v3533
        %v3606 = vsel %vm835, %v3519, %v3535
        %v3609 = vsel %vm835, %v3521, %v3537
        %v3612 = vsel %vm835, %v3523, %v3539
        %v3615 = vsel %vm835, %v3525, %v3541
        %v3616 = vsel %vm561, %v3594, %v3527
        %v3617 = vsel %vm561, %v3597, %v3529
        %v3618 = vsel %vm561, %v3600, %v3531
        %v3619 = vsel %vm561, %v3603, %v3533
        %v3620 = vsel %vm561, %v3606, %v3535
        %v3621 = vsel %vm561, %v3609, %v3537
        %v3622 = vsel %vm561, %v3612, %v3539
        %v3623 = vsel %vm561, %v3615, %v3541
        %v3625 = vsel %vm852, %v3616, %v2853
        %v3627 = vsel %vm852, %v3617, %v2854
        %v3629 = vsel %vm852, %v3618, %v2855
        %v3631 = vsel %vm852, %v3619, %v2856
        %v3633 = vsel %vm852, %v3620, %v2857
        %v3635 = vsel %vm852, %v3621, %v2858
        %v3637 = vsel %vm852, %v3622, %v2859
        %v3639 = vsel %vm852, %v3623, %v2860
        %v3641 = vsel %vm471, %v3625, %v3543
        %v3643 = vsel %vm471, %v3627, %v3545
        %v3645 = vsel %vm471, %v3629, %v3547
        %v3647 = vsel %vm471, %v3631, %v3549
        %v3649 = vsel %vm471, %v3633, %v3551
        %v3651 = vsel %vm471, %v3635, %v3553
        %v3653 = vsel %vm471, %v3637, %v3555
        %v3655 = vsel %vm471, %v3639, %v3557
        %v3656 = vsel %vm869, %v3641, %v3543
        %v3657 = vsel %vm869, %v3643, %v3545
        %v3658 = vsel %vm869, %v3645, %v3547
        %v3659 = vsel %vm869, %v3647, %v3549
        %v3660 = vsel %vm869, %v3649, %v3551
        %v3661 = vsel %vm869, %v3651, %v3553
        %v3662 = vsel %vm869, %v3653, %v3555
        %v3663 = vsel %vm869, %v3655, %v3557
        %v3665 = vsel %vm878, %v3656, %v3560
        %v3667 = vsel %vm878, %v3657, %v3562
        %v3669 = vsel %vm878, %v3658, %v3564
        %v3671 = vsel %vm878, %v3659, %v3566
        %v3673 = vsel %vm878, %v3660, %v3568
        %v3675 = vsel %vm878, %v3661, %v3570
        %v3677 = vsel %vm878, %v3662, %v3572
        %v3679 = vsel %vm878, %v3663, %v3574
        %v3681 = vsel %vm887, %v3665, %v3577
        %v3683 = vsel %vm887, %v3667, %v3579
        %v3685 = vsel %vm887, %v3669, %v3581
        %v3687 = vsel %vm887, %v3671, %v3583
        %v3689 = vsel %vm887, %v3673, %v3585
        %v3691 = vsel %vm887, %v3675, %v3587
        %v3693 = vsel %vm887, %v3677, %v3589
        %v3695 = vsel %vm887, %v3679, %v3591
        %v3696 = vsel %vm443, %v3681, %v3577
        %v3697 = vsel %vm443, %v3683, %v3579
        %v3698 = vsel %vm443, %v3685, %v3581
        %v3699 = vsel %vm443, %v3687, %v3583
        %v3700 = vsel %vm443, %v3689, %v3585
        %v3701 = vsel %vm443, %v3691, %v3587
        %v3702 = vsel %vm443, %v3693, %v3589
        %v3703 = vsel %vm443, %v3695, %v3591
        %v3712 = vunpack.c.l.b16 %v3696
        %v3713 = vunpack.c.l.b16 %v3697
        %v3714 = vunpack.c.l.b16 %v3698
        %v3715 = vunpack.c.l.b16 %v3699
        %v3716 = vunpack.c.l.b16 %v3700
        %v3717 = vunpack.c.l.b16 %v3701
        %v3718 = vunpack.c.l.b16 %v3702
        %v3719 = vunpack.c.l.b16 %v3703
        %v3720 = vpack.c.b16 %v3713, %v3712
        %v3721 = vpack.c.b16 %v3715, %v3714
        %v3722 = vpack.c.b16 %v3717, %v3716
        %v3723 = vpack.c.b16 %v3719, %v3718
        %v3725 = vsel %vm3163, %v3720, 0
        %v3728 = vsel %vm3163, %v3721, 0
        %v3731 = vsel %vm3163, %v3722, 0
        %v3734 = vsel %vm3163, %v3723, 0
        %3736 = vmatprep.subr.bf16.mxu0 0
        %3737 = vmatpush1.bf16.msra.mxu0 %v3158
        %3738 = vmatprep.subr.bf16.mxu0 0
        %3739 = vmatpush1.bf16.msra.mxu0 %v3159
        %3740 = vmatprep.subr.bf16.mxu0 0
        %3741 = vmatpush1.bf16.msra.mxu0 %v3178
        %3742 = vmatprep.subr.bf16.mxu0 0
        %3743 = vmatpush1.bf16.msra.mxu0 0
        %3744 = vmatprep.subr.bf16.mxu0 0
        %3745 = vmatpush1.bf16.msra.mxu0 0
        %3746 = vmatprep.subr.bf16.mxu0 0
        %3747 = vmatpush1.bf16.msra.mxu0 0
        %3748 = vmatprep.subr.bf16.mxu0 0
        %3749 = vmatpush1.bf16.msra.mxu0 0
        %3750 = vmatprep.subr.bf16.mxu0 0
        %3751 = vmatpush1.bf16.msra.mxu0 0
        %3752 = vmatprep.subr.bf16.mxu0 0
        %3753 = vmatpush1.bf16.msra.mxu0 0
        %3754 = vmatprep.subr.bf16.mxu0 0
        %3755 = vmatpush1.bf16.msra.mxu0 0
        %3756 = vmatprep.subr.bf16.mxu0 0
        %3757 = vmatpush1.bf16.msra.mxu0 0
        %3758 = vmatprep.subr.bf16.mxu0 0
        %3759 = vmatpush1.bf16.msra.mxu0 0
        %3760 = vmatprep.subr.bf16.mxu0 0
        %3761 = vmatpush1.bf16.msra.mxu0 0
        %3762 = vmatprep.subr.bf16.mxu0 0
        %3763 = vmatpush1.bf16.msra.mxu0 0
        %3764 = vmatprep.subr.bf16.mxu0 0
        %3765 = vmatpush1.bf16.msra.mxu0 0
        %3766 = vmatprep.subr.bf16.mxu0 0
        %3767 = vmatpush1.bf16.msra.mxu0 0
        %3768 = vmatprep.mubr.bf16.mxu0 0
        %3769 = vmatmul.mubr.bf16.gmra.mrb[0].mxu0 %v3725
        %v3770 = vpop.f32.mrb[0].mxu0
        %v3771 = vadd.f32 0.0, %v3770
        %v3772 = vpop.f32.mrb[0].mxu0
        %v3773 = vpop.f32.mrb[0].mxu0
        %v3774 = vadd.f32 0.0, %v3773
        %v3775 = vpop.f32.mrb[0].mxu0
        %3776 = vmatprep.mubr.bf16.mxu0 0
        %3777 = vmatmul.mubr.bf16.gmra.mrb[0].mxu0 %v3728
        %v3778 = vpop.f32.mrb[0].mxu0
        %v3779 = vadd.f32 0.0, %v3778
        %v3780 = vpop.f32.mrb[0].mxu0
        %v3781 = vpop.f32.mrb[0].mxu0
        %v3782 = vadd.f32 0.0, %v3781
        %v3783 = vpop.f32.mrb[0].mxu0
        %3784 = vmatprep.mubr.bf16.mxu0 0
        %3785 = vmatmul.mubr.bf16.gmra.mrb[0].mxu0 %v3731
        %v3786 = vpop.f32.mrb[0].mxu0
        %v3787 = vadd.f32 0.0, %v3786
        %v3788 = vpop.f32.mrb[0].mxu0
        %v3789 = vpop.f32.mrb[0].mxu0
        %v3790 = vadd.f32 0.0, %v3789
        %v3791 = vpop.f32.mrb[0].mxu0
        %3792 = vmatprep.mubr.bf16.mxu0 0
        %3793 = vmatmul.mubr.bf16.gmra.mrb[0].mxu0 %v3734
        %v3794 = vpop.f32.mrb[0].mxu0
        %v3795 = vadd.f32 0.0, %v3794
        %v3796 = vpop.f32.mrb[0].mxu0
        %v3797 = vpop.f32.mrb[0].mxu0
        %v3798 = vadd.f32 0.0, %v3797
        %v3799 = vpop.f32.mrb[0].mxu0
        %3800 = vdwg.mxu0
        %3801 = vrot.lane.b32.xlu0 %v2893, 8
        %v3802 = vpop.permute.xlu0 %3801
        %3803 = vrot.lane.b32.xlu0 %v2894, 8
        %v3804 = vpop.permute.xlu0 %3803
        %3805 = vrot.lane.b32.xlu0 %v2895, 8
        %v3806 = vpop.permute.xlu0 %3805
        %3807 = vrot.lane.b32.xlu0 %v2896, 8
        %v3808 = vpop.permute.xlu0 %3807
        %3809 = vrot.lane.b32.xlu0 %v2897, 8
        %v3810 = vpop.permute.xlu0 %3809
        %3811 = vrot.lane.b32.xlu0 %v2898, 8
        %v3812 = vpop.permute.xlu0 %3811
        %3813 = vrot.lane.b32.xlu0 %v2899, 8
        %v3814 = vpop.permute.xlu0 %3813
        %3815 = vrot.lane.b32.xlu0 %v2900, 8
        %v3816 = vpop.permute.xlu0 %3815
        %3817 = vrot.lane.b32.xlu0 %v2893, 12
        %v3818 = vpop.permute.xlu0 %3817
        %3819 = vrot.lane.b32.xlu0 %v2894, 12
        %v3820 = vpop.permute.xlu0 %3819
        %3821 = vrot.lane.b32.xlu0 %v2895, 12
        %v3822 = vpop.permute.xlu0 %3821
        %3823 = vrot.lane.b32.xlu0 %v2896, 12
        %v3824 = vpop.permute.xlu0 %3823
        %3825 = vrot.lane.b32.xlu0 %v2897, 12
        %v3826 = vpop.permute.xlu0 %3825
        %3827 = vrot.lane.b32.xlu0 %v2898, 12
        %v3828 = vpop.permute.xlu0 %3827
        %3829 = vrot.lane.b32.xlu0 %v2899, 12
        %v3830 = vpop.permute.xlu0 %3829
        %3831 = vrot.lane.b32.xlu0 %v2900, 12
        %v3832 = vpop.permute.xlu0 %3831
        %3833 = vrot.lane.b32.xlu0 %v2874, 24
        %v3834 = vpop.permute.xlu0 %3833
        %3835 = vrot.lane.b32.xlu0 %v2875, 24
        %v3836 = vpop.permute.xlu0 %3835
        %3837 = vrot.lane.b32.xlu0 %v2876, 24
        %v3838 = vpop.permute.xlu0 %3837
        %3839 = vrot.lane.b32.xlu0 %v2877, 24
        %v3840 = vpop.permute.xlu0 %3839
        %3841 = vrot.lane.b32.xlu0 %v2878, 24
        %v3842 = vpop.permute.xlu0 %3841
        %3843 = vrot.lane.b32.xlu0 %v2879, 24
        %v3844 = vpop.permute.xlu0 %3843
        %3845 = vrot.lane.b32.xlu0 %v2880, 24
        %v3846 = vpop.permute.xlu0 %3845
        %3847 = vrot.lane.b32.xlu0 %v2881, 24
        %v3848 = vpop.permute.xlu0 %3847
        %3850 = vrot.lane.b32.xlu0 %v2894, 32
        %v3851 = vpop.permute.xlu0 %3850
        %3852 = vrot.lane.b32.xlu0 %v2895, 32
        %v3853 = vpop.permute.xlu0 %3852
        %3854 = vrot.lane.b32.xlu0 %v2896, 32
        %v3855 = vpop.permute.xlu0 %3854
        %3856 = vrot.lane.b32.xlu0 %v2897, 32
        %v3857 = vpop.permute.xlu0 %3856
        %3858 = vrot.lane.b32.xlu0 %v2898, 32
        %v3859 = vpop.permute.xlu0 %3858
        %3860 = vrot.lane.b32.xlu0 %v2899, 32
        %v3861 = vpop.permute.xlu0 %3860
        %3862 = vrot.lane.b32.xlu0 %v2900, 32
        %v3863 = vpop.permute.xlu0 %3862
        %3864 = vrot.lane.b32.xlu0 %v2901, 32
        %v3865 = vpop.permute.xlu0 %3864
        %v3875 = vsel %vm561, %v2873, %v3802
        %v3877 = vsel %vm561, %v2874, %v3804
        %v3879 = vsel %vm561, %v2875, %v3806
        %v3881 = vsel %vm561, %v2876, %v3808
        %v3883 = vsel %vm561, %v2877, %v3810
        %v3885 = vsel %vm561, %v2878, %v3812
        %v3887 = vsel %vm561, %v2879, %v3814
        %v3889 = vsel %vm561, %v2880, %v3816
        %v3890 = vsel %vm852, %v3875, %v3527
        %v3891 = vsel %vm852, %v3877, %v3529
        %v3892 = vsel %vm852, %v3879, %v3531
        %v3893 = vsel %vm852, %v3881, %v3533
        %v3894 = vsel %vm852, %v3883, %v3535
        %v3895 = vsel %vm852, %v3885, %v3537
        %v3896 = vsel %vm852, %v3887, %v3539
        %v3897 = vsel %vm852, %v3889, %v3541
        %v3898 = vsel %vm471, %v3890, %v3527
        %v3899 = vsel %vm471, %v3891, %v3529
        %v3900 = vsel %vm471, %v3892, %v3531
        %v3901 = vsel %vm471, %v3893, %v3533
        %v3902 = vsel %vm471, %v3894, %v3535
        %v3903 = vsel %vm471, %v3895, %v3537
        %v3904 = vsel %vm471, %v3896, %v3539
        %v3905 = vsel %vm471, %v3897, %v3541
        %v3907 = vsel %vm869, %v3898, %v3818
        %v3909 = vsel %vm869, %v3899, %v3820
        %v3911 = vsel %vm869, %v3900, %v3822
        %v3913 = vsel %vm869, %v3901, %v3824
        %v3915 = vsel %vm869, %v3902, %v3826
        %v3917 = vsel %vm869, %v3903, %v3828
        %v3919 = vsel %vm869, %v3904, %v3830
        %v3921 = vsel %vm869, %v3905, %v3832
        %v3923 = vsel %vm878, %v3907, %v3834
        %v3925 = vsel %vm878, %v3909, %v3836
        %v3927 = vsel %vm878, %v3911, %v3838
        %v3929 = vsel %vm878, %v3913, %v3840
        %v3931 = vsel %vm878, %v3915, %v3842
        %v3933 = vsel %vm878, %v3917, %v3844
        %v3935 = vsel %vm878, %v3919, %v3846
        %v3937 = vsel %vm878, %v3921, %v3848
        %v3938 = vsel %vm887, %v3923, %v3834
        %v3939 = vsel %vm887, %v3925, %v3836
        %v3940 = vsel %vm887, %v3927, %v3838
        %v3941 = vsel %vm887, %v3929, %v3840
        %v3942 = vsel %vm887, %v3931, %v3842
        %v3943 = vsel %vm887, %v3933, %v3844
        %v3944 = vsel %vm887, %v3935, %v3846
        %v3945 = vsel %vm887, %v3937, %v3848
        %v3947 = vsel %vm443, %v3938, %v3851
        %v3949 = vsel %vm443, %v3939, %v3853
        %v3951 = vsel %vm443, %v3940, %v3855
        %v3953 = vsel %vm443, %v3941, %v3857
        %v3955 = vsel %vm443, %v3942, %v3859
        %v3957 = vsel %vm443, %v3943, %v3861
        %v3959 = vsel %vm443, %v3944, %v3863
        %v3961 = vsel %vm443, %v3945, %v3865
        %v3970 = vunpack.c.l.b16 %v3947
        %v3971 = vunpack.c.l.b16 %v3949
        %v3972 = vunpack.c.l.b16 %v3951
        %v3973 = vunpack.c.l.b16 %v3953
        %v3974 = vunpack.c.l.b16 %v3955
        %v3975 = vunpack.c.l.b16 %v3957
        %v3976 = vunpack.c.l.b16 %v3959
        %v3977 = vunpack.c.l.b16 %v3961
        %v3978 = vpack.c.b16 %v3971, %v3970
        %v3979 = vpack.c.b16 %v3973, %v3972
        %v3980 = vpack.c.b16 %v3975, %v3974
        %v3981 = vpack.c.b16 %v3977, %v3976
        %v3983 = vsel %vm3163, %v3978, 0
        %v3986 = vsel %vm3163, %v3979, 0
        %v3989 = vsel %vm3163, %v3980, 0
        %v3992 = vsel %vm3163, %v3981, 0
        %3994 = vmatprep.subr.bf16.mxu0 0
        %3995 = vmatpush1.bf16.msra.mxu0 %v3158
        %3996 = vmatprep.subr.bf16.mxu0 0
        %3997 = vmatpush1.bf16.msra.mxu0 %v3159
        %3998 = vmatprep.subr.bf16.mxu0 0
        %3999 = vmatpush1.bf16.msra.mxu0 %v3178
        %4000 = vmatprep.subr.bf16.mxu0 0
        %4001 = vmatpush1.bf16.msra.mxu0 0
        %4002 = vmatprep.subr.bf16.mxu0 0
        %4003 = vmatpush1.bf16.msra.mxu0 0
        %4004 = vmatprep.subr.bf16.mxu0 0
        %4005 = vmatpush1.bf16.msra.mxu0 0
        %4006 = vmatprep.subr.bf16.mxu0 0
        %4007 = vmatpush1.bf16.msra.mxu0 0
        %4008 = vmatprep.subr.bf16.mxu0 0
        %4009 = vmatpush1.bf16.msra.mxu0 0
        %4010 = vmatprep.subr.bf16.mxu0 0
        %4011 = vmatpush1.bf16.msra.mxu0 0
        %4012 = vmatprep.subr.bf16.mxu0 0
        %4013 = vmatpush1.bf16.msra.mxu0 0
        %4014 = vmatprep.subr.bf16.mxu0 0
        %4015 = vmatpush1.bf16.msra.mxu0 0
        %4016 = vmatprep.subr.bf16.mxu0 0
        %4017 = vmatpush1.bf16.msra.mxu0 0
        %4018 = vmatprep.subr.bf16.mxu0 0
        %4019 = vmatpush1.bf16.msra.mxu0 0
        %4020 = vmatprep.subr.bf16.mxu0 0
        %4021 = vmatpush1.bf16.msra.mxu0 0
        %4022 = vmatprep.subr.bf16.mxu0 0
        %4023 = vmatpush1.bf16.msra.mxu0 0
        %4024 = vmatprep.subr.bf16.mxu0 0
        %4025 = vmatpush1.bf16.msra.mxu0 0
        %4026 = vmatprep.mubr.bf16.mxu0 0
        %4027 = vmatmul.mubr.bf16.gmra.mrb[0].mxu0 %v3983
        %v4028 = vpop.f32.mrb[0].mxu0
        %v4029 = vadd.f32 0.0, %v4028
        %v4030 = vpop.f32.mrb[0].mxu0
        %v4031 = vpop.f32.mrb[0].mxu0
        %v4032 = vadd.f32 0.0, %v4031
        %v4033 = vpop.f32.mrb[0].mxu0
        %4034 = vmatprep.mubr.bf16.mxu0 0
        %4035 = vmatmul.mubr.bf16.gmra.mrb[0].mxu0 %v3986
        %v4036 = vpop.f32.mrb[0].mxu0
        %v4037 = vadd.f32 0.0, %v4036
        %v4038 = vpop.f32.mrb[0].mxu0
        %v4039 = vpop.f32.mrb[0].mxu0
        %v4040 = vadd.f32 0.0, %v4039
        %v4041 = vpop.f32.mrb[0].mxu0
        %4042 = vmatprep.mubr.bf16.mxu0 0
        %4043 = vmatmul.mubr.bf16.gmra.mrb[0].mxu0 %v3989
        %v4044 = vpop.f32.mrb[0].mxu0
        %v4045 = vadd.f32 0.0, %v4044
        %v4046 = vpop.f32.mrb[0].mxu0
        %v4047 = vpop.f32.mrb[0].mxu0
        %v4048 = vadd.f32 0.0, %v4047
        %v4049 = vpop.f32.mrb[0].mxu0
        %4050 = vmatprep.mubr.bf16.mxu0 0
        %4051 = vmatmul.mubr.bf16.gmra.mrb[0].mxu0 %v3992
        %v4052 = vpop.f32.mrb[0].mxu0
        %v4053 = vadd.f32 0.0, %v4052
        %v4054 = vpop.f32.mrb[0].mxu0
        %v4055 = vpop.f32.mrb[0].mxu0
        %v4056 = vadd.f32 0.0, %v4055
        %v4057 = vpop.f32.mrb[0].mxu0
        %4058 = vdwg.mxu0
        %4067 = vrot.lane.b32.xlu0 %v3480, 4
        %v4068 = vpop.permute.xlu0 %4067
        %4069 = vrot.lane.b32.xlu0 %v3483, 4
        %v4070 = vpop.permute.xlu0 %4069
        %4071 = vrot.lane.b32.xlu0 %v3488, 4
        %v4072 = vpop.permute.xlu0 %4071
        %4073 = vrot.lane.b32.xlu0 %v3491, 4
        %v4074 = vpop.permute.xlu0 %4073
        %4075 = vrot.lane.b32.xlu0 %v3496, 4
        %v4076 = vpop.permute.xlu0 %4075
        %4077 = vrot.lane.b32.xlu0 %v3499, 4
        %v4078 = vpop.permute.xlu0 %4077
        %4079 = vrot.lane.b32.xlu0 %v3504, 4
        %v4080 = vpop.permute.xlu0 %4079
        %4081 = vrot.lane.b32.xlu0 %v3507, 4
        %v4082 = vpop.permute.xlu0 %4081
        %4099 = vrot.lane.b32.xlu0 %v3771, 8
        %v4100 = vpop.permute.xlu0 %4099
        %4101 = vrot.lane.b32.xlu0 %v3774, 8
        %v4102 = vpop.permute.xlu0 %4101
        %4103 = vrot.lane.b32.xlu0 %v3779, 8
        %v4104 = vpop.permute.xlu0 %4103
        %4105 = vrot.lane.b32.xlu0 %v3782, 8
        %v4106 = vpop.permute.xlu0 %4105
        %4107 = vrot.lane.b32.xlu0 %v3787, 8
        %v4108 = vpop.permute.xlu0 %4107
        %4109 = vrot.lane.b32.xlu0 %v3790, 8
        %v4110 = vpop.permute.xlu0 %4109
        %4111 = vrot.lane.b32.xlu0 %v3795, 8
        %v4112 = vpop.permute.xlu0 %4111
        %4113 = vrot.lane.b32.xlu0 %v3798, 8
        %v4114 = vpop.permute.xlu0 %4113
        %4131 = vrot.lane.b32.xlu0 %v4029, 12
        %v4132 = vpop.permute.xlu0 %4131
        %4133 = vrot.lane.b32.xlu0 %v4032, 12
        %v4134 = vpop.permute.xlu0 %4133
        %4135 = vrot.lane.b32.xlu0 %v4037, 12
        %v4136 = vpop.permute.xlu0 %4135
        %4137 = vrot.lane.b32.xlu0 %v4040, 12
        %v4138 = vpop.permute.xlu0 %4137
        %4139 = vrot.lane.b32.xlu0 %v4045, 12
        %v4140 = vpop.permute.xlu0 %4139
        %4141 = vrot.lane.b32.xlu0 %v4048, 12
        %v4142 = vpop.permute.xlu0 %4141
        %4143 = vrot.lane.b32.xlu0 %v4053, 12
        %v4144 = vpop.permute.xlu0 %4143
        %4145 = vrot.lane.b32.xlu0 %v4056, 12
        %v4146 = vpop.permute.xlu0 %4145
        %v4155 = vsel %vm835, %v3215, %v4068
        %v4156 = vsel %vm835, %v3218, %v4070
        %v4157 = vsel %vm835, %v3223, %v4072
        %v4158 = vsel %vm835, %v3226, %v4074
        %v4159 = vsel %vm835, %v3231, %v4076
        %v4160 = vsel %vm835, %v3234, %v4078
        %v4161 = vsel %vm835, %v3239, %v4080
        %v4162 = vsel %vm835, %v3242, %v4082
        %v4163 = vsel %vm561, %v4155, %v4100
        %v4164 = vsel %vm561, %v4156, %v4102
        %v4165 = vsel %vm561, %v4157, %v4104
        %v4166 = vsel %vm561, %v4158, %v4106
        %v4167 = vsel %vm561, %v4159, %v4108
        %v4168 = vsel %vm561, %v4160, %v4110
        %v4169 = vsel %vm561, %v4161, %v4112
        %v4170 = vsel %vm561, %v4162, %v4114
        %v4171 = vsel %vm852, %v4163, %v4132
        %v4172 = vsel %vm852, %v4164, %v4134
        %v4173 = vsel %vm852, %v4165, %v4136
        %v4174 = vsel %vm852, %v4166, %v4138
        %v4175 = vsel %vm852, %v4167, %v4140
        %v4176 = vsel %vm852, %v4168, %v4142
        %v4177 = vsel %vm852, %v4169, %v4144
        %v4178 = vsel %vm852, %v4170, %v4146
        %v4179 = vadd.f32 %v4171, %v1352
        %v4180 = vadd.f32 %v4172, %v1353
        %v4181 = vadd.f32 %v4173, %v1354
        %v4182 = vadd.f32 %v4174, %v1355
        %v4183 = vadd.f32 %v4175, %v1356
        %v4184 = vadd.f32 %v4176, %v1357
        %v4185 = vadd.f32 %v4177, %v1358
        %v4186 = vadd.f32 %v4178, %v1359
        %v4187 = vlaneseq
        %v4188 = vshrl.u32 %v4187, 7
        %v4189 = vsub.s32 2, %v4188
        %v4190 = vrot.slane %v2779, %v4189
        %v4191 = vadd.f32 %v4179, %v4190
        %v4192 = vadd.f32 %v4180, %v4190
        %v4193 = vadd.f32 %v4181, %v4190
        %v4194 = vadd.f32 %v4182, %v4190
        %v4195 = vadd.f32 %v4183, %v4190
        %v4196 = vadd.f32 %v4184, %v4190
        %v4197 = vadd.f32 %v4185, %v4190
        %v4198 = vadd.f32 %v4186, %v4190
        %4199 = vst.msk [vmem:[%s429] sm:$0xff] %vm471, %v4191
        %4200 = vst.msk [vmem:[%s429 + $0x8] sm:$0xff] %vm471, %v4192
        %4201 = vst.msk [vmem:[%s429 + $0x10] sm:$0xff] %vm471, %v4193
        %4202 = vst.msk [vmem:[%s429 + $0x18] sm:$0xff] %vm471, %v4194
        %4203 = vst.msk [vmem:[%s429 + $0x20] sm:$0xff] %vm471, %v4195
        %4204 = vst.msk [vmem:[%s429 + $0x28] sm:$0xff] %vm471, %v4196
        %4205 = vst.msk [vmem:[%s429 + $0x30] sm:$0xff] %vm471, %v4197
        %4206 = vst.msk [vmem:[%s429 + $0x38] sm:$0xff] %vm471, %v4198
        %s4207 = sand.u32 %s251, 1
        %s4208 = scalar_lea.sflag [#allocation6], %s4207
        %s4209 = sand.u32 %s251, 1
        %s4210 = smul.addr %s4209, 64
        %s4211 = scalar_lea.vmem [#allocation9], %s4210
        // Predicated region
        $region65: #{tpu_custom_call.1} parent=55 // pred_check
          %p4212 = pneg %p261
        $region66: #{tpu_custom_call.1} parent=55 // pred_check_branch
          %4214 = sbr.rel (%p4212) target = $region68
        $region67: #{tpu_custom_call.1} parent=55 // pred_region
          %s4216 = ssub.s32 1024, 1024
          %4217 = vsyncadd %s4208, %s4216
          %s4218 = smul.addr %s29, 8
          %s4219 = smul.addr %s4218, 128
          %s4220 = scalar_lea.hbm %s9, %s4219
          %s4221 = sshll.u32 %s4211, 4
          %s4222 = int_to_ptr.vmem [resolvable:$true] %s4221
          %4227 = dma.vmem_to_hbm [thread:$0]  %s4222, 1024, %s4220, %s4208, 128, 128, 8
        $region68: #{tpu_custom_call.1} parent=55 // pred_fallthru
          _
      $region56: #{tpu_custom_call.1} parent=5 // pred_fallthru
        _
      %p4228 = scmp.le.s32.totalorder 2, %s24
      // Predicated region
      $region69: #{tpu_custom_call.1} parent=5 // pred_check
        %p4229 = pneg %p4228
      $region70: #{tpu_custom_call.1} parent=5 // pred_check_branch
        %4231 = sbr.rel (%p4229) target = $region72
      $region71: #{tpu_custom_call.1} parent=5 // pred_region
        %s4232 = ssub.s32 %s24, 2
        // Predicated region
        $region73: #{tpu_custom_call.1} parent=71 // pred_check
          %p4233 = pneg %p267
        $region74: #{tpu_custom_call.1} parent=71 // pred_check_branch
          %4235 = sbr.rel (%p4233) target = $region76
        $region75: #{tpu_custom_call.1} parent=71 // pred_region
          %s4236 = sand.u32 %s252, 1
          %s4237 = scalar_lea.sflag [#allocation6], %s4236
          %s4238 = sand.u32 %s252, 1
          %s4239 = smul.addr %s4238, 64
          %s4240 = scalar_lea.vmem [#allocation9], %s4239
          %4241 = dma.done %s4237, 1024
        $region76: #{tpu_custom_call.1} parent=71 // pred_fallthru
          _
      $region72: #{tpu_custom_call.1} parent=5 // pred_fallthru
        _
    $region6: #{tpu_custom_call.1} parent=1 // loop_footer
      %s28 = sadd.s32 1, %s24
    $region7: #{tpu_custom_call.1} parent=1 // loop_footer_branch
      %23 = sbr.rel target = $region3
    $region8: #{tpu_custom_call.1} parent=1 // loop_exit
      _
    %4242 = vsyncpa [#allocation5], 1
    %s4243 = scalar_lea.sflag [#allocation5], 1
    %4244 = vsyncpa %s4243, 1
    %4245 = vsyncpa [#allocation8], 1
    %s4246 = scalar_lea.sflag [#allocation8], 1
    %4247 = vsyncpa %s4246, 1
    %4248 = vsyncpa [#allocation6], 1
    %s4249 = scalar_lea.sflag [#allocation6], 1
    %4250 = vsyncpa %s4249, 1

</llo_original>
